<compile_context>
chip_gen: v6e
topology: v6e:2x2x1
jax: 0.10.0
libtpu: 0.0.40
codegen_flags: <defaults>
</compile_context>

<pallas_src>
import jax
import jax.numpy as jnp
from jax.experimental import pallas as pl
from jax.experimental.pallas import tpu as pltpu

# ----- small synthetic config (consistent with the module's forward) -----
B, T = 2, 8                     # batch, total_padded_length
VOCAB = 33                      # ESM alphabet size (stand-in)
ESM_DIM = 32
RHO_DIM, DSSP_DIM, IEDB_DIM = 5, 11, 2
EMB_DIM = ESM_DIM + DSSP_DIM + IEDB_DIM + RHO_DIM     # 50
H = 32                          # rnn_hidden_dim
RNN_LAYERS = 2
MLP_HIDDEN = 32
MLP_HIDDEN2 = MLP_HIDDEN // 2
EGNN_EDGE_DIM = 4

BP = 8                          # batch rows padded to one (8,128) sublane tile
N_PAD = T * BP                  # 64 time-major rows (row = t*BP + b)
G3 = 3 * H                      # 96: fused r|z|n gate width per direction
GP = 128                        # per-direction gate block padded to a vreg column
OUT_PAD = 128                   # lane-dense padded output width


# ---------------------------------------------------------------------------
# Fused Pallas kernel: 2 x bidirectional GRU + MLP, everything in VMEM/vregs.
# ---------------------------------------------------------------------------
def fused_gru_mlp_kernel(
    x_ref,       # (N_PAD, EMB_DIM) bf16   time-major, batch padded to BP rows
    lens_ref,    # (BP, 1) f32             valid length per (padded) batch row
    wih1_ref,    # (EMB_DIM, 2*GP) bf16    layer-1 input weights, gates+dirs fused
    bc1_ref,     # (1, 2*GP) f32           b_ih (+ b_hh for r,z) folded
    whh1_ref,    # (2, H, G3) bf16         fused r|z|n recurrent weights per dir
    bhn1_ref,    # (2, 1, G3) f32          b_hn in the n lanes, 0 elsewhere
    wih2f_ref,   # (H, 2*GP) bf16          layer-2 input weights, fwd-half rows
    wih2b_ref,   # (H, 2*GP) bf16          layer-2 input weights, bwd-half rows
    bc2_ref,     # (1, 2*GP) f32
    whh2_ref,    # (2, H, G3) bf16
    bhn2_ref,    # (2, 1, G3) f32
    w1f_ref,     # (H, MLP_HIDDEN) bf16
    w1b_ref,     # (H, MLP_HIDDEN) bf16
    b1_ref,      # (1, MLP_HIDDEN) f32
    w2_ref,      # (MLP_HIDDEN, MLP_HIDDEN2) bf16
    b2_ref,      # (1, MLP_HIDDEN2) f32
    w3_ref,      # (MLP_HIDDEN2, OUT_PAD) bf16  (real weights in lane 0)
    b3_ref,      # (1, OUT_PAD) f32
    o_ref,       # (N_PAD, OUT_PAD) f32
):
    f32, bf16 = jnp.float32, jnp.bfloat16

    # Validity masks built in-kernel from lens (pack_padded emulation); t is a
    # static Python int (loop fully unrolled), broadcasts hoisted once and
    # reused by both layers.
    lens_col = lens_ref[...]                                        # (BP, 1)
    masks = [jnp.broadcast_to((lens_col > float(t)).astype(f32), (BP, H))
             for t in range(T)]

    def bidir_layer(gi, whh_ref, bhn_ref):
        """gi: (N_PAD, 2*GP) precomputed input projections (biases folded).
        Returns (y_fwd, y_bwd), each (N_PAD, H) f32, kept in vregs."""
        gi_f = gi[:, 0:G3]                     # fwd r|z|n
        gi_b = gi[:, GP:GP + G3]               # bwd r|z|n (vreg-column aligned)
        whh_f, whh_b = whh_ref[0], whh_ref[1]  # (H, G3) bf16, loaded once
        bhn_f = jnp.broadcast_to(bhn_ref[0], (BP, G3))     # hoisted broadcasts
        bhn_b = jnp.broadcast_to(bhn_ref[1], (BP, G3))

        def cell(h, gi_t, whh, bhn, m_t):
            # one fused (BP,H)@(H,3H) recurrent matmul per step per direction
            gh = jnp.dot(h.astype(bf16), whh, preferred_element_type=f32) + bhn
            rz = jax.nn.sigmoid(gi_t[:, :2 * H] + gh[:, :2 * H])
            r, z = rz[:, :H], rz[:, H:]
            n = jnp.tanh(gi_t[:, 2 * H:] + r * gh[:, 2 * H:])
            h_new = (1.0 - z) * n + z * h              # gate math stays f32
            out = m_t * h_new                          # 0 at padded positions
            h_next = h + m_t * (h_new - h)             # masked hidden update
            return h_next, out

        hf = jnp.zeros((BP, H), f32)
        hb = jnp.zeros((BP, H), f32)
        outs_f = [None] * T
        outs_b = [None] * T
        for i in range(T):                 # static unroll; fwd/bwd interleaved
            tb = T - 1 - i
            hf, outs_f[i] = cell(hf, gi_f[i * BP:(i + 1) * BP],
                                 whh_f, bhn_f, masks[i])
            hb, outs_b[tb] = cell(hb, gi_b[tb * BP:(tb + 1) * BP],
                                  whh_b, bhn_b, masks[tb])
        # layer outputs stay in vregs — no VMEM scratch round trip
        return jnp.concatenate(outs_f, axis=0), jnp.concatenate(outs_b, axis=0)

    # ---- layer 1: ONE fused (N, EMB) @ (EMB, 2*GP) input projection ----
    gi1 = (jnp.dot(x_ref[...], wih1_ref[...], preferred_element_type=f32)
           + bc1_ref[...])
    y1f, y1b = bidir_layer(gi1, whh1_ref, bhn1_ref)

    # ---- layer 2: gate+direction-fused projection; fwd/bwd input halves as
    # two accumulating dots (avoids an unaligned lane concat of [y1f|y1b]).
    gi2 = (jnp.dot(y1f.astype(bf16), wih2f_ref[...], preferred_element_type=f32)
           + jnp.dot(y1b.astype(bf16), wih2b_ref[...], preferred_element_type=f32)
           + bc2_ref[...])
    y2f, y2b = bidir_layer(gi2, whh2_ref, bhn2_ref)

    # ---- fused MLP tail: Linear -> SiLU -> Linear -> SiLU -> Linear ----
    h1 = (jnp.dot(y2f.astype(bf16), w1f_ref[...], preferred_element_type=f32)
          + jnp.dot(y2b.astype(bf16), w1b_ref[...], preferred_element_type=f32)
          + b1_ref[...])
    h1 = h1 * jax.nn.sigmoid(h1)                     # SiLU (dropout = eval id)
    h2 = (jnp.dot(h1.astype(bf16), w2_ref[...], preferred_element_type=f32)
          + b2_ref[...])
    h2 = h2 * jax.nn.sigmoid(h2)
    # lane-dense unmasked (N_PAD, 128) store; wrapper slices lane 0
    o_ref[...] = (jnp.dot(h2.astype(bf16), w3_ref[...],
                          preferred_element_type=f32) + b3_ref[...])


# ---------------------------------------------------------------------------
# Pallas wrapper
# ---------------------------------------------------------------------------
_VMEM = pl.BlockSpec(memory_space=pltpu.MemorySpace.VMEM)


def run_fused(kp, x_tm_bf16, lens_col):
    return pl.pallas_call(
        fused_gru_mlp_kernel,
        out_shape=jax.ShapeDtypeStruct((N_PAD, OUT_PAD), jnp.float32),
        in_specs=[_VMEM] * 18,
        out_specs=_VMEM,
    )(x_tm_bf16, lens_col,
      kp["wih1"], kp["bc1"], kp["whh1"], kp["bhn1"],
      kp["wih2f"], kp["wih2b"], kp["bc2"], kp["whh2"], kp["bhn2"],
      kp["w1f"], kp["w1b"], kp["b1"], kp["w2"], kp["b2"], kp["w3p"], kp["b3p"])


def epitope_forward(params, X, lens, mask, coors, rho, adj, feat,
                    dssp_feat, iedb_emb):
    del mask, coors, adj, feat            # EGNN path disabled (use_egnn=False)

    # ESM stand-in (deterministic embedding lookup).  TODO(synk): real ESM LM.
    emb = jnp.take(params["esm_embed"], X, axis=0)                   # (B,T,ESM)
    emb = jnp.concatenate([emb, dssp_feat, iedb_emb, rho], axis=2)   # (B,T,EMB)

    # time-major layout with batch stride padded to BP=8 rows per timestep so
    # every per-step slice / the output store is an aligned (8,128)-tile op.
    x_tm = jnp.zeros((T, BP, EMB_DIM), jnp.float32)
    x_tm = x_tm.at[:, :B, :].set(jnp.transpose(emb, (1, 0, 2)))
    x_tm = x_tm.reshape(N_PAD, EMB_DIM).astype(jnp.bfloat16)

    # pack_padded_sequence emulation: pass only (BP,1) lens; mask built in-kernel.
    lens_col = jnp.zeros((BP, 1), jnp.float32).at[:B, 0].set(
        lens.astype(jnp.float32))

    out_pad = run_fused(params["kernel"], x_tm, lens_col)            # (N_PAD,128)

    # lane 0 holds the logits; undo the padded time-major layout.
    return out_pad[:, 0].reshape(T, BP)[:, :B].transpose(1, 0)[:, :, None]


# ---------------------------------------------------------------------------
# Parameters: torch-style layout + conversion to the fused-kernel layout
# ---------------------------------------------------------------------------
def init_torch_style_params(key):
    ks = iter(jax.random.split(key, 64))

    def nrm(shape, scale=0.1):
        return scale * jax.random.normal(next(ks), shape, dtype=jnp.float32)

    def q(a):   # round matmul weights to bf16 so kernel & f32 reference match
        return a.astype(jnp.bfloat16).astype(jnp.float32)

    p = {"esm_embed": nrm((VOCAB, ESM_DIM))}
    gru = []
    in_dim = EMB_DIM
    for _ in range(RNN_LAYERS):
        layer = {}
        for d in ("fwd", "bwd"):
            layer[d] = dict(
                w_ih=q(nrm((3 * H, in_dim))),   # torch nn.GRU layout, gates (r,z,n)
                w_hh=q(nrm((3 * H, H))),
                b_ih=nrm((3 * H,)),
                b_hh=nrm((3 * H,)),
            )
        gru.append(layer)
        in_dim = 2 * H
    p["gru"] = gru
    p["mlp"] = dict(
        w1=q(nrm((MLP_HIDDEN, 2 * H))), b1=nrm((MLP_HIDDEN,)),
        w2=q(nrm((MLP_HIDDEN2, MLP_HIDDEN))), b2=nrm((MLP_HIDDEN2,)),
        w3=q(nrm((1, MLP_HIDDEN2))), b3=nrm((1,)),
    )
    return p


def prepare_kernel_params(p):
    """Torch layout -> fused lane-dense kernel layout (gate+direction fused,
    pre-transposed, biases folded, bf16 matmul weights, 128-lane padded w3)."""
    bf16 = jnp.bfloat16
    kp = {}

    def pack_layer(lp, din):
        wih = jnp.zeros((din, 2 * GP), jnp.float32)   # fwd cols 0:96, bwd 128:224
        bc = jnp.zeros((1, 2 * GP), jnp.float32)
        whh, bhn = [], []
        for d_idx, d in enumerate(("fwd", "bwd")):
            g = lp[d]
            whh_d = jnp.zeros((H, G3), jnp.float32)
            for k in range(3):                           # gate order: r, z, n
                c = d_idx * GP + k * H
                wih = wih.at[:, c:c + H].set(g["w_ih"][k * H:(k + 1) * H, :].T)
                whh_d = whh_d.at[:, k * H:(k + 1) * H].set(
                    g["w_hh"][k * H:(k + 1) * H, :].T)
                bi = g["b_ih"][k * H:(k + 1) * H]
                bh = g["b_hh"][k * H:(k + 1) * H]
                bc = bc.at[0, c:c + H].set(bi + bh if k < 2 else bi)
            whh.append(whh_d)
            bhn.append(jnp.zeros((1, G3), jnp.float32).at[0, 2 * H:].set(
                g["b_hh"][2 * H:3 * H]))
        return (wih.astype(bf16), bc,
                jnp.stack(whh).astype(bf16), jnp.stack(bhn))

    kp["wih1"], kp["bc1"], kp["whh1"], kp["bhn1"] = pack_layer(p["gru"][0], EMB_DIM)
    wih2, kp["bc2"], kp["whh2"], kp["bhn2"] = pack_layer(p["gru"][1], 2 * H)
    kp["wih2f"], kp["wih2b"] = wih2[:H], wih2[H:]       # split by fwd/bwd input rows

    m = p["mlp"]
    w1t = m["w1"].T                                      # (2H, MLP_HIDDEN)
    kp["w1f"], kp["w1b"] = w1t[:H].astype(bf16), w1t[H:].astype(bf16)
    kp["b1"] = m["b1"].reshape(1, MLP_HIDDEN)
    kp["w2"] = m["w2"].T.astype(bf16)                    # (MLP_HIDDEN, MLP_HIDDEN2)
    kp["b2"] = m["b2"].reshape(1, MLP_HIDDEN2)
    # final linear padded to 128 lanes -> unmasked (lane-dense) output store
    w3p = jnp.zeros((MLP_HIDDEN2, OUT_PAD), jnp.float32).at[:, 0:1].set(m["w3"].T)
    kp["w3p"] = w3p.astype(bf16)
    kp["b3p"] = jnp.zeros((1, OUT_PAD), jnp.float32).at[:, 0].set(m["b3"])
    return kp


# ---------------------------------------------------------------------------
# Pure-JAX f32 reference (torch semantics: pack_padded + bi-GRU x2 + MLP)
# ---------------------------------------------------------------------------
def reference_forward(tp, X, lens, rho, dssp_feat, iedb_emb):
    emb = jnp.take(tp["esm_embed"], X, axis=0)
    x = jnp.concatenate([emb, dssp_feat, iedb_emb, rho], axis=2)     # (B,T,EMB)
    lens_f = lens.astype(jnp.float32)

    def gru_layer(x_in, lp):
        def run_dir(pd, reverse):
            h = jnp.zeros((B, H), jnp.float32)
            outs = [None] * T
            order = range(T - 1, -1, -1) if reverse else range(T)
            for t in order:
                gi = x_in[:, t] @ pd["w_ih"].T + pd["b_ih"]
                gh = h @ pd["w_hh"].T + pd["b_hh"]
                r = jax.nn.sigmoid(gi[:, :H] + gh[:, :H])
                z = jax.nn.sigmoid(gi[:, H:2 * H] + gh[:, H:2 * H])
                n = jnp.tanh(gi[:, 2 * H:] + r * gh[:, 2 * H:])
                h_new = (1.0 - z) * n + z * h
                m = (lens_f > t).astype(jnp.float32)[:, None]
                outs[t] = m * h_new
                h = m * h_new + (1.0 - m) * h
            return jnp.stack(outs, axis=1)                           # (B,T,H)
        return jnp.concatenate([run_dir(lp["fwd"], False),
                                run_dir(lp["bwd"], True)], axis=2)

    y = gru_layer(x, tp["gru"][0])
    y = gru_layer(y, tp["gru"][1])
    mp = tp["mlp"]
    h1 = y @ mp["w1"].T + mp["b1"]
    h1 = h1 * jax.nn.sigmoid(h1)
    h2 = h1 @ mp["w2"].T + mp["b2"]
    h2 = h2 * jax.nn.sigmoid(h2)
    return h2 @ mp["w3"].T + mp["b3"]                                # (B,T,1)


# ---------------------------------------------------------------------------
if __name__ == "__main__":
    key = jax.random.PRNGKey(0)
    kk = jax.random.split(key, 10)
    torch_params = init_torch_style_params(kk[0])
    params = {"esm_embed": torch_params["esm_embed"],
              "kernel": prepare_kernel_params(torch_params)}

    X = jax.random.randint(kk[1], (B, T), 0, VOCAB)                  # token ids
    lens = jnp.array([T, 5], dtype=jnp.int32)                        # valid lengths
    mask = (jnp.arange(T)[None, :] < lens[:, None])                  # (B, T) bool
    coors = jax.random.normal(kk[2], (B, T, 3), dtype=jnp.float32)
    rho = jax.random.normal(kk[3], (B, T, RHO_DIM), dtype=jnp.float32)
    adj = (jax.random.uniform(kk[4], (B, T, T)) > 0.5).astype(jnp.float32)
    feat = jax.random.normal(kk[5], (B, T, T, EGNN_EDGE_DIM), dtype=jnp.float32)
    dssp_feat = jax.random.normal(kk[6], (B, T, DSSP_DIM), dtype=jnp.float32)
    iedb_emb = jax.random.normal(kk[7], (B, T, IEDB_DIM), dtype=jnp.float32)

    fwd = jax.jit(epitope_forward)
    out = fwd(params, X, lens, mask, coors, rho, adj, feat, dssp_feat, iedb_emb)
    jax.block_until_ready(out)

    ref = reference_forward(torch_params, X, lens, rho, dssp_feat, iedb_emb)
    max_err = float(jnp.max(jnp.abs(out - ref)))
    assert out.shape == (B, T, 1)
    assert bool(jnp.all(jnp.isfinite(out)))
    assert max_err < 5e-2, f"mismatch vs f32 reference: {max_err}"
    print("KERNEL_OK")
</pallas_src>

<mosaic_0001>
module attributes {stable_mosaic.version = 11 : i64} {
  func.func @fused_gru_mlp_kernel(%arg0: memref<64x50xbf16, #tpu.memory_space<vmem>>, %arg1: memref<8x1xf32, #tpu.memory_space<vmem>>, %arg2: memref<50x256xbf16, #tpu.memory_space<vmem>>, %arg3: memref<1x256xf32, #tpu.memory_space<vmem>>, %arg4: memref<2x32x96xbf16, #tpu.memory_space<vmem>>, %arg5: memref<2x1x96xf32, #tpu.memory_space<vmem>>, %arg6: memref<32x256xbf16, #tpu.memory_space<vmem>>, %arg7: memref<32x256xbf16, #tpu.memory_space<vmem>>, %arg8: memref<1x256xf32, #tpu.memory_space<vmem>>, %arg9: memref<2x32x96xbf16, #tpu.memory_space<vmem>>, %arg10: memref<2x1x96xf32, #tpu.memory_space<vmem>>, %arg11: memref<32x32xbf16, #tpu.memory_space<vmem>>, %arg12: memref<32x32xbf16, #tpu.memory_space<vmem>>, %arg13: memref<1x32xf32, #tpu.memory_space<vmem>>, %arg14: memref<32x16xbf16, #tpu.memory_space<vmem>>, %arg15: memref<1x16xf32, #tpu.memory_space<vmem>>, %arg16: memref<16x128xbf16, #tpu.memory_space<vmem>>, %arg17: memref<1x128xf32, #tpu.memory_space<vmem>>, %arg18: memref<64x128xf32, #tpu.memory_space<vmem>>) attributes {dimension_semantics = [], scalar_prefetch = 0 : i64, scratch_operands = 0 : i64, tpu.core_type = #tpu.core_type<tc>} {
    %c0 = arith.constant 0 : index
    %c0_0 = arith.constant 0 : index
    %0 = vector.load %arg1[%c0, %c0_0] : memref<8x1xf32, #tpu.memory_space<vmem>>, vector<8x1xf32>
    %cst = arith.constant 0.000000e+00 : f32
    %1 = vector.broadcast %cst : f32 to vector<8x1xf32>
    %2 = arith.cmpf ogt, %0, %1 : vector<8x1xf32>
    %3 = arith.extui %2 : vector<8x1xi1> to vector<8x1xi32>
    %4 = arith.sitofp %3 : vector<8x1xi32> to vector<8x1xf32>
    %5 = vector.shape_cast %4 : vector<8x1xf32> to vector<8x1xf32>
    %6 = vector.broadcast %5 : vector<8x1xf32> to vector<8x32xf32>
    %cst_1 = arith.constant 1.000000e+00 : f32
    %7 = vector.broadcast %cst_1 : f32 to vector<8x1xf32>
    %8 = arith.cmpf ogt, %0, %7 : vector<8x1xf32>
    %9 = arith.extui %8 : vector<8x1xi1> to vector<8x1xi32>
    %10 = arith.sitofp %9 : vector<8x1xi32> to vector<8x1xf32>
    %11 = vector.shape_cast %10 : vector<8x1xf32> to vector<8x1xf32>
    %12 = vector.broadcast %11 : vector<8x1xf32> to vector<8x32xf32>
    %cst_2 = arith.constant 2.000000e+00 : f32
    %13 = vector.broadcast %cst_2 : f32 to vector<8x1xf32>
    %14 = arith.cmpf ogt, %0, %13 : vector<8x1xf32>
    %15 = arith.extui %14 : vector<8x1xi1> to vector<8x1xi32>
    %16 = arith.sitofp %15 : vector<8x1xi32> to vector<8x1xf32>
    %17 = vector.shape_cast %16 : vector<8x1xf32> to vector<8x1xf32>
    %18 = vector.broadcast %17 : vector<8x1xf32> to vector<8x32xf32>
    %cst_3 = arith.constant 3.000000e+00 : f32
    %19 = vector.broadcast %cst_3 : f32 to vector<8x1xf32>
    %20 = arith.cmpf ogt, %0, %19 : vector<8x1xf32>
    %21 = arith.extui %20 : vector<8x1xi1> to vector<8x1xi32>
    %22 = arith.sitofp %21 : vector<8x1xi32> to vector<8x1xf32>
    %23 = vector.shape_cast %22 : vector<8x1xf32> to vector<8x1xf32>
    %24 = vector.broadcast %23 : vector<8x1xf32> to vector<8x32xf32>
    %cst_4 = arith.constant 4.000000e+00 : f32
    %25 = vector.broadcast %cst_4 : f32 to vector<8x1xf32>
    %26 = arith.cmpf ogt, %0, %25 : vector<8x1xf32>
    %27 = arith.extui %26 : vector<8x1xi1> to vector<8x1xi32>
    %28 = arith.sitofp %27 : vector<8x1xi32> to vector<8x1xf32>
    %29 = vector.shape_cast %28 : vector<8x1xf32> to vector<8x1xf32>
    %30 = vector.broadcast %29 : vector<8x1xf32> to vector<8x32xf32>
    %cst_5 = arith.constant 5.000000e+00 : f32
    %31 = vector.broadcast %cst_5 : f32 to vector<8x1xf32>
    %32 = arith.cmpf ogt, %0, %31 : vector<8x1xf32>
    %33 = arith.extui %32 : vector<8x1xi1> to vector<8x1xi32>
    %34 = arith.sitofp %33 : vector<8x1xi32> to vector<8x1xf32>
    %35 = vector.shape_cast %34 : vector<8x1xf32> to vector<8x1xf32>
    %36 = vector.broadcast %35 : vector<8x1xf32> to vector<8x32xf32>
    %cst_6 = arith.constant 6.000000e+00 : f32
    %37 = vector.broadcast %cst_6 : f32 to vector<8x1xf32>
    %38 = arith.cmpf ogt, %0, %37 : vector<8x1xf32>
    %39 = arith.extui %38 : vector<8x1xi1> to vector<8x1xi32>
    %40 = arith.sitofp %39 : vector<8x1xi32> to vector<8x1xf32>
    %41 = vector.shape_cast %40 : vector<8x1xf32> to vector<8x1xf32>
    %42 = vector.broadcast %41 : vector<8x1xf32> to vector<8x32xf32>
    %cst_7 = arith.constant 7.000000e+00 : f32
    %43 = vector.broadcast %cst_7 : f32 to vector<8x1xf32>
    %44 = arith.cmpf ogt, %0, %43 : vector<8x1xf32>
    %45 = arith.extui %44 : vector<8x1xi1> to vector<8x1xi32>
    %46 = arith.sitofp %45 : vector<8x1xi32> to vector<8x1xf32>
    %47 = vector.shape_cast %46 : vector<8x1xf32> to vector<8x1xf32>
    %48 = vector.broadcast %47 : vector<8x1xf32> to vector<8x32xf32>
    %c0_8 = arith.constant 0 : index
    %c0_9 = arith.constant 0 : index
    %49 = vector.load %arg0[%c0_8, %c0_9] : memref<64x50xbf16, #tpu.memory_space<vmem>>, vector<64x50xbf16>
    %c0_10 = arith.constant 0 : index
    %c0_11 = arith.constant 0 : index
    %50 = vector.load %arg2[%c0_10, %c0_11] : memref<50x256xbf16, #tpu.memory_space<vmem>>, vector<50x256xbf16>
    %cst_12 = arith.constant dense<0.000000e+00> : vector<64x256xf32>
    %51 = tpu.matmul %49, %50, %cst_12 {dimension_numbers = #tpu.dot_dimension_numbers<[1], [0], [0], [1], [0, 0, 1, 1], [], []>} : vector<64x50xbf16>, vector<50x256xbf16>, vector<64x256xf32> -> vector<64x256xf32>
    %c0_13 = arith.constant 0 : index
    %c0_14 = arith.constant 0 : index
    %52 = vector.load %arg3[%c0_13, %c0_14] : memref<1x256xf32, #tpu.memory_space<vmem>>, vector<1x256xf32>
    %53 = vector.broadcast %52 : vector<1x256xf32> to vector<64x256xf32>
    %54 = arith.addf %51, %53 : vector<64x256xf32>
    %55 = vector.extract_strided_slice %54 {offsets = [0, 0], sizes = [64, 96], strides = [1, 1]} : vector<64x256xf32> to vector<64x96xf32>
    %56 = vector.extract_strided_slice %54 {offsets = [0, 128], sizes = [64, 96], strides = [1, 1]} : vector<64x256xf32> to vector<64x96xf32>
    %c0_15 = arith.constant 0 : index
    %c0_16 = arith.constant 0 : index
    %c0_17 = arith.constant 0 : index
    %57 = vector.load %arg4[%c0_15, %c0_16, %c0_17] : memref<2x32x96xbf16, #tpu.memory_space<vmem>>, vector<1x32x96xbf16>
    %58 = vector.shape_cast %57 : vector<1x32x96xbf16> to vector<32x96xbf16>
    %c1 = arith.constant 1 : index
    %c0_18 = arith.constant 0 : index
    %c0_19 = arith.constant 0 : index
    %59 = vector.load %arg4[%c1, %c0_18, %c0_19] : memref<2x32x96xbf16, #tpu.memory_space<vmem>>, vector<1x32x96xbf16>
    %60 = vector.shape_cast %59 : vector<1x32x96xbf16> to vector<32x96xbf16>
    %c0_20 = arith.constant 0 : index
    %c0_21 = arith.constant 0 : index
    %c0_22 = arith.constant 0 : index
    %61 = vector.load %arg5[%c0_20, %c0_21, %c0_22] : memref<2x1x96xf32, #tpu.memory_space<vmem>>, vector<1x1x96xf32>
    %62 = vector.shape_cast %61 : vector<1x1x96xf32> to vector<1x96xf32>
    %63 = vector.shape_cast %62 : vector<1x96xf32> to vector<1x96xf32>
    %64 = vector.broadcast %63 : vector<1x96xf32> to vector<8x96xf32>
    %c1_23 = arith.constant 1 : index
    %c0_24 = arith.constant 0 : index
    %c0_25 = arith.constant 0 : index
    %65 = vector.load %arg5[%c1_23, %c0_24, %c0_25] : memref<2x1x96xf32, #tpu.memory_space<vmem>>, vector<1x1x96xf32>
    %66 = vector.shape_cast %65 : vector<1x1x96xf32> to vector<1x96xf32>
    %67 = vector.shape_cast %66 : vector<1x96xf32> to vector<1x96xf32>
    %68 = vector.broadcast %67 : vector<1x96xf32> to vector<8x96xf32>
    %cst_26 = arith.constant 0.000000e+00 : f32
    %69 = vector.broadcast %cst_26 : f32 to vector<8x32xf32>
    %cst_27 = arith.constant 0.000000e+00 : f32
    %70 = vector.broadcast %cst_27 : f32 to vector<8x32xf32>
    %71 = vector.extract_strided_slice %55 {offsets = [0, 0], sizes = [8, 96], strides = [1, 1]} : vector<64x96xf32> to vector<8x96xf32>
    %72 = arith.truncf %69 : vector<8x32xf32> to vector<8x32xbf16>
    %cst_28 = arith.constant dense<0.000000e+00> : vector<8x96xf32>
    %73 = tpu.matmul %72, %58, %cst_28 {dimension_numbers = #tpu.dot_dimension_numbers<[1], [0], [0], [1], [0, 0, 1, 1], [], []>} : vector<8x32xbf16>, vector<32x96xbf16>, vector<8x96xf32> -> vector<8x96xf32>
    %74 = arith.addf %73, %64 : vector<8x96xf32>
    %75 = vector.extract_strided_slice %71 {offsets = [0, 0], sizes = [8, 64], strides = [1, 1]} : vector<8x96xf32> to vector<8x64xf32>
    %76 = vector.extract_strided_slice %74 {offsets = [0, 0], sizes = [8, 64], strides = [1, 1]} : vector<8x96xf32> to vector<8x64xf32>
    %77 = arith.addf %75, %76 : vector<8x64xf32>
    %78 = arith.negf %77 : vector<8x64xf32>
    %79 = math.exp %78 : vector<8x64xf32>
    %cst_29 = arith.constant 1.000000e+00 : f32
    %80 = vector.broadcast %cst_29 : f32 to vector<8x64xf32>
    %81 = arith.addf %80, %79 : vector<8x64xf32>
    %82 = arith.divf %80, %81 : vector<8x64xf32>
    %83 = vector.extract_strided_slice %82 {offsets = [0, 0], sizes = [8, 32], strides = [1, 1]} : vector<8x64xf32> to vector<8x32xf32>
    %84 = vector.extract_strided_slice %82 {offsets = [0, 32], sizes = [8, 32], strides = [1, 1]} : vector<8x64xf32> to vector<8x32xf32>
    %85 = vector.extract_strided_slice %71 {offsets = [0, 64], sizes = [8, 32], strides = [1, 1]} : vector<8x96xf32> to vector<8x32xf32>
    %86 = vector.extract_strided_slice %74 {offsets = [0, 64], sizes = [8, 32], strides = [1, 1]} : vector<8x96xf32> to vector<8x32xf32>
    %87 = arith.mulf %83, %86 : vector<8x32xf32>
    %88 = arith.addf %85, %87 : vector<8x32xf32>
    %89 = math.tanh %88 : vector<8x32xf32>
    %cst_30 = arith.constant 1.000000e+00 : f32
    %90 = vector.broadcast %cst_30 : f32 to vector<8x32xf32>
    %91 = arith.subf %90, %84 : vector<8x32xf32>
    %92 = arith.mulf %91, %89 : vector<8x32xf32>
    %93 = arith.mulf %84, %69 : vector<8x32xf32>
    %94 = arith.addf %92, %93 : vector<8x32xf32>
    %95 = arith.mulf %6, %94 : vector<8x32xf32>
    %96 = arith.subf %94, %69 : vector<8x32xf32>
    %97 = arith.mulf %6, %96 : vector<8x32xf32>
    %98 = arith.addf %69, %97 : vector<8x32xf32>
    %99 = vector.extract_strided_slice %56 {offsets = [56, 0], sizes = [8, 96], strides = [1, 1]} : vector<64x96xf32> to vector<8x96xf32>
    %100 = arith.truncf %70 : vector<8x32xf32> to vector<8x32xbf16>
    %cst_31 = arith.constant dense<0.000000e+00> : vector<8x96xf32>
    %101 = tpu.matmul %100, %60, %cst_31 {dimension_numbers = #tpu.dot_dimension_numbers<[1], [0], [0], [1], [0, 0, 1, 1], [], []>} : vector<8x32xbf16>, vector<32x96xbf16>, vector<8x96xf32> -> vector<8x96xf32>
    %102 = arith.addf %101, %68 : vector<8x96xf32>
    %103 = vector.extract_strided_slice %99 {offsets = [0, 0], sizes = [8, 64], strides = [1, 1]} : vector<8x96xf32> to vector<8x64xf32>
    %104 = vector.extract_strided_slice %102 {offsets = [0, 0], sizes = [8, 64], strides = [1, 1]} : vector<8x96xf32> to vector<8x64xf32>
    %105 = arith.addf %103, %104 : vector<8x64xf32>
    %106 = arith.negf %105 : vector<8x64xf32>
    %107 = math.exp %106 : vector<8x64xf32>
    %cst_32 = arith.constant 1.000000e+00 : f32
    %108 = vector.broadcast %cst_32 : f32 to vector<8x64xf32>
    %109 = arith.addf %108, %107 : vector<8x64xf32>
    %110 = arith.divf %108, %109 : vector<8x64xf32>
    %111 = vector.extract_strided_slice %110 {offsets = [0, 0], sizes = [8, 32], strides = [1, 1]} : vector<8x64xf32> to vector<8x32xf32>
    %112 = vector.extract_strided_slice %110 {offsets = [0, 32], sizes = [8, 32], strides = [1, 1]} : vector<8x64xf32> to vector<8x32xf32>
    %113 = vector.extract_strided_slice %99 {offsets = [0, 64], sizes = [8, 32], strides = [1, 1]} : vector<8x96xf32> to vector<8x32xf32>
    %114 = vector.extract_strided_slice %102 {offsets = [0, 64], sizes = [8, 32], strides = [1, 1]} : vector<8x96xf32> to vector<8x32xf32>
    %115 = arith.mulf %111, %114 : vector<8x32xf32>
    %116 = arith.addf %113, %115 : vector<8x32xf32>
    %117 = math.tanh %116 : vector<8x32xf32>
    %cst_33 = arith.constant 1.000000e+00 : f32
    %118 = vector.broadcast %cst_33 : f32 to vector<8x32xf32>
    %119 = arith.subf %118, %112 : vector<8x32xf32>
    %120 = arith.mulf %119, %117 : vector<8x32xf32>
    %121 = arith.mulf %112, %70 : vector<8x32xf32>
    %122 = arith.addf %120, %121 : vector<8x32xf32>
    %123 = arith.mulf %48, %122 : vector<8x32xf32>
    %124 = arith.subf %122, %70 : vector<8x32xf32>
    %125 = arith.mulf %48, %124 : vector<8x32xf32>
    %126 = arith.addf %70, %125 : vector<8x32xf32>
    %127 = vector.extract_strided_slice %55 {offsets = [8, 0], sizes = [8, 96], strides = [1, 1]} : vector<64x96xf32> to vector<8x96xf32>
    %128 = arith.truncf %98 : vector<8x32xf32> to vector<8x32xbf16>
    %cst_34 = arith.constant dense<0.000000e+00> : vector<8x96xf32>
    %129 = tpu.matmul %128, %58, %cst_34 {dimension_numbers = #tpu.dot_dimension_numbers<[1], [0], [0], [1], [0, 0, 1, 1], [], []>} : vector<8x32xbf16>, vector<32x96xbf16>, vector<8x96xf32> -> vector<8x96xf32>
    %130 = arith.addf %129, %64 : vector<8x96xf32>
    %131 = vector.extract_strided_slice %127 {offsets = [0, 0], sizes = [8, 64], strides = [1, 1]} : vector<8x96xf32> to vector<8x64xf32>
    %132 = vector.extract_strided_slice %130 {offsets = [0, 0], sizes = [8, 64], strides = [1, 1]} : vector<8x96xf32> to vector<8x64xf32>
    %133 = arith.addf %131, %132 : vector<8x64xf32>
    %134 = arith.negf %133 : vector<8x64xf32>
    %135 = math.exp %134 : vector<8x64xf32>
    %cst_35 = arith.constant 1.000000e+00 : f32
    %136 = vector.broadcast %cst_35 : f32 to vector<8x64xf32>
    %137 = arith.addf %136, %135 : vector<8x64xf32>
    %138 = arith.divf %136, %137 : vector<8x64xf32>
    %139 = vector.extract_strided_slice %138 {offsets = [0, 0], sizes = [8, 32], strides = [1, 1]} : vector<8x64xf32> to vector<8x32xf32>
    %140 = vector.extract_strided_slice %138 {offsets = [0, 32], sizes = [8, 32], strides = [1, 1]} : vector<8x64xf32> to vector<8x32xf32>
    %141 = vector.extract_strided_slice %127 {offsets = [0, 64], sizes = [8, 32], strides = [1, 1]} : vector<8x96xf32> to vector<8x32xf32>
    %142 = vector.extract_strided_slice %130 {offsets = [0, 64], sizes = [8, 32], strides = [1, 1]} : vector<8x96xf32> to vector<8x32xf32>
    %143 = arith.mulf %139, %142 : vector<8x32xf32>
    %144 = arith.addf %141, %143 : vector<8x32xf32>
    %145 = math.tanh %144 : vector<8x32xf32>
    %cst_36 = arith.constant 1.000000e+00 : f32
    %146 = vector.broadcast %cst_36 : f32 to vector<8x32xf32>
    %147 = arith.subf %146, %140 : vector<8x32xf32>
    %148 = arith.mulf %147, %145 : vector<8x32xf32>
    %149 = arith.mulf %140, %98 : vector<8x32xf32>
    %150 = arith.addf %148, %149 : vector<8x32xf32>
    %151 = arith.mulf %12, %150 : vector<8x32xf32>
    %152 = arith.subf %150, %98 : vector<8x32xf32>
    %153 = arith.mulf %12, %152 : vector<8x32xf32>
    %154 = arith.addf %98, %153 : vector<8x32xf32>
    %155 = vector.extract_strided_slice %56 {offsets = [48, 0], sizes = [8, 96], strides = [1, 1]} : vector<64x96xf32> to vector<8x96xf32>
    %156 = arith.truncf %126 : vector<8x32xf32> to vector<8x32xbf16>
    %cst_37 = arith.constant dense<0.000000e+00> : vector<8x96xf32>
    %157 = tpu.matmul %156, %60, %cst_37 {dimension_numbers = #tpu.dot_dimension_numbers<[1], [0], [0], [1], [0, 0, 1, 1], [], []>} : vector<8x32xbf16>, vector<32x96xbf16>, vector<8x96xf32> -> vector<8x96xf32>
    %158 = arith.addf %157, %68 : vector<8x96xf32>
    %159 = vector.extract_strided_slice %155 {offsets = [0, 0], sizes = [8, 64], strides = [1, 1]} : vector<8x96xf32> to vector<8x64xf32>
    %160 = vector.extract_strided_slice %158 {offsets = [0, 0], sizes = [8, 64], strides = [1, 1]} : vector<8x96xf32> to vector<8x64xf32>
    %161 = arith.addf %159, %160 : vector<8x64xf32>
    %162 = arith.negf %161 : vector<8x64xf32>
    %163 = math.exp %162 : vector<8x64xf32>
    %cst_38 = arith.constant 1.000000e+00 : f32
    %164 = vector.broadcast %cst_38 : f32 to vector<8x64xf32>
    %165 = arith.addf %164, %163 : vector<8x64xf32>
    %166 = arith.divf %164, %165 : vector<8x64xf32>
    %167 = vector.extract_strided_slice %166 {offsets = [0, 0], sizes = [8, 32], strides = [1, 1]} : vector<8x64xf32> to vector<8x32xf32>
    %168 = vector.extract_strided_slice %166 {offsets = [0, 32], sizes = [8, 32], strides = [1, 1]} : vector<8x64xf32> to vector<8x32xf32>
    %169 = vector.extract_strided_slice %155 {offsets = [0, 64], sizes = [8, 32], strides = [1, 1]} : vector<8x96xf32> to vector<8x32xf32>
    %170 = vector.extract_strided_slice %158 {offsets = [0, 64], sizes = [8, 32], strides = [1, 1]} : vector<8x96xf32> to vector<8x32xf32>
    %171 = arith.mulf %167, %170 : vector<8x32xf32>
    %172 = arith.addf %169, %171 : vector<8x32xf32>
    %173 = math.tanh %172 : vector<8x32xf32>
    %cst_39 = arith.constant 1.000000e+00 : f32
    %174 = vector.broadcast %cst_39 : f32 to vector<8x32xf32>
    %175 = arith.subf %174, %168 : vector<8x32xf32>
    %176 = arith.mulf %175, %173 : vector<8x32xf32>
    %177 = arith.mulf %168, %126 : vector<8x32xf32>
    %178 = arith.addf %176, %177 : vector<8x32xf32>
    %179 = arith.mulf %42, %178 : vector<8x32xf32>
    %180 = arith.subf %178, %126 : vector<8x32xf32>
    %181 = arith.mulf %42, %180 : vector<8x32xf32>
    %182 = arith.addf %126, %181 : vector<8x32xf32>
    %183 = vector.extract_strided_slice %55 {offsets = [16, 0], sizes = [8, 96], strides = [1, 1]} : vector<64x96xf32> to vector<8x96xf32>
    %184 = arith.truncf %154 : vector<8x32xf32> to vector<8x32xbf16>
    %cst_40 = arith.constant dense<0.000000e+00> : vector<8x96xf32>
    %185 = tpu.matmul %184, %58, %cst_40 {dimension_numbers = #tpu.dot_dimension_numbers<[1], [0], [0], [1], [0, 0, 1, 1], [], []>} : vector<8x32xbf16>, vector<32x96xbf16>, vector<8x96xf32> -> vector<8x96xf32>
    %186 = arith.addf %185, %64 : vector<8x96xf32>
    %187 = vector.extract_strided_slice %183 {offsets = [0, 0], sizes = [8, 64], strides = [1, 1]} : vector<8x96xf32> to vector<8x64xf32>
    %188 = vector.extract_strided_slice %186 {offsets = [0, 0], sizes = [8, 64], strides = [1, 1]} : vector<8x96xf32> to vector<8x64xf32>
    %189 = arith.addf %187, %188 : vector<8x64xf32>
    %190 = arith.negf %189 : vector<8x64xf32>
    %191 = math.exp %190 : vector<8x64xf32>
    %cst_41 = arith.constant 1.000000e+00 : f32
    %192 = vector.broadcast %cst_41 : f32 to vector<8x64xf32>
    %193 = arith.addf %192, %191 : vector<8x64xf32>
    %194 = arith.divf %192, %193 : vector<8x64xf32>
    %195 = vector.extract_strided_slice %194 {offsets = [0, 0], sizes = [8, 32], strides = [1, 1]} : vector<8x64xf32> to vector<8x32xf32>
    %196 = vector.extract_strided_slice %194 {offsets = [0, 32], sizes = [8, 32], strides = [1, 1]} : vector<8x64xf32> to vector<8x32xf32>
    %197 = vector.extract_strided_slice %183 {offsets = [0, 64], sizes = [8, 32], strides = [1, 1]} : vector<8x96xf32> to vector<8x32xf32>
    %198 = vector.extract_strided_slice %186 {offsets = [0, 64], sizes = [8, 32], strides = [1, 1]} : vector<8x96xf32> to vector<8x32xf32>
    %199 = arith.mulf %195, %198 : vector<8x32xf32>
    %200 = arith.addf %197, %199 : vector<8x32xf32>
    %201 = math.tanh %200 : vector<8x32xf32>
    %cst_42 = arith.constant 1.000000e+00 : f32
    %202 = vector.broadcast %cst_42 : f32 to vector<8x32xf32>
    %203 = arith.subf %202, %196 : vector<8x32xf32>
    %204 = arith.mulf %203, %201 : vector<8x32xf32>
    %205 = arith.mulf %196, %154 : vector<8x32xf32>
    %206 = arith.addf %204, %205 : vector<8x32xf32>
    %207 = arith.mulf %18, %206 : vector<8x32xf32>
    %208 = arith.subf %206, %154 : vector<8x32xf32>
    %209 = arith.mulf %18, %208 : vector<8x32xf32>
    %210 = arith.addf %154, %209 : vector<8x32xf32>
    %211 = vector.extract_strided_slice %56 {offsets = [40, 0], sizes = [8, 96], strides = [1, 1]} : vector<64x96xf32> to vector<8x96xf32>
    %212 = arith.truncf %182 : vector<8x32xf32> to vector<8x32xbf16>
    %cst_43 = arith.constant dense<0.000000e+00> : vector<8x96xf32>
    %213 = tpu.matmul %212, %60, %cst_43 {dimension_numbers = #tpu.dot_dimension_numbers<[1], [0], [0], [1], [0, 0, 1, 1], [], []>} : vector<8x32xbf16>, vector<32x96xbf16>, vector<8x96xf32> -> vector<8x96xf32>
    %214 = arith.addf %213, %68 : vector<8x96xf32>
    %215 = vector.extract_strided_slice %211 {offsets = [0, 0], sizes = [8, 64], strides = [1, 1]} : vector<8x96xf32> to vector<8x64xf32>
    %216 = vector.extract_strided_slice %214 {offsets = [0, 0], sizes = [8, 64], strides = [1, 1]} : vector<8x96xf32> to vector<8x64xf32>
    %217 = arith.addf %215, %216 : vector<8x64xf32>
    %218 = arith.negf %217 : vector<8x64xf32>
    %219 = math.exp %218 : vector<8x64xf32>
    %cst_44 = arith.constant 1.000000e+00 : f32
    %220 = vector.broadcast %cst_44 : f32 to vector<8x64xf32>
    %221 = arith.addf %220, %219 : vector<8x64xf32>
    %222 = arith.divf %220, %221 : vector<8x64xf32>
    %223 = vector.extract_strided_slice %222 {offsets = [0, 0], sizes = [8, 32], strides = [1, 1]} : vector<8x64xf32> to vector<8x32xf32>
    %224 = vector.extract_strided_slice %222 {offsets = [0, 32], sizes = [8, 32], strides = [1, 1]} : vector<8x64xf32> to vector<8x32xf32>
    %225 = vector.extract_strided_slice %211 {offsets = [0, 64], sizes = [8, 32], strides = [1, 1]} : vector<8x96xf32> to vector<8x32xf32>
    %226 = vector.extract_strided_slice %214 {offsets = [0, 64], sizes = [8, 32], strides = [1, 1]} : vector<8x96xf32> to vector<8x32xf32>
    %227 = arith.mulf %223, %226 : vector<8x32xf32>
    %228 = arith.addf %225, %227 : vector<8x32xf32>
    %229 = math.tanh %228 : vector<8x32xf32>
    %cst_45 = arith.constant 1.000000e+00 : f32
    %230 = vector.broadcast %cst_45 : f32 to vector<8x32xf32>
    %231 = arith.subf %230, %224 : vector<8x32xf32>
    %232 = arith.mulf %231, %229 : vector<8x32xf32>
    %233 = arith.mulf %224, %182 : vector<8x32xf32>
    %234 = arith.addf %232, %233 : vector<8x32xf32>
    %235 = arith.mulf %36, %234 : vector<8x32xf32>
    %236 = arith.subf %234, %182 : vector<8x32xf32>
    %237 = arith.mulf %36, %236 : vector<8x32xf32>
    %238 = arith.addf %182, %237 : vector<8x32xf32>
    %239 = vector.extract_strided_slice %55 {offsets = [24, 0], sizes = [8, 96], strides = [1, 1]} : vector<64x96xf32> to vector<8x96xf32>
    %240 = arith.truncf %210 : vector<8x32xf32> to vector<8x32xbf16>
    %cst_46 = arith.constant dense<0.000000e+00> : vector<8x96xf32>
    %241 = tpu.matmul %240, %58, %cst_46 {dimension_numbers = #tpu.dot_dimension_numbers<[1], [0], [0], [1], [0, 0, 1, 1], [], []>} : vector<8x32xbf16>, vector<32x96xbf16>, vector<8x96xf32> -> vector<8x96xf32>
    %242 = arith.addf %241, %64 : vector<8x96xf32>
    %243 = vector.extract_strided_slice %239 {offsets = [0, 0], sizes = [8, 64], strides = [1, 1]} : vector<8x96xf32> to vector<8x64xf32>
    %244 = vector.extract_strided_slice %242 {offsets = [0, 0], sizes = [8, 64], strides = [1, 1]} : vector<8x96xf32> to vector<8x64xf32>
    %245 = arith.addf %243, %244 : vector<8x64xf32>
    %246 = arith.negf %245 : vector<8x64xf32>
    %247 = math.exp %246 : vector<8x64xf32>
    %cst_47 = arith.constant 1.000000e+00 : f32
    %248 = vector.broadcast %cst_47 : f32 to vector<8x64xf32>
    %249 = arith.addf %248, %247 : vector<8x64xf32>
    %250 = arith.divf %248, %249 : vector<8x64xf32>
    %251 = vector.extract_strided_slice %250 {offsets = [0, 0], sizes = [8, 32], strides = [1, 1]} : vector<8x64xf32> to vector<8x32xf32>
    %252 = vector.extract_strided_slice %250 {offsets = [0, 32], sizes = [8, 32], strides = [1, 1]} : vector<8x64xf32> to vector<8x32xf32>
    %253 = vector.extract_strided_slice %239 {offsets = [0, 64], sizes = [8, 32], strides = [1, 1]} : vector<8x96xf32> to vector<8x32xf32>
    %254 = vector.extract_strided_slice %242 {offsets = [0, 64], sizes = [8, 32], strides = [1, 1]} : vector<8x96xf32> to vector<8x32xf32>
    %255 = arith.mulf %251, %254 : vector<8x32xf32>
    %256 = arith.addf %253, %255 : vector<8x32xf32>
    %257 = math.tanh %256 : vector<8x32xf32>
    %cst_48 = arith.constant 1.000000e+00 : f32
    %258 = vector.broadcast %cst_48 : f32 to vector<8x32xf32>
    %259 = arith.subf %258, %252 : vector<8x32xf32>
    %260 = arith.mulf %259, %257 : vector<8x32xf32>
    %261 = arith.mulf %252, %210 : vector<8x32xf32>
    %262 = arith.addf %260, %261 : vector<8x32xf32>
    %263 = arith.mulf %24, %262 : vector<8x32xf32>
    %264 = arith.subf %262, %210 : vector<8x32xf32>
    %265 = arith.mulf %24, %264 : vector<8x32xf32>
    %266 = arith.addf %210, %265 : vector<8x32xf32>
    %267 = vector.extract_strided_slice %56 {offsets = [32, 0], sizes = [8, 96], strides = [1, 1]} : vector<64x96xf32> to vector<8x96xf32>
    %268 = arith.truncf %238 : vector<8x32xf32> to vector<8x32xbf16>
    %cst_49 = arith.constant dense<0.000000e+00> : vector<8x96xf32>
    %269 = tpu.matmul %268, %60, %cst_49 {dimension_numbers = #tpu.dot_dimension_numbers<[1], [0], [0], [1], [0, 0, 1, 1], [], []>} : vector<8x32xbf16>, vector<32x96xbf16>, vector<8x96xf32> -> vector<8x96xf32>
    %270 = arith.addf %269, %68 : vector<8x96xf32>
    %271 = vector.extract_strided_slice %267 {offsets = [0, 0], sizes = [8, 64], strides = [1, 1]} : vector<8x96xf32> to vector<8x64xf32>
    %272 = vector.extract_strided_slice %270 {offsets = [0, 0], sizes = [8, 64], strides = [1, 1]} : vector<8x96xf32> to vector<8x64xf32>
    %273 = arith.addf %271, %272 : vector<8x64xf32>
    %274 = arith.negf %273 : vector<8x64xf32>
    %275 = math.exp %274 : vector<8x64xf32>
    %cst_50 = arith.constant 1.000000e+00 : f32
    %276 = vector.broadcast %cst_50 : f32 to vector<8x64xf32>
    %277 = arith.addf %276, %275 : vector<8x64xf32>
    %278 = arith.divf %276, %277 : vector<8x64xf32>
    %279 = vector.extract_strided_slice %278 {offsets = [0, 0], sizes = [8, 32], strides = [1, 1]} : vector<8x64xf32> to vector<8x32xf32>
    %280 = vector.extract_strided_slice %278 {offsets = [0, 32], sizes = [8, 32], strides = [1, 1]} : vector<8x64xf32> to vector<8x32xf32>
    %281 = vector.extract_strided_slice %267 {offsets = [0, 64], sizes = [8, 32], strides = [1, 1]} : vector<8x96xf32> to vector<8x32xf32>
    %282 = vector.extract_strided_slice %270 {offsets = [0, 64], sizes = [8, 32], strides = [1, 1]} : vector<8x96xf32> to vector<8x32xf32>
    %283 = arith.mulf %279, %282 : vector<8x32xf32>
    %284 = arith.addf %281, %283 : vector<8x32xf32>
    %285 = math.tanh %284 : vector<8x32xf32>
    %cst_51 = arith.constant 1.000000e+00 : f32
    %286 = vector.broadcast %cst_51 : f32 to vector<8x32xf32>
    %287 = arith.subf %286, %280 : vector<8x32xf32>
    %288 = arith.mulf %287, %285 : vector<8x32xf32>
    %289 = arith.mulf %280, %238 : vector<8x32xf32>
    %290 = arith.addf %288, %289 : vector<8x32xf32>
    %291 = arith.mulf %30, %290 : vector<8x32xf32>
    %292 = arith.subf %290, %238 : vector<8x32xf32>
    %293 = arith.mulf %30, %292 : vector<8x32xf32>
    %294 = arith.addf %238, %293 : vector<8x32xf32>
    %295 = vector.extract_strided_slice %55 {offsets = [32, 0], sizes = [8, 96], strides = [1, 1]} : vector<64x96xf32> to vector<8x96xf32>
    %296 = arith.truncf %266 : vector<8x32xf32> to vector<8x32xbf16>
    %cst_52 = arith.constant dense<0.000000e+00> : vector<8x96xf32>
    %297 = tpu.matmul %296, %58, %cst_52 {dimension_numbers = #tpu.dot_dimension_numbers<[1], [0], [0], [1], [0, 0, 1, 1], [], []>} : vector<8x32xbf16>, vector<32x96xbf16>, vector<8x96xf32> -> vector<8x96xf32>
    %298 = arith.addf %297, %64 : vector<8x96xf32>
    %299 = vector.extract_strided_slice %295 {offsets = [0, 0], sizes = [8, 64], strides = [1, 1]} : vector<8x96xf32> to vector<8x64xf32>
    %300 = vector.extract_strided_slice %298 {offsets = [0, 0], sizes = [8, 64], strides = [1, 1]} : vector<8x96xf32> to vector<8x64xf32>
    %301 = arith.addf %299, %300 : vector<8x64xf32>
    %302 = arith.negf %301 : vector<8x64xf32>
    %303 = math.exp %302 : vector<8x64xf32>
    %cst_53 = arith.constant 1.000000e+00 : f32
    %304 = vector.broadcast %cst_53 : f32 to vector<8x64xf32>
    %305 = arith.addf %304, %303 : vector<8x64xf32>
    %306 = arith.divf %304, %305 : vector<8x64xf32>
    %307 = vector.extract_strided_slice %306 {offsets = [0, 0], sizes = [8, 32], strides = [1, 1]} : vector<8x64xf32> to vector<8x32xf32>
    %308 = vector.extract_strided_slice %306 {offsets = [0, 32], sizes = [8, 32], strides = [1, 1]} : vector<8x64xf32> to vector<8x32xf32>
    %309 = vector.extract_strided_slice %295 {offsets = [0, 64], sizes = [8, 32], strides = [1, 1]} : vector<8x96xf32> to vector<8x32xf32>
    %310 = vector.extract_strided_slice %298 {offsets = [0, 64], sizes = [8, 32], strides = [1, 1]} : vector<8x96xf32> to vector<8x32xf32>
    %311 = arith.mulf %307, %310 : vector<8x32xf32>
    %312 = arith.addf %309, %311 : vector<8x32xf32>
    %313 = math.tanh %312 : vector<8x32xf32>
    %cst_54 = arith.constant 1.000000e+00 : f32
    %314 = vector.broadcast %cst_54 : f32 to vector<8x32xf32>
    %315 = arith.subf %314, %308 : vector<8x32xf32>
    %316 = arith.mulf %315, %313 : vector<8x32xf32>
    %317 = arith.mulf %308, %266 : vector<8x32xf32>
    %318 = arith.addf %316, %317 : vector<8x32xf32>
    %319 = arith.mulf %30, %318 : vector<8x32xf32>
    %320 = arith.subf %318, %266 : vector<8x32xf32>
    %321 = arith.mulf %30, %320 : vector<8x32xf32>
    %322 = arith.addf %266, %321 : vector<8x32xf32>
    %323 = vector.extract_strided_slice %56 {offsets = [24, 0], sizes = [8, 96], strides = [1, 1]} : vector<64x96xf32> to vector<8x96xf32>
    %324 = arith.truncf %294 : vector<8x32xf32> to vector<8x32xbf16>
    %cst_55 = arith.constant dense<0.000000e+00> : vector<8x96xf32>
    %325 = tpu.matmul %324, %60, %cst_55 {dimension_numbers = #tpu.dot_dimension_numbers<[1], [0], [0], [1], [0, 0, 1, 1], [], []>} : vector<8x32xbf16>, vector<32x96xbf16>, vector<8x96xf32> -> vector<8x96xf32>
    %326 = arith.addf %325, %68 : vector<8x96xf32>
    %327 = vector.extract_strided_slice %323 {offsets = [0, 0], sizes = [8, 64], strides = [1, 1]} : vector<8x96xf32> to vector<8x64xf32>
    %328 = vector.extract_strided_slice %326 {offsets = [0, 0], sizes = [8, 64], strides = [1, 1]} : vector<8x96xf32> to vector<8x64xf32>
    %329 = arith.addf %327, %328 : vector<8x64xf32>
    %330 = arith.negf %329 : vector<8x64xf32>
    %331 = math.exp %330 : vector<8x64xf32>
    %cst_56 = arith.constant 1.000000e+00 : f32
    %332 = vector.broadcast %cst_56 : f32 to vector<8x64xf32>
    %333 = arith.addf %332, %331 : vector<8x64xf32>
    %334 = arith.divf %332, %333 : vector<8x64xf32>
    %335 = vector.extract_strided_slice %334 {offsets = [0, 0], sizes = [8, 32], strides = [1, 1]} : vector<8x64xf32> to vector<8x32xf32>
    %336 = vector.extract_strided_slice %334 {offsets = [0, 32], sizes = [8, 32], strides = [1, 1]} : vector<8x64xf32> to vector<8x32xf32>
    %337 = vector.extract_strided_slice %323 {offsets = [0, 64], sizes = [8, 32], strides = [1, 1]} : vector<8x96xf32> to vector<8x32xf32>
    %338 = vector.extract_strided_slice %326 {offsets = [0, 64], sizes = [8, 32], strides = [1, 1]} : vector<8x96xf32> to vector<8x32xf32>
    %339 = arith.mulf %335, %338 : vector<8x32xf32>
    %340 = arith.addf %337, %339 : vector<8x32xf32>
    %341 = math.tanh %340 : vector<8x32xf32>
    %cst_57 = arith.constant 1.000000e+00 : f32
    %342 = vector.broadcast %cst_57 : f32 to vector<8x32xf32>
    %343 = arith.subf %342, %336 : vector<8x32xf32>
    %344 = arith.mulf %343, %341 : vector<8x32xf32>
    %345 = arith.mulf %336, %294 : vector<8x32xf32>
    %346 = arith.addf %344, %345 : vector<8x32xf32>
    %347 = arith.mulf %24, %346 : vector<8x32xf32>
    %348 = arith.subf %346, %294 : vector<8x32xf32>
    %349 = arith.mulf %24, %348 : vector<8x32xf32>
    %350 = arith.addf %294, %349 : vector<8x32xf32>
    %351 = vector.extract_strided_slice %55 {offsets = [40, 0], sizes = [8, 96], strides = [1, 1]} : vector<64x96xf32> to vector<8x96xf32>
    %352 = arith.truncf %322 : vector<8x32xf32> to vector<8x32xbf16>
    %cst_58 = arith.constant dense<0.000000e+00> : vector<8x96xf32>
    %353 = tpu.matmul %352, %58, %cst_58 {dimension_numbers = #tpu.dot_dimension_numbers<[1], [0], [0], [1], [0, 0, 1, 1], [], []>} : vector<8x32xbf16>, vector<32x96xbf16>, vector<8x96xf32> -> vector<8x96xf32>
    %354 = arith.addf %353, %64 : vector<8x96xf32>
    %355 = vector.extract_strided_slice %351 {offsets = [0, 0], sizes = [8, 64], strides = [1, 1]} : vector<8x96xf32> to vector<8x64xf32>
    %356 = vector.extract_strided_slice %354 {offsets = [0, 0], sizes = [8, 64], strides = [1, 1]} : vector<8x96xf32> to vector<8x64xf32>
    %357 = arith.addf %355, %356 : vector<8x64xf32>
    %358 = arith.negf %357 : vector<8x64xf32>
    %359 = math.exp %358 : vector<8x64xf32>
    %cst_59 = arith.constant 1.000000e+00 : f32
    %360 = vector.broadcast %cst_59 : f32 to vector<8x64xf32>
    %361 = arith.addf %360, %359 : vector<8x64xf32>
    %362 = arith.divf %360, %361 : vector<8x64xf32>
    %363 = vector.extract_strided_slice %362 {offsets = [0, 0], sizes = [8, 32], strides = [1, 1]} : vector<8x64xf32> to vector<8x32xf32>
    %364 = vector.extract_strided_slice %362 {offsets = [0, 32], sizes = [8, 32], strides = [1, 1]} : vector<8x64xf32> to vector<8x32xf32>
    %365 = vector.extract_strided_slice %351 {offsets = [0, 64], sizes = [8, 32], strides = [1, 1]} : vector<8x96xf32> to vector<8x32xf32>
    %366 = vector.extract_strided_slice %354 {offsets = [0, 64], sizes = [8, 32], strides = [1, 1]} : vector<8x96xf32> to vector<8x32xf32>
    %367 = arith.mulf %363, %366 : vector<8x32xf32>
    %368 = arith.addf %365, %367 : vector<8x32xf32>
    %369 = math.tanh %368 : vector<8x32xf32>
    %cst_60 = arith.constant 1.000000e+00 : f32
    %370 = vector.broadcast %cst_60 : f32 to vector<8x32xf32>
    %371 = arith.subf %370, %364 : vector<8x32xf32>
    %372 = arith.mulf %371, %369 : vector<8x32xf32>
    %373 = arith.mulf %364, %322 : vector<8x32xf32>
    %374 = arith.addf %372, %373 : vector<8x32xf32>
    %375 = arith.mulf %36, %374 : vector<8x32xf32>
    %376 = arith.subf %374, %322 : vector<8x32xf32>
    %377 = arith.mulf %36, %376 : vector<8x32xf32>
    %378 = arith.addf %322, %377 : vector<8x32xf32>
    %379 = vector.extract_strided_slice %56 {offsets = [16, 0], sizes = [8, 96], strides = [1, 1]} : vector<64x96xf32> to vector<8x96xf32>
    %380 = arith.truncf %350 : vector<8x32xf32> to vector<8x32xbf16>
    %cst_61 = arith.constant dense<0.000000e+00> : vector<8x96xf32>
    %381 = tpu.matmul %380, %60, %cst_61 {dimension_numbers = #tpu.dot_dimension_numbers<[1], [0], [0], [1], [0, 0, 1, 1], [], []>} : vector<8x32xbf16>, vector<32x96xbf16>, vector<8x96xf32> -> vector<8x96xf32>
    %382 = arith.addf %381, %68 : vector<8x96xf32>
    %383 = vector.extract_strided_slice %379 {offsets = [0, 0], sizes = [8, 64], strides = [1, 1]} : vector<8x96xf32> to vector<8x64xf32>
    %384 = vector.extract_strided_slice %382 {offsets = [0, 0], sizes = [8, 64], strides = [1, 1]} : vector<8x96xf32> to vector<8x64xf32>
    %385 = arith.addf %383, %384 : vector<8x64xf32>
    %386 = arith.negf %385 : vector<8x64xf32>
    %387 = math.exp %386 : vector<8x64xf32>
    %cst_62 = arith.constant 1.000000e+00 : f32
    %388 = vector.broadcast %cst_62 : f32 to vector<8x64xf32>
    %389 = arith.addf %388, %387 : vector<8x64xf32>
    %390 = arith.divf %388, %389 : vector<8x64xf32>
    %391 = vector.extract_strided_slice %390 {offsets = [0, 0], sizes = [8, 32], strides = [1, 1]} : vector<8x64xf32> to vector<8x32xf32>
    %392 = vector.extract_strided_slice %390 {offsets = [0, 32], sizes = [8, 32], strides = [1, 1]} : vector<8x64xf32> to vector<8x32xf32>
    %393 = vector.extract_strided_slice %379 {offsets = [0, 64], sizes = [8, 32], strides = [1, 1]} : vector<8x96xf32> to vector<8x32xf32>
    %394 = vector.extract_strided_slice %382 {offsets = [0, 64], sizes = [8, 32], strides = [1, 1]} : vector<8x96xf32> to vector<8x32xf32>
    %395 = arith.mulf %391, %394 : vector<8x32xf32>
    %396 = arith.addf %393, %395 : vector<8x32xf32>
    %397 = math.tanh %396 : vector<8x32xf32>
    %cst_63 = arith.constant 1.000000e+00 : f32
    %398 = vector.broadcast %cst_63 : f32 to vector<8x32xf32>
    %399 = arith.subf %398, %392 : vector<8x32xf32>
    %400 = arith.mulf %399, %397 : vector<8x32xf32>
    %401 = arith.mulf %392, %350 : vector<8x32xf32>
    %402 = arith.addf %400, %401 : vector<8x32xf32>
    %403 = arith.mulf %18, %402 : vector<8x32xf32>
    %404 = arith.subf %402, %350 : vector<8x32xf32>
    %405 = arith.mulf %18, %404 : vector<8x32xf32>
    %406 = arith.addf %350, %405 : vector<8x32xf32>
    %407 = vector.extract_strided_slice %55 {offsets = [48, 0], sizes = [8, 96], strides = [1, 1]} : vector<64x96xf32> to vector<8x96xf32>
    %408 = arith.truncf %378 : vector<8x32xf32> to vector<8x32xbf16>
    %cst_64 = arith.constant dense<0.000000e+00> : vector<8x96xf32>
    %409 = tpu.matmul %408, %58, %cst_64 {dimension_numbers = #tpu.dot_dimension_numbers<[1], [0], [0], [1], [0, 0, 1, 1], [], []>} : vector<8x32xbf16>, vector<32x96xbf16>, vector<8x96xf32> -> vector<8x96xf32>
    %410 = arith.addf %409, %64 : vector<8x96xf32>
    %411 = vector.extract_strided_slice %407 {offsets = [0, 0], sizes = [8, 64], strides = [1, 1]} : vector<8x96xf32> to vector<8x64xf32>
    %412 = vector.extract_strided_slice %410 {offsets = [0, 0], sizes = [8, 64], strides = [1, 1]} : vector<8x96xf32> to vector<8x64xf32>
    %413 = arith.addf %411, %412 : vector<8x64xf32>
    %414 = arith.negf %413 : vector<8x64xf32>
    %415 = math.exp %414 : vector<8x64xf32>
    %cst_65 = arith.constant 1.000000e+00 : f32
    %416 = vector.broadcast %cst_65 : f32 to vector<8x64xf32>
    %417 = arith.addf %416, %415 : vector<8x64xf32>
    %418 = arith.divf %416, %417 : vector<8x64xf32>
    %419 = vector.extract_strided_slice %418 {offsets = [0, 0], sizes = [8, 32], strides = [1, 1]} : vector<8x64xf32> to vector<8x32xf32>
    %420 = vector.extract_strided_slice %418 {offsets = [0, 32], sizes = [8, 32], strides = [1, 1]} : vector<8x64xf32> to vector<8x32xf32>
    %421 = vector.extract_strided_slice %407 {offsets = [0, 64], sizes = [8, 32], strides = [1, 1]} : vector<8x96xf32> to vector<8x32xf32>
    %422 = vector.extract_strided_slice %410 {offsets = [0, 64], sizes = [8, 32], strides = [1, 1]} : vector<8x96xf32> to vector<8x32xf32>
    %423 = arith.mulf %419, %422 : vector<8x32xf32>
    %424 = arith.addf %421, %423 : vector<8x32xf32>
    %425 = math.tanh %424 : vector<8x32xf32>
    %cst_66 = arith.constant 1.000000e+00 : f32
    %426 = vector.broadcast %cst_66 : f32 to vector<8x32xf32>
    %427 = arith.subf %426, %420 : vector<8x32xf32>
    %428 = arith.mulf %427, %425 : vector<8x32xf32>
    %429 = arith.mulf %420, %378 : vector<8x32xf32>
    %430 = arith.addf %428, %429 : vector<8x32xf32>
    %431 = arith.mulf %42, %430 : vector<8x32xf32>
    %432 = arith.subf %430, %378 : vector<8x32xf32>
    %433 = arith.mulf %42, %432 : vector<8x32xf32>
    %434 = arith.addf %378, %433 : vector<8x32xf32>
    %435 = vector.extract_strided_slice %56 {offsets = [8, 0], sizes = [8, 96], strides = [1, 1]} : vector<64x96xf32> to vector<8x96xf32>
    %436 = arith.truncf %406 : vector<8x32xf32> to vector<8x32xbf16>
    %cst_67 = arith.constant dense<0.000000e+00> : vector<8x96xf32>
    %437 = tpu.matmul %436, %60, %cst_67 {dimension_numbers = #tpu.dot_dimension_numbers<[1], [0], [0], [1], [0, 0, 1, 1], [], []>} : vector<8x32xbf16>, vector<32x96xbf16>, vector<8x96xf32> -> vector<8x96xf32>
    %438 = arith.addf %437, %68 : vector<8x96xf32>
    %439 = vector.extract_strided_slice %435 {offsets = [0, 0], sizes = [8, 64], strides = [1, 1]} : vector<8x96xf32> to vector<8x64xf32>
    %440 = vector.extract_strided_slice %438 {offsets = [0, 0], sizes = [8, 64], strides = [1, 1]} : vector<8x96xf32> to vector<8x64xf32>
    %441 = arith.addf %439, %440 : vector<8x64xf32>
    %442 = arith.negf %441 : vector<8x64xf32>
    %443 = math.exp %442 : vector<8x64xf32>
    %cst_68 = arith.constant 1.000000e+00 : f32
    %444 = vector.broadcast %cst_68 : f32 to vector<8x64xf32>
    %445 = arith.addf %444, %443 : vector<8x64xf32>
    %446 = arith.divf %444, %445 : vector<8x64xf32>
    %447 = vector.extract_strided_slice %446 {offsets = [0, 0], sizes = [8, 32], strides = [1, 1]} : vector<8x64xf32> to vector<8x32xf32>
    %448 = vector.extract_strided_slice %446 {offsets = [0, 32], sizes = [8, 32], strides = [1, 1]} : vector<8x64xf32> to vector<8x32xf32>
    %449 = vector.extract_strided_slice %435 {offsets = [0, 64], sizes = [8, 32], strides = [1, 1]} : vector<8x96xf32> to vector<8x32xf32>
    %450 = vector.extract_strided_slice %438 {offsets = [0, 64], sizes = [8, 32], strides = [1, 1]} : vector<8x96xf32> to vector<8x32xf32>
    %451 = arith.mulf %447, %450 : vector<8x32xf32>
    %452 = arith.addf %449, %451 : vector<8x32xf32>
    %453 = math.tanh %452 : vector<8x32xf32>
    %cst_69 = arith.constant 1.000000e+00 : f32
    %454 = vector.broadcast %cst_69 : f32 to vector<8x32xf32>
    %455 = arith.subf %454, %448 : vector<8x32xf32>
    %456 = arith.mulf %455, %453 : vector<8x32xf32>
    %457 = arith.mulf %448, %406 : vector<8x32xf32>
    %458 = arith.addf %456, %457 : vector<8x32xf32>
    %459 = arith.mulf %12, %458 : vector<8x32xf32>
    %460 = arith.subf %458, %406 : vector<8x32xf32>
    %461 = arith.mulf %12, %460 : vector<8x32xf32>
    %462 = arith.addf %406, %461 : vector<8x32xf32>
    %463 = vector.extract_strided_slice %55 {offsets = [56, 0], sizes = [8, 96], strides = [1, 1]} : vector<64x96xf32> to vector<8x96xf32>
    %464 = arith.truncf %434 : vector<8x32xf32> to vector<8x32xbf16>
    %cst_70 = arith.constant dense<0.000000e+00> : vector<8x96xf32>
    %465 = tpu.matmul %464, %58, %cst_70 {dimension_numbers = #tpu.dot_dimension_numbers<[1], [0], [0], [1], [0, 0, 1, 1], [], []>} : vector<8x32xbf16>, vector<32x96xbf16>, vector<8x96xf32> -> vector<8x96xf32>
    %466 = arith.addf %465, %64 : vector<8x96xf32>
    %467 = vector.extract_strided_slice %463 {offsets = [0, 0], sizes = [8, 64], strides = [1, 1]} : vector<8x96xf32> to vector<8x64xf32>
    %468 = vector.extract_strided_slice %466 {offsets = [0, 0], sizes = [8, 64], strides = [1, 1]} : vector<8x96xf32> to vector<8x64xf32>
    %469 = arith.addf %467, %468 : vector<8x64xf32>
    %470 = arith.negf %469 : vector<8x64xf32>
    %471 = math.exp %470 : vector<8x64xf32>
    %cst_71 = arith.constant 1.000000e+00 : f32
    %472 = vector.broadcast %cst_71 : f32 to vector<8x64xf32>
    %473 = arith.addf %472, %471 : vector<8x64xf32>
    %474 = arith.divf %472, %473 : vector<8x64xf32>
    %475 = vector.extract_strided_slice %474 {offsets = [0, 0], sizes = [8, 32], strides = [1, 1]} : vector<8x64xf32> to vector<8x32xf32>
    %476 = vector.extract_strided_slice %474 {offsets = [0, 32], sizes = [8, 32], strides = [1, 1]} : vector<8x64xf32> to vector<8x32xf32>
    %477 = vector.extract_strided_slice %463 {offsets = [0, 64], sizes = [8, 32], strides = [1, 1]} : vector<8x96xf32> to vector<8x32xf32>
    %478 = vector.extract_strided_slice %466 {offsets = [0, 64], sizes = [8, 32], strides = [1, 1]} : vector<8x96xf32> to vector<8x32xf32>
    %479 = arith.mulf %475, %478 : vector<8x32xf32>
    %480 = arith.addf %477, %479 : vector<8x32xf32>
    %481 = math.tanh %480 : vector<8x32xf32>
    %cst_72 = arith.constant 1.000000e+00 : f32
    %482 = vector.broadcast %cst_72 : f32 to vector<8x32xf32>
    %483 = arith.subf %482, %476 : vector<8x32xf32>
    %484 = arith.mulf %483, %481 : vector<8x32xf32>
    %485 = arith.mulf %476, %434 : vector<8x32xf32>
    %486 = arith.addf %484, %485 : vector<8x32xf32>
    %487 = arith.mulf %48, %486 : vector<8x32xf32>
    %488 = vector.extract_strided_slice %56 {offsets = [0, 0], sizes = [8, 96], strides = [1, 1]} : vector<64x96xf32> to vector<8x96xf32>
    %489 = arith.truncf %462 : vector<8x32xf32> to vector<8x32xbf16>
    %cst_73 = arith.constant dense<0.000000e+00> : vector<8x96xf32>
    %490 = tpu.matmul %489, %60, %cst_73 {dimension_numbers = #tpu.dot_dimension_numbers<[1], [0], [0], [1], [0, 0, 1, 1], [], []>} : vector<8x32xbf16>, vector<32x96xbf16>, vector<8x96xf32> -> vector<8x96xf32>
    %491 = arith.addf %490, %68 : vector<8x96xf32>
    %492 = vector.extract_strided_slice %488 {offsets = [0, 0], sizes = [8, 64], strides = [1, 1]} : vector<8x96xf32> to vector<8x64xf32>
    %493 = vector.extract_strided_slice %491 {offsets = [0, 0], sizes = [8, 64], strides = [1, 1]} : vector<8x96xf32> to vector<8x64xf32>
    %494 = arith.addf %492, %493 : vector<8x64xf32>
    %495 = arith.negf %494 : vector<8x64xf32>
    %496 = math.exp %495 : vector<8x64xf32>
    %cst_74 = arith.constant 1.000000e+00 : f32
    %497 = vector.broadcast %cst_74 : f32 to vector<8x64xf32>
    %498 = arith.addf %497, %496 : vector<8x64xf32>
    %499 = arith.divf %497, %498 : vector<8x64xf32>
    %500 = vector.extract_strided_slice %499 {offsets = [0, 0], sizes = [8, 32], strides = [1, 1]} : vector<8x64xf32> to vector<8x32xf32>
    %501 = vector.extract_strided_slice %499 {offsets = [0, 32], sizes = [8, 32], strides = [1, 1]} : vector<8x64xf32> to vector<8x32xf32>
    %502 = vector.extract_strided_slice %488 {offsets = [0, 64], sizes = [8, 32], strides = [1, 1]} : vector<8x96xf32> to vector<8x32xf32>
    %503 = vector.extract_strided_slice %491 {offsets = [0, 64], sizes = [8, 32], strides = [1, 1]} : vector<8x96xf32> to vector<8x32xf32>
    %504 = arith.mulf %500, %503 : vector<8x32xf32>
    %505 = arith.addf %502, %504 : vector<8x32xf32>
    %506 = math.tanh %505 : vector<8x32xf32>
    %cst_75 = arith.constant 1.000000e+00 : f32
    %507 = vector.broadcast %cst_75 : f32 to vector<8x32xf32>
    %508 = arith.subf %507, %501 : vector<8x32xf32>
    %509 = arith.mulf %508, %506 : vector<8x32xf32>
    %510 = arith.mulf %501, %462 : vector<8x32xf32>
    %511 = arith.addf %509, %510 : vector<8x32xf32>
    %512 = arith.mulf %6, %511 : vector<8x32xf32>
    %513 = tpu.concatenate %95, %151, %207, %263, %319, %375, %431, %487 in 0 : vector<8x32xf32>, vector<8x32xf32>, vector<8x32xf32>, vector<8x32xf32>, vector<8x32xf32>, vector<8x32xf32>, vector<8x32xf32>, vector<8x32xf32> -> vector<64x32xf32>
    %514 = tpu.concatenate %512, %459, %403, %347, %291, %235, %179, %123 in 0 : vector<8x32xf32>, vector<8x32xf32>, vector<8x32xf32>, vector<8x32xf32>, vector<8x32xf32>, vector<8x32xf32>, vector<8x32xf32>, vector<8x32xf32> -> vector<64x32xf32>
    %515 = arith.truncf %513 : vector<64x32xf32> to vector<64x32xbf16>
    %c0_76 = arith.constant 0 : index
    %c0_77 = arith.constant 0 : index
    %516 = vector.load %arg6[%c0_76, %c0_77] : memref<32x256xbf16, #tpu.memory_space<vmem>>, vector<32x256xbf16>
    %cst_78 = arith.constant dense<0.000000e+00> : vector<64x256xf32>
    %517 = tpu.matmul %515, %516, %cst_78 {dimension_numbers = #tpu.dot_dimension_numbers<[1], [0], [0], [1], [0, 0, 1, 1], [], []>} : vector<64x32xbf16>, vector<32x256xbf16>, vector<64x256xf32> -> vector<64x256xf32>
    %518 = arith.truncf %514 : vector<64x32xf32> to vector<64x32xbf16>
    %c0_79 = arith.constant 0 : index
    %c0_80 = arith.constant 0 : index
    %519 = vector.load %arg7[%c0_79, %c0_80] : memref<32x256xbf16, #tpu.memory_space<vmem>>, vector<32x256xbf16>
    %cst_81 = arith.constant dense<0.000000e+00> : vector<64x256xf32>
    %520 = tpu.matmul %518, %519, %cst_81 {dimension_numbers = #tpu.dot_dimension_numbers<[1], [0], [0], [1], [0, 0, 1, 1], [], []>} : vector<64x32xbf16>, vector<32x256xbf16>, vector<64x256xf32> -> vector<64x256xf32>
    %521 = arith.addf %517, %520 : vector<64x256xf32>
    %c0_82 = arith.constant 0 : index
    %c0_83 = arith.constant 0 : index
    %522 = vector.load %arg8[%c0_82, %c0_83] : memref<1x256xf32, #tpu.memory_space<vmem>>, vector<1x256xf32>
    %523 = vector.broadcast %522 : vector<1x256xf32> to vector<64x256xf32>
    %524 = arith.addf %521, %523 : vector<64x256xf32>
    %525 = vector.extract_strided_slice %524 {offsets = [0, 0], sizes = [64, 96], strides = [1, 1]} : vector<64x256xf32> to vector<64x96xf32>
    %526 = vector.extract_strided_slice %524 {offsets = [0, 128], sizes = [64, 96], strides = [1, 1]} : vector<64x256xf32> to vector<64x96xf32>
    %c0_84 = arith.constant 0 : index
    %c0_85 = arith.constant 0 : index
    %c0_86 = arith.constant 0 : index
    %527 = vector.load %arg9[%c0_84, %c0_85, %c0_86] : memref<2x32x96xbf16, #tpu.memory_space<vmem>>, vector<1x32x96xbf16>
    %528 = vector.shape_cast %527 : vector<1x32x96xbf16> to vector<32x96xbf16>
    %c1_87 = arith.constant 1 : index
    %c0_88 = arith.constant 0 : index
    %c0_89 = arith.constant 0 : index
    %529 = vector.load %arg9[%c1_87, %c0_88, %c0_89] : memref<2x32x96xbf16, #tpu.memory_space<vmem>>, vector<1x32x96xbf16>
    %530 = vector.shape_cast %529 : vector<1x32x96xbf16> to vector<32x96xbf16>
    %c0_90 = arith.constant 0 : index
    %c0_91 = arith.constant 0 : index
    %c0_92 = arith.constant 0 : index
    %531 = vector.load %arg10[%c0_90, %c0_91, %c0_92] : memref<2x1x96xf32, #tpu.memory_space<vmem>>, vector<1x1x96xf32>
    %532 = vector.shape_cast %531 : vector<1x1x96xf32> to vector<1x96xf32>
    %533 = vector.shape_cast %532 : vector<1x96xf32> to vector<1x96xf32>
    %534 = vector.broadcast %533 : vector<1x96xf32> to vector<8x96xf32>
    %c1_93 = arith.constant 1 : index
    %c0_94 = arith.constant 0 : index
    %c0_95 = arith.constant 0 : index
    %535 = vector.load %arg10[%c1_93, %c0_94, %c0_95] : memref<2x1x96xf32, #tpu.memory_space<vmem>>, vector<1x1x96xf32>
    %536 = vector.shape_cast %535 : vector<1x1x96xf32> to vector<1x96xf32>
    %537 = vector.shape_cast %536 : vector<1x96xf32> to vector<1x96xf32>
    %538 = vector.broadcast %537 : vector<1x96xf32> to vector<8x96xf32>
    %cst_96 = arith.constant 0.000000e+00 : f32
    %539 = vector.broadcast %cst_96 : f32 to vector<8x32xf32>
    %cst_97 = arith.constant 0.000000e+00 : f32
    %540 = vector.broadcast %cst_97 : f32 to vector<8x32xf32>
    %541 = vector.extract_strided_slice %525 {offsets = [0, 0], sizes = [8, 96], strides = [1, 1]} : vector<64x96xf32> to vector<8x96xf32>
    %542 = arith.truncf %539 : vector<8x32xf32> to vector<8x32xbf16>
    %cst_98 = arith.constant dense<0.000000e+00> : vector<8x96xf32>
    %543 = tpu.matmul %542, %528, %cst_98 {dimension_numbers = #tpu.dot_dimension_numbers<[1], [0], [0], [1], [0, 0, 1, 1], [], []>} : vector<8x32xbf16>, vector<32x96xbf16>, vector<8x96xf32> -> vector<8x96xf32>
    %544 = arith.addf %543, %534 : vector<8x96xf32>
    %545 = vector.extract_strided_slice %541 {offsets = [0, 0], sizes = [8, 64], strides = [1, 1]} : vector<8x96xf32> to vector<8x64xf32>
    %546 = vector.extract_strided_slice %544 {offsets = [0, 0], sizes = [8, 64], strides = [1, 1]} : vector<8x96xf32> to vector<8x64xf32>
    %547 = arith.addf %545, %546 : vector<8x64xf32>
    %548 = arith.negf %547 : vector<8x64xf32>
    %549 = math.exp %548 : vector<8x64xf32>
    %cst_99 = arith.constant 1.000000e+00 : f32
    %550 = vector.broadcast %cst_99 : f32 to vector<8x64xf32>
    %551 = arith.addf %550, %549 : vector<8x64xf32>
    %552 = arith.divf %550, %551 : vector<8x64xf32>
    %553 = vector.extract_strided_slice %552 {offsets = [0, 0], sizes = [8, 32], strides = [1, 1]} : vector<8x64xf32> to vector<8x32xf32>
    %554 = vector.extract_strided_slice %552 {offsets = [0, 32], sizes = [8, 32], strides = [1, 1]} : vector<8x64xf32> to vector<8x32xf32>
    %555 = vector.extract_strided_slice %541 {offsets = [0, 64], sizes = [8, 32], strides = [1, 1]} : vector<8x96xf32> to vector<8x32xf32>
    %556 = vector.extract_strided_slice %544 {offsets = [0, 64], sizes = [8, 32], strides = [1, 1]} : vector<8x96xf32> to vector<8x32xf32>
    %557 = arith.mulf %553, %556 : vector<8x32xf32>
    %558 = arith.addf %555, %557 : vector<8x32xf32>
    %559 = math.tanh %558 : vector<8x32xf32>
    %cst_100 = arith.constant 1.000000e+00 : f32
    %560 = vector.broadcast %cst_100 : f32 to vector<8x32xf32>
    %561 = arith.subf %560, %554 : vector<8x32xf32>
    %562 = arith.mulf %561, %559 : vector<8x32xf32>
    %563 = arith.mulf %554, %539 : vector<8x32xf32>
    %564 = arith.addf %562, %563 : vector<8x32xf32>
    %565 = arith.mulf %6, %564 : vector<8x32xf32>
    %566 = arith.subf %564, %539 : vector<8x32xf32>
    %567 = arith.mulf %6, %566 : vector<8x32xf32>
    %568 = arith.addf %539, %567 : vector<8x32xf32>
    %569 = vector.extract_strided_slice %526 {offsets = [56, 0], sizes = [8, 96], strides = [1, 1]} : vector<64x96xf32> to vector<8x96xf32>
    %570 = arith.truncf %540 : vector<8x32xf32> to vector<8x32xbf16>
    %cst_101 = arith.constant dense<0.000000e+00> : vector<8x96xf32>
    %571 = tpu.matmul %570, %530, %cst_101 {dimension_numbers = #tpu.dot_dimension_numbers<[1], [0], [0], [1], [0, 0, 1, 1], [], []>} : vector<8x32xbf16>, vector<32x96xbf16>, vector<8x96xf32> -> vector<8x96xf32>
    %572 = arith.addf %571, %538 : vector<8x96xf32>
    %573 = vector.extract_strided_slice %569 {offsets = [0, 0], sizes = [8, 64], strides = [1, 1]} : vector<8x96xf32> to vector<8x64xf32>
    %574 = vector.extract_strided_slice %572 {offsets = [0, 0], sizes = [8, 64], strides = [1, 1]} : vector<8x96xf32> to vector<8x64xf32>
    %575 = arith.addf %573, %574 : vector<8x64xf32>
    %576 = arith.negf %575 : vector<8x64xf32>
    %577 = math.exp %576 : vector<8x64xf32>
    %cst_102 = arith.constant 1.000000e+00 : f32
    %578 = vector.broadcast %cst_102 : f32 to vector<8x64xf32>
    %579 = arith.addf %578, %577 : vector<8x64xf32>
    %580 = arith.divf %578, %579 : vector<8x64xf32>
    %581 = vector.extract_strided_slice %580 {offsets = [0, 0], sizes = [8, 32], strides = [1, 1]} : vector<8x64xf32> to vector<8x32xf32>
    %582 = vector.extract_strided_slice %580 {offsets = [0, 32], sizes = [8, 32], strides = [1, 1]} : vector<8x64xf32> to vector<8x32xf32>
    %583 = vector.extract_strided_slice %569 {offsets = [0, 64], sizes = [8, 32], strides = [1, 1]} : vector<8x96xf32> to vector<8x32xf32>
    %584 = vector.extract_strided_slice %572 {offsets = [0, 64], sizes = [8, 32], strides = [1, 1]} : vector<8x96xf32> to vector<8x32xf32>
    %585 = arith.mulf %581, %584 : vector<8x32xf32>
    %586 = arith.addf %583, %585 : vector<8x32xf32>
    %587 = math.tanh %586 : vector<8x32xf32>
    %cst_103 = arith.constant 1.000000e+00 : f32
    %588 = vector.broadcast %cst_103 : f32 to vector<8x32xf32>
    %589 = arith.subf %588, %582 : vector<8x32xf32>
    %590 = arith.mulf %589, %587 : vector<8x32xf32>
    %591 = arith.mulf %582, %540 : vector<8x32xf32>
    %592 = arith.addf %590, %591 : vector<8x32xf32>
    %593 = arith.mulf %48, %592 : vector<8x32xf32>
    %594 = arith.subf %592, %540 : vector<8x32xf32>
    %595 = arith.mulf %48, %594 : vector<8x32xf32>
    %596 = arith.addf %540, %595 : vector<8x32xf32>
    %597 = vector.extract_strided_slice %525 {offsets = [8, 0], sizes = [8, 96], strides = [1, 1]} : vector<64x96xf32> to vector<8x96xf32>
    %598 = arith.truncf %568 : vector<8x32xf32> to vector<8x32xbf16>
    %cst_104 = arith.constant dense<0.000000e+00> : vector<8x96xf32>
    %599 = tpu.matmul %598, %528, %cst_104 {dimension_numbers = #tpu.dot_dimension_numbers<[1], [0], [0], [1], [0, 0, 1, 1], [], []>} : vector<8x32xbf16>, vector<32x96xbf16>, vector<8x96xf32> -> vector<8x96xf32>
    %600 = arith.addf %599, %534 : vector<8x96xf32>
    %601 = vector.extract_strided_slice %597 {offsets = [0, 0], sizes = [8, 64], strides = [1, 1]} : vector<8x96xf32> to vector<8x64xf32>
    %602 = vector.extract_strided_slice %600 {offsets = [0, 0], sizes = [8, 64], strides = [1, 1]} : vector<8x96xf32> to vector<8x64xf32>
    %603 = arith.addf %601, %602 : vector<8x64xf32>
    %604 = arith.negf %603 : vector<8x64xf32>
    %605 = math.exp %604 : vector<8x64xf32>
    %cst_105 = arith.constant 1.000000e+00 : f32
    %606 = vector.broadcast %cst_105 : f32 to vector<8x64xf32>
    %607 = arith.addf %606, %605 : vector<8x64xf32>
    %608 = arith.divf %606, %607 : vector<8x64xf32>
    %609 = vector.extract_strided_slice %608 {offsets = [0, 0], sizes = [8, 32], strides = [1, 1]} : vector<8x64xf32> to vector<8x32xf32>
    %610 = vector.extract_strided_slice %608 {offsets = [0, 32], sizes = [8, 32], strides = [1, 1]} : vector<8x64xf32> to vector<8x32xf32>
    %611 = vector.extract_strided_slice %597 {offsets = [0, 64], sizes = [8, 32], strides = [1, 1]} : vector<8x96xf32> to vector<8x32xf32>
    %612 = vector.extract_strided_slice %600 {offsets = [0, 64], sizes = [8, 32], strides = [1, 1]} : vector<8x96xf32> to vector<8x32xf32>
    %613 = arith.mulf %609, %612 : vector<8x32xf32>
    %614 = arith.addf %611, %613 : vector<8x32xf32>
    %615 = math.tanh %614 : vector<8x32xf32>
    %cst_106 = arith.constant 1.000000e+00 : f32
    %616 = vector.broadcast %cst_106 : f32 to vector<8x32xf32>
    %617 = arith.subf %616, %610 : vector<8x32xf32>
    %618 = arith.mulf %617, %615 : vector<8x32xf32>
    %619 = arith.mulf %610, %568 : vector<8x32xf32>
    %620 = arith.addf %618, %619 : vector<8x32xf32>
    %621 = arith.mulf %12, %620 : vector<8x32xf32>
    %622 = arith.subf %620, %568 : vector<8x32xf32>
    %623 = arith.mulf %12, %622 : vector<8x32xf32>
    %624 = arith.addf %568, %623 : vector<8x32xf32>
    %625 = vector.extract_strided_slice %526 {offsets = [48, 0], sizes = [8, 96], strides = [1, 1]} : vector<64x96xf32> to vector<8x96xf32>
    %626 = arith.truncf %596 : vector<8x32xf32> to vector<8x32xbf16>
    %cst_107 = arith.constant dense<0.000000e+00> : vector<8x96xf32>
    %627 = tpu.matmul %626, %530, %cst_107 {dimension_numbers = #tpu.dot_dimension_numbers<[1], [0], [0], [1], [0, 0, 1, 1], [], []>} : vector<8x32xbf16>, vector<32x96xbf16>, vector<8x96xf32> -> vector<8x96xf32>
    %628 = arith.addf %627, %538 : vector<8x96xf32>
    %629 = vector.extract_strided_slice %625 {offsets = [0, 0], sizes = [8, 64], strides = [1, 1]} : vector<8x96xf32> to vector<8x64xf32>
    %630 = vector.extract_strided_slice %628 {offsets = [0, 0], sizes = [8, 64], strides = [1, 1]} : vector<8x96xf32> to vector<8x64xf32>
    %631 = arith.addf %629, %630 : vector<8x64xf32>
    %632 = arith.negf %631 : vector<8x64xf32>
    %633 = math.exp %632 : vector<8x64xf32>
    %cst_108 = arith.constant 1.000000e+00 : f32
    %634 = vector.broadcast %cst_108 : f32 to vector<8x64xf32>
    %635 = arith.addf %634, %633 : vector<8x64xf32>
    %636 = arith.divf %634, %635 : vector<8x64xf32>
    %637 = vector.extract_strided_slice %636 {offsets = [0, 0], sizes = [8, 32], strides = [1, 1]} : vector<8x64xf32> to vector<8x32xf32>
    %638 = vector.extract_strided_slice %636 {offsets = [0, 32], sizes = [8, 32], strides = [1, 1]} : vector<8x64xf32> to vector<8x32xf32>
    %639 = vector.extract_strided_slice %625 {offsets = [0, 64], sizes = [8, 32], strides = [1, 1]} : vector<8x96xf32> to vector<8x32xf32>
    %640 = vector.extract_strided_slice %628 {offsets = [0, 64], sizes = [8, 32], strides = [1, 1]} : vector<8x96xf32> to vector<8x32xf32>
    %641 = arith.mulf %637, %640 : vector<8x32xf32>
    %642 = arith.addf %639, %641 : vector<8x32xf32>
    %643 = math.tanh %642 : vector<8x32xf32>
    %cst_109 = arith.constant 1.000000e+00 : f32
    %644 = vector.broadcast %cst_109 : f32 to vector<8x32xf32>
    %645 = arith.subf %644, %638 : vector<8x32xf32>
    %646 = arith.mulf %645, %643 : vector<8x32xf32>
    %647 = arith.mulf %638, %596 : vector<8x32xf32>
    %648 = arith.addf %646, %647 : vector<8x32xf32>
    %649 = arith.mulf %42, %648 : vector<8x32xf32>
    %650 = arith.subf %648, %596 : vector<8x32xf32>
    %651 = arith.mulf %42, %650 : vector<8x32xf32>
    %652 = arith.addf %596, %651 : vector<8x32xf32>
    %653 = vector.extract_strided_slice %525 {offsets = [16, 0], sizes = [8, 96], strides = [1, 1]} : vector<64x96xf32> to vector<8x96xf32>
    %654 = arith.truncf %624 : vector<8x32xf32> to vector<8x32xbf16>
    %cst_110 = arith.constant dense<0.000000e+00> : vector<8x96xf32>
    %655 = tpu.matmul %654, %528, %cst_110 {dimension_numbers = #tpu.dot_dimension_numbers<[1], [0], [0], [1], [0, 0, 1, 1], [], []>} : vector<8x32xbf16>, vector<32x96xbf16>, vector<8x96xf32> -> vector<8x96xf32>
    %656 = arith.addf %655, %534 : vector<8x96xf32>
    %657 = vector.extract_strided_slice %653 {offsets = [0, 0], sizes = [8, 64], strides = [1, 1]} : vector<8x96xf32> to vector<8x64xf32>
    %658 = vector.extract_strided_slice %656 {offsets = [0, 0], sizes = [8, 64], strides = [1, 1]} : vector<8x96xf32> to vector<8x64xf32>
    %659 = arith.addf %657, %658 : vector<8x64xf32>
    %660 = arith.negf %659 : vector<8x64xf32>
    %661 = math.exp %660 : vector<8x64xf32>
    %cst_111 = arith.constant 1.000000e+00 : f32
    %662 = vector.broadcast %cst_111 : f32 to vector<8x64xf32>
    %663 = arith.addf %662, %661 : vector<8x64xf32>
    %664 = arith.divf %662, %663 : vector<8x64xf32>
    %665 = vector.extract_strided_slice %664 {offsets = [0, 0], sizes = [8, 32], strides = [1, 1]} : vector<8x64xf32> to vector<8x32xf32>
    %666 = vector.extract_strided_slice %664 {offsets = [0, 32], sizes = [8, 32], strides = [1, 1]} : vector<8x64xf32> to vector<8x32xf32>
    %667 = vector.extract_strided_slice %653 {offsets = [0, 64], sizes = [8, 32], strides = [1, 1]} : vector<8x96xf32> to vector<8x32xf32>
    %668 = vector.extract_strided_slice %656 {offsets = [0, 64], sizes = [8, 32], strides = [1, 1]} : vector<8x96xf32> to vector<8x32xf32>
    %669 = arith.mulf %665, %668 : vector<8x32xf32>
    %670 = arith.addf %667, %669 : vector<8x32xf32>
    %671 = math.tanh %670 : vector<8x32xf32>
    %cst_112 = arith.constant 1.000000e+00 : f32
    %672 = vector.broadcast %cst_112 : f32 to vector<8x32xf32>
    %673 = arith.subf %672, %666 : vector<8x32xf32>
    %674 = arith.mulf %673, %671 : vector<8x32xf32>
    %675 = arith.mulf %666, %624 : vector<8x32xf32>
    %676 = arith.addf %674, %675 : vector<8x32xf32>
    %677 = arith.mulf %18, %676 : vector<8x32xf32>
    %678 = arith.subf %676, %624 : vector<8x32xf32>
    %679 = arith.mulf %18, %678 : vector<8x32xf32>
    %680 = arith.addf %624, %679 : vector<8x32xf32>
    %681 = vector.extract_strided_slice %526 {offsets = [40, 0], sizes = [8, 96], strides = [1, 1]} : vector<64x96xf32> to vector<8x96xf32>
    %682 = arith.truncf %652 : vector<8x32xf32> to vector<8x32xbf16>
    %cst_113 = arith.constant dense<0.000000e+00> : vector<8x96xf32>
    %683 = tpu.matmul %682, %530, %cst_113 {dimension_numbers = #tpu.dot_dimension_numbers<[1], [0], [0], [1], [0, 0, 1, 1], [], []>} : vector<8x32xbf16>, vector<32x96xbf16>, vector<8x96xf32> -> vector<8x96xf32>
    %684 = arith.addf %683, %538 : vector<8x96xf32>
    %685 = vector.extract_strided_slice %681 {offsets = [0, 0], sizes = [8, 64], strides = [1, 1]} : vector<8x96xf32> to vector<8x64xf32>
    %686 = vector.extract_strided_slice %684 {offsets = [0, 0], sizes = [8, 64], strides = [1, 1]} : vector<8x96xf32> to vector<8x64xf32>
    %687 = arith.addf %685, %686 : vector<8x64xf32>
    %688 = arith.negf %687 : vector<8x64xf32>
    %689 = math.exp %688 : vector<8x64xf32>
    %cst_114 = arith.constant 1.000000e+00 : f32
    %690 = vector.broadcast %cst_114 : f32 to vector<8x64xf32>
    %691 = arith.addf %690, %689 : vector<8x64xf32>
    %692 = arith.divf %690, %691 : vector<8x64xf32>
    %693 = vector.extract_strided_slice %692 {offsets = [0, 0], sizes = [8, 32], strides = [1, 1]} : vector<8x64xf32> to vector<8x32xf32>
    %694 = vector.extract_strided_slice %692 {offsets = [0, 32], sizes = [8, 32], strides = [1, 1]} : vector<8x64xf32> to vector<8x32xf32>
    %695 = vector.extract_strided_slice %681 {offsets = [0, 64], sizes = [8, 32], strides = [1, 1]} : vector<8x96xf32> to vector<8x32xf32>
    %696 = vector.extract_strided_slice %684 {offsets = [0, 64], sizes = [8, 32], strides = [1, 1]} : vector<8x96xf32> to vector<8x32xf32>
    %697 = arith.mulf %693, %696 : vector<8x32xf32>
    %698 = arith.addf %695, %697 : vector<8x32xf32>
    %699 = math.tanh %698 : vector<8x32xf32>
    %cst_115 = arith.constant 1.000000e+00 : f32
    %700 = vector.broadcast %cst_115 : f32 to vector<8x32xf32>
    %701 = arith.subf %700, %694 : vector<8x32xf32>
    %702 = arith.mulf %701, %699 : vector<8x32xf32>
    %703 = arith.mulf %694, %652 : vector<8x32xf32>
    %704 = arith.addf %702, %703 : vector<8x32xf32>
    %705 = arith.mulf %36, %704 : vector<8x32xf32>
    %706 = arith.subf %704, %652 : vector<8x32xf32>
    %707 = arith.mulf %36, %706 : vector<8x32xf32>
    %708 = arith.addf %652, %707 : vector<8x32xf32>
    %709 = vector.extract_strided_slice %525 {offsets = [24, 0], sizes = [8, 96], strides = [1, 1]} : vector<64x96xf32> to vector<8x96xf32>
    %710 = arith.truncf %680 : vector<8x32xf32> to vector<8x32xbf16>
    %cst_116 = arith.constant dense<0.000000e+00> : vector<8x96xf32>
    %711 = tpu.matmul %710, %528, %cst_116 {dimension_numbers = #tpu.dot_dimension_numbers<[1], [0], [0], [1], [0, 0, 1, 1], [], []>} : vector<8x32xbf16>, vector<32x96xbf16>, vector<8x96xf32> -> vector<8x96xf32>
    %712 = arith.addf %711, %534 : vector<8x96xf32>
    %713 = vector.extract_strided_slice %709 {offsets = [0, 0], sizes = [8, 64], strides = [1, 1]} : vector<8x96xf32> to vector<8x64xf32>
    %714 = vector.extract_strided_slice %712 {offsets = [0, 0], sizes = [8, 64], strides = [1, 1]} : vector<8x96xf32> to vector<8x64xf32>
    %715 = arith.addf %713, %714 : vector<8x64xf32>
    %716 = arith.negf %715 : vector<8x64xf32>
    %717 = math.exp %716 : vector<8x64xf32>
    %cst_117 = arith.constant 1.000000e+00 : f32
    %718 = vector.broadcast %cst_117 : f32 to vector<8x64xf32>
    %719 = arith.addf %718, %717 : vector<8x64xf32>
    %720 = arith.divf %718, %719 : vector<8x64xf32>
    %721 = vector.extract_strided_slice %720 {offsets = [0, 0], sizes = [8, 32], strides = [1, 1]} : vector<8x64xf32> to vector<8x32xf32>
    %722 = vector.extract_strided_slice %720 {offsets = [0, 32], sizes = [8, 32], strides = [1, 1]} : vector<8x64xf32> to vector<8x32xf32>
    %723 = vector.extract_strided_slice %709 {offsets = [0, 64], sizes = [8, 32], strides = [1, 1]} : vector<8x96xf32> to vector<8x32xf32>
    %724 = vector.extract_strided_slice %712 {offsets = [0, 64], sizes = [8, 32], strides = [1, 1]} : vector<8x96xf32> to vector<8x32xf32>
    %725 = arith.mulf %721, %724 : vector<8x32xf32>
    %726 = arith.addf %723, %725 : vector<8x32xf32>
    %727 = math.tanh %726 : vector<8x32xf32>
    %cst_118 = arith.constant 1.000000e+00 : f32
    %728 = vector.broadcast %cst_118 : f32 to vector<8x32xf32>
    %729 = arith.subf %728, %722 : vector<8x32xf32>
    %730 = arith.mulf %729, %727 : vector<8x32xf32>
    %731 = arith.mulf %722, %680 : vector<8x32xf32>
    %732 = arith.addf %730, %731 : vector<8x32xf32>
    %733 = arith.mulf %24, %732 : vector<8x32xf32>
    %734 = arith.subf %732, %680 : vector<8x32xf32>
    %735 = arith.mulf %24, %734 : vector<8x32xf32>
    %736 = arith.addf %680, %735 : vector<8x32xf32>
    %737 = vector.extract_strided_slice %526 {offsets = [32, 0], sizes = [8, 96], strides = [1, 1]} : vector<64x96xf32> to vector<8x96xf32>
    %738 = arith.truncf %708 : vector<8x32xf32> to vector<8x32xbf16>
    %cst_119 = arith.constant dense<0.000000e+00> : vector<8x96xf32>
    %739 = tpu.matmul %738, %530, %cst_119 {dimension_numbers = #tpu.dot_dimension_numbers<[1], [0], [0], [1], [0, 0, 1, 1], [], []>} : vector<8x32xbf16>, vector<32x96xbf16>, vector<8x96xf32> -> vector<8x96xf32>
    %740 = arith.addf %739, %538 : vector<8x96xf32>
    %741 = vector.extract_strided_slice %737 {offsets = [0, 0], sizes = [8, 64], strides = [1, 1]} : vector<8x96xf32> to vector<8x64xf32>
    %742 = vector.extract_strided_slice %740 {offsets = [0, 0], sizes = [8, 64], strides = [1, 1]} : vector<8x96xf32> to vector<8x64xf32>
    %743 = arith.addf %741, %742 : vector<8x64xf32>
    %744 = arith.negf %743 : vector<8x64xf32>
    %745 = math.exp %744 : vector<8x64xf32>
    %cst_120 = arith.constant 1.000000e+00 : f32
    %746 = vector.broadcast %cst_120 : f32 to vector<8x64xf32>
    %747 = arith.addf %746, %745 : vector<8x64xf32>
    %748 = arith.divf %746, %747 : vector<8x64xf32>
    %749 = vector.extract_strided_slice %748 {offsets = [0, 0], sizes = [8, 32], strides = [1, 1]} : vector<8x64xf32> to vector<8x32xf32>
    %750 = vector.extract_strided_slice %748 {offsets = [0, 32], sizes = [8, 32], strides = [1, 1]} : vector<8x64xf32> to vector<8x32xf32>
    %751 = vector.extract_strided_slice %737 {offsets = [0, 64], sizes = [8, 32], strides = [1, 1]} : vector<8x96xf32> to vector<8x32xf32>
    %752 = vector.extract_strided_slice %740 {offsets = [0, 64], sizes = [8, 32], strides = [1, 1]} : vector<8x96xf32> to vector<8x32xf32>
    %753 = arith.mulf %749, %752 : vector<8x32xf32>
    %754 = arith.addf %751, %753 : vector<8x32xf32>
    %755 = math.tanh %754 : vector<8x32xf32>
    %cst_121 = arith.constant 1.000000e+00 : f32
    %756 = vector.broadcast %cst_121 : f32 to vector<8x32xf32>
    %757 = arith.subf %756, %750 : vector<8x32xf32>
    %758 = arith.mulf %757, %755 : vector<8x32xf32>
    %759 = arith.mulf %750, %708 : vector<8x32xf32>
    %760 = arith.addf %758, %759 : vector<8x32xf32>
    %761 = arith.mulf %30, %760 : vector<8x32xf32>
    %762 = arith.subf %760, %708 : vector<8x32xf32>
    %763 = arith.mulf %30, %762 : vector<8x32xf32>
    %764 = arith.addf %708, %763 : vector<8x32xf32>
    %765 = vector.extract_strided_slice %525 {offsets = [32, 0], sizes = [8, 96], strides = [1, 1]} : vector<64x96xf32> to vector<8x96xf32>
    %766 = arith.truncf %736 : vector<8x32xf32> to vector<8x32xbf16>
    %cst_122 = arith.constant dense<0.000000e+00> : vector<8x96xf32>
    %767 = tpu.matmul %766, %528, %cst_122 {dimension_numbers = #tpu.dot_dimension_numbers<[1], [0], [0], [1], [0, 0, 1, 1], [], []>} : vector<8x32xbf16>, vector<32x96xbf16>, vector<8x96xf32> -> vector<8x96xf32>
    %768 = arith.addf %767, %534 : vector<8x96xf32>
    %769 = vector.extract_strided_slice %765 {offsets = [0, 0], sizes = [8, 64], strides = [1, 1]} : vector<8x96xf32> to vector<8x64xf32>
    %770 = vector.extract_strided_slice %768 {offsets = [0, 0], sizes = [8, 64], strides = [1, 1]} : vector<8x96xf32> to vector<8x64xf32>
    %771 = arith.addf %769, %770 : vector<8x64xf32>
    %772 = arith.negf %771 : vector<8x64xf32>
    %773 = math.exp %772 : vector<8x64xf32>
    %cst_123 = arith.constant 1.000000e+00 : f32
    %774 = vector.broadcast %cst_123 : f32 to vector<8x64xf32>
    %775 = arith.addf %774, %773 : vector<8x64xf32>
    %776 = arith.divf %774, %775 : vector<8x64xf32>
    %777 = vector.extract_strided_slice %776 {offsets = [0, 0], sizes = [8, 32], strides = [1, 1]} : vector<8x64xf32> to vector<8x32xf32>
    %778 = vector.extract_strided_slice %776 {offsets = [0, 32], sizes = [8, 32], strides = [1, 1]} : vector<8x64xf32> to vector<8x32xf32>
    %779 = vector.extract_strided_slice %765 {offsets = [0, 64], sizes = [8, 32], strides = [1, 1]} : vector<8x96xf32> to vector<8x32xf32>
    %780 = vector.extract_strided_slice %768 {offsets = [0, 64], sizes = [8, 32], strides = [1, 1]} : vector<8x96xf32> to vector<8x32xf32>
    %781 = arith.mulf %777, %780 : vector<8x32xf32>
    %782 = arith.addf %779, %781 : vector<8x32xf32>
    %783 = math.tanh %782 : vector<8x32xf32>
    %cst_124 = arith.constant 1.000000e+00 : f32
    %784 = vector.broadcast %cst_124 : f32 to vector<8x32xf32>
    %785 = arith.subf %784, %778 : vector<8x32xf32>
    %786 = arith.mulf %785, %783 : vector<8x32xf32>
    %787 = arith.mulf %778, %736 : vector<8x32xf32>
    %788 = arith.addf %786, %787 : vector<8x32xf32>
    %789 = arith.mulf %30, %788 : vector<8x32xf32>
    %790 = arith.subf %788, %736 : vector<8x32xf32>
    %791 = arith.mulf %30, %790 : vector<8x32xf32>
    %792 = arith.addf %736, %791 : vector<8x32xf32>
    %793 = vector.extract_strided_slice %526 {offsets = [24, 0], sizes = [8, 96], strides = [1, 1]} : vector<64x96xf32> to vector<8x96xf32>
    %794 = arith.truncf %764 : vector<8x32xf32> to vector<8x32xbf16>
    %cst_125 = arith.constant dense<0.000000e+00> : vector<8x96xf32>
    %795 = tpu.matmul %794, %530, %cst_125 {dimension_numbers = #tpu.dot_dimension_numbers<[1], [0], [0], [1], [0, 0, 1, 1], [], []>} : vector<8x32xbf16>, vector<32x96xbf16>, vector<8x96xf32> -> vector<8x96xf32>
    %796 = arith.addf %795, %538 : vector<8x96xf32>
    %797 = vector.extract_strided_slice %793 {offsets = [0, 0], sizes = [8, 64], strides = [1, 1]} : vector<8x96xf32> to vector<8x64xf32>
    %798 = vector.extract_strided_slice %796 {offsets = [0, 0], sizes = [8, 64], strides = [1, 1]} : vector<8x96xf32> to vector<8x64xf32>
    %799 = arith.addf %797, %798 : vector<8x64xf32>
    %800 = arith.negf %799 : vector<8x64xf32>
    %801 = math.exp %800 : vector<8x64xf32>
    %cst_126 = arith.constant 1.000000e+00 : f32
    %802 = vector.broadcast %cst_126 : f32 to vector<8x64xf32>
    %803 = arith.addf %802, %801 : vector<8x64xf32>
    %804 = arith.divf %802, %803 : vector<8x64xf32>
    %805 = vector.extract_strided_slice %804 {offsets = [0, 0], sizes = [8, 32], strides = [1, 1]} : vector<8x64xf32> to vector<8x32xf32>
    %806 = vector.extract_strided_slice %804 {offsets = [0, 32], sizes = [8, 32], strides = [1, 1]} : vector<8x64xf32> to vector<8x32xf32>
    %807 = vector.extract_strided_slice %793 {offsets = [0, 64], sizes = [8, 32], strides = [1, 1]} : vector<8x96xf32> to vector<8x32xf32>
    %808 = vector.extract_strided_slice %796 {offsets = [0, 64], sizes = [8, 32], strides = [1, 1]} : vector<8x96xf32> to vector<8x32xf32>
    %809 = arith.mulf %805, %808 : vector<8x32xf32>
    %810 = arith.addf %807, %809 : vector<8x32xf32>
    %811 = math.tanh %810 : vector<8x32xf32>
    %cst_127 = arith.constant 1.000000e+00 : f32
    %812 = vector.broadcast %cst_127 : f32 to vector<8x32xf32>
    %813 = arith.subf %812, %806 : vector<8x32xf32>
    %814 = arith.mulf %813, %811 : vector<8x32xf32>
    %815 = arith.mulf %806, %764 : vector<8x32xf32>
    %816 = arith.addf %814, %815 : vector<8x32xf32>
    %817 = arith.mulf %24, %816 : vector<8x32xf32>
    %818 = arith.subf %816, %764 : vector<8x32xf32>
    %819 = arith.mulf %24, %818 : vector<8x32xf32>
    %820 = arith.addf %764, %819 : vector<8x32xf32>
    %821 = vector.extract_strided_slice %525 {offsets = [40, 0], sizes = [8, 96], strides = [1, 1]} : vector<64x96xf32> to vector<8x96xf32>
    %822 = arith.truncf %792 : vector<8x32xf32> to vector<8x32xbf16>
    %cst_128 = arith.constant dense<0.000000e+00> : vector<8x96xf32>
    %823 = tpu.matmul %822, %528, %cst_128 {dimension_numbers = #tpu.dot_dimension_numbers<[1], [0], [0], [1], [0, 0, 1, 1], [], []>} : vector<8x32xbf16>, vector<32x96xbf16>, vector<8x96xf32> -> vector<8x96xf32>
    %824 = arith.addf %823, %534 : vector<8x96xf32>
    %825 = vector.extract_strided_slice %821 {offsets = [0, 0], sizes = [8, 64], strides = [1, 1]} : vector<8x96xf32> to vector<8x64xf32>
    %826 = vector.extract_strided_slice %824 {offsets = [0, 0], sizes = [8, 64], strides = [1, 1]} : vector<8x96xf32> to vector<8x64xf32>
    %827 = arith.addf %825, %826 : vector<8x64xf32>
    %828 = arith.negf %827 : vector<8x64xf32>
    %829 = math.exp %828 : vector<8x64xf32>
    %cst_129 = arith.constant 1.000000e+00 : f32
    %830 = vector.broadcast %cst_129 : f32 to vector<8x64xf32>
    %831 = arith.addf %830, %829 : vector<8x64xf32>
    %832 = arith.divf %830, %831 : vector<8x64xf32>
    %833 = vector.extract_strided_slice %832 {offsets = [0, 0], sizes = [8, 32], strides = [1, 1]} : vector<8x64xf32> to vector<8x32xf32>
    %834 = vector.extract_strided_slice %832 {offsets = [0, 32], sizes = [8, 32], strides = [1, 1]} : vector<8x64xf32> to vector<8x32xf32>
    %835 = vector.extract_strided_slice %821 {offsets = [0, 64], sizes = [8, 32], strides = [1, 1]} : vector<8x96xf32> to vector<8x32xf32>
    %836 = vector.extract_strided_slice %824 {offsets = [0, 64], sizes = [8, 32], strides = [1, 1]} : vector<8x96xf32> to vector<8x32xf32>
    %837 = arith.mulf %833, %836 : vector<8x32xf32>
    %838 = arith.addf %835, %837 : vector<8x32xf32>
    %839 = math.tanh %838 : vector<8x32xf32>
    %cst_130 = arith.constant 1.000000e+00 : f32
    %840 = vector.broadcast %cst_130 : f32 to vector<8x32xf32>
    %841 = arith.subf %840, %834 : vector<8x32xf32>
    %842 = arith.mulf %841, %839 : vector<8x32xf32>
    %843 = arith.mulf %834, %792 : vector<8x32xf32>
    %844 = arith.addf %842, %843 : vector<8x32xf32>
    %845 = arith.mulf %36, %844 : vector<8x32xf32>
    %846 = arith.subf %844, %792 : vector<8x32xf32>
    %847 = arith.mulf %36, %846 : vector<8x32xf32>
    %848 = arith.addf %792, %847 : vector<8x32xf32>
    %849 = vector.extract_strided_slice %526 {offsets = [16, 0], sizes = [8, 96], strides = [1, 1]} : vector<64x96xf32> to vector<8x96xf32>
    %850 = arith.truncf %820 : vector<8x32xf32> to vector<8x32xbf16>
    %cst_131 = arith.constant dense<0.000000e+00> : vector<8x96xf32>
    %851 = tpu.matmul %850, %530, %cst_131 {dimension_numbers = #tpu.dot_dimension_numbers<[1], [0], [0], [1], [0, 0, 1, 1], [], []>} : vector<8x32xbf16>, vector<32x96xbf16>, vector<8x96xf32> -> vector<8x96xf32>
    %852 = arith.addf %851, %538 : vector<8x96xf32>
    %853 = vector.extract_strided_slice %849 {offsets = [0, 0], sizes = [8, 64], strides = [1, 1]} : vector<8x96xf32> to vector<8x64xf32>
    %854 = vector.extract_strided_slice %852 {offsets = [0, 0], sizes = [8, 64], strides = [1, 1]} : vector<8x96xf32> to vector<8x64xf32>
    %855 = arith.addf %853, %854 : vector<8x64xf32>
    %856 = arith.negf %855 : vector<8x64xf32>
    %857 = math.exp %856 : vector<8x64xf32>
    %cst_132 = arith.constant 1.000000e+00 : f32
    %858 = vector.broadcast %cst_132 : f32 to vector<8x64xf32>
    %859 = arith.addf %858, %857 : vector<8x64xf32>
    %860 = arith.divf %858, %859 : vector<8x64xf32>
    %861 = vector.extract_strided_slice %860 {offsets = [0, 0], sizes = [8, 32], strides = [1, 1]} : vector<8x64xf32> to vector<8x32xf32>
    %862 = vector.extract_strided_slice %860 {offsets = [0, 32], sizes = [8, 32], strides = [1, 1]} : vector<8x64xf32> to vector<8x32xf32>
    %863 = vector.extract_strided_slice %849 {offsets = [0, 64], sizes = [8, 32], strides = [1, 1]} : vector<8x96xf32> to vector<8x32xf32>
    %864 = vector.extract_strided_slice %852 {offsets = [0, 64], sizes = [8, 32], strides = [1, 1]} : vector<8x96xf32> to vector<8x32xf32>
    %865 = arith.mulf %861, %864 : vector<8x32xf32>
    %866 = arith.addf %863, %865 : vector<8x32xf32>
    %867 = math.tanh %866 : vector<8x32xf32>
    %cst_133 = arith.constant 1.000000e+00 : f32
    %868 = vector.broadcast %cst_133 : f32 to vector<8x32xf32>
    %869 = arith.subf %868, %862 : vector<8x32xf32>
    %870 = arith.mulf %869, %867 : vector<8x32xf32>
    %871 = arith.mulf %862, %820 : vector<8x32xf32>
    %872 = arith.addf %870, %871 : vector<8x32xf32>
    %873 = arith.mulf %18, %872 : vector<8x32xf32>
    %874 = arith.subf %872, %820 : vector<8x32xf32>
    %875 = arith.mulf %18, %874 : vector<8x32xf32>
    %876 = arith.addf %820, %875 : vector<8x32xf32>
    %877 = vector.extract_strided_slice %525 {offsets = [48, 0], sizes = [8, 96], strides = [1, 1]} : vector<64x96xf32> to vector<8x96xf32>
    %878 = arith.truncf %848 : vector<8x32xf32> to vector<8x32xbf16>
    %cst_134 = arith.constant dense<0.000000e+00> : vector<8x96xf32>
    %879 = tpu.matmul %878, %528, %cst_134 {dimension_numbers = #tpu.dot_dimension_numbers<[1], [0], [0], [1], [0, 0, 1, 1], [], []>} : vector<8x32xbf16>, vector<32x96xbf16>, vector<8x96xf32> -> vector<8x96xf32>
    %880 = arith.addf %879, %534 : vector<8x96xf32>
    %881 = vector.extract_strided_slice %877 {offsets = [0, 0], sizes = [8, 64], strides = [1, 1]} : vector<8x96xf32> to vector<8x64xf32>
    %882 = vector.extract_strided_slice %880 {offsets = [0, 0], sizes = [8, 64], strides = [1, 1]} : vector<8x96xf32> to vector<8x64xf32>
    %883 = arith.addf %881, %882 : vector<8x64xf32>
    %884 = arith.negf %883 : vector<8x64xf32>
    %885 = math.exp %884 : vector<8x64xf32>
    %cst_135 = arith.constant 1.000000e+00 : f32
    %886 = vector.broadcast %cst_135 : f32 to vector<8x64xf32>
    %887 = arith.addf %886, %885 : vector<8x64xf32>
    %888 = arith.divf %886, %887 : vector<8x64xf32>
    %889 = vector.extract_strided_slice %888 {offsets = [0, 0], sizes = [8, 32], strides = [1, 1]} : vector<8x64xf32> to vector<8x32xf32>
    %890 = vector.extract_strided_slice %888 {offsets = [0, 32], sizes = [8, 32], strides = [1, 1]} : vector<8x64xf32> to vector<8x32xf32>
    %891 = vector.extract_strided_slice %877 {offsets = [0, 64], sizes = [8, 32], strides = [1, 1]} : vector<8x96xf32> to vector<8x32xf32>
    %892 = vector.extract_strided_slice %880 {offsets = [0, 64], sizes = [8, 32], strides = [1, 1]} : vector<8x96xf32> to vector<8x32xf32>
    %893 = arith.mulf %889, %892 : vector<8x32xf32>
    %894 = arith.addf %891, %893 : vector<8x32xf32>
    %895 = math.tanh %894 : vector<8x32xf32>
    %cst_136 = arith.constant 1.000000e+00 : f32
    %896 = vector.broadcast %cst_136 : f32 to vector<8x32xf32>
    %897 = arith.subf %896, %890 : vector<8x32xf32>
    %898 = arith.mulf %897, %895 : vector<8x32xf32>
    %899 = arith.mulf %890, %848 : vector<8x32xf32>
    %900 = arith.addf %898, %899 : vector<8x32xf32>
    %901 = arith.mulf %42, %900 : vector<8x32xf32>
    %902 = arith.subf %900, %848 : vector<8x32xf32>
    %903 = arith.mulf %42, %902 : vector<8x32xf32>
    %904 = arith.addf %848, %903 : vector<8x32xf32>
    %905 = vector.extract_strided_slice %526 {offsets = [8, 0], sizes = [8, 96], strides = [1, 1]} : vector<64x96xf32> to vector<8x96xf32>
    %906 = arith.truncf %876 : vector<8x32xf32> to vector<8x32xbf16>
    %cst_137 = arith.constant dense<0.000000e+00> : vector<8x96xf32>
    %907 = tpu.matmul %906, %530, %cst_137 {dimension_numbers = #tpu.dot_dimension_numbers<[1], [0], [0], [1], [0, 0, 1, 1], [], []>} : vector<8x32xbf16>, vector<32x96xbf16>, vector<8x96xf32> -> vector<8x96xf32>
    %908 = arith.addf %907, %538 : vector<8x96xf32>
    %909 = vector.extract_strided_slice %905 {offsets = [0, 0], sizes = [8, 64], strides = [1, 1]} : vector<8x96xf32> to vector<8x64xf32>
    %910 = vector.extract_strided_slice %908 {offsets = [0, 0], sizes = [8, 64], strides = [1, 1]} : vector<8x96xf32> to vector<8x64xf32>
    %911 = arith.addf %909, %910 : vector<8x64xf32>
    %912 = arith.negf %911 : vector<8x64xf32>
    %913 = math.exp %912 : vector<8x64xf32>
    %cst_138 = arith.constant 1.000000e+00 : f32
    %914 = vector.broadcast %cst_138 : f32 to vector<8x64xf32>
    %915 = arith.addf %914, %913 : vector<8x64xf32>
    %916 = arith.divf %914, %915 : vector<8x64xf32>
    %917 = vector.extract_strided_slice %916 {offsets = [0, 0], sizes = [8, 32], strides = [1, 1]} : vector<8x64xf32> to vector<8x32xf32>
    %918 = vector.extract_strided_slice %916 {offsets = [0, 32], sizes = [8, 32], strides = [1, 1]} : vector<8x64xf32> to vector<8x32xf32>
    %919 = vector.extract_strided_slice %905 {offsets = [0, 64], sizes = [8, 32], strides = [1, 1]} : vector<8x96xf32> to vector<8x32xf32>
    %920 = vector.extract_strided_slice %908 {offsets = [0, 64], sizes = [8, 32], strides = [1, 1]} : vector<8x96xf32> to vector<8x32xf32>
    %921 = arith.mulf %917, %920 : vector<8x32xf32>
    %922 = arith.addf %919, %921 : vector<8x32xf32>
    %923 = math.tanh %922 : vector<8x32xf32>
    %cst_139 = arith.constant 1.000000e+00 : f32
    %924 = vector.broadcast %cst_139 : f32 to vector<8x32xf32>
    %925 = arith.subf %924, %918 : vector<8x32xf32>
    %926 = arith.mulf %925, %923 : vector<8x32xf32>
    %927 = arith.mulf %918, %876 : vector<8x32xf32>
    %928 = arith.addf %926, %927 : vector<8x32xf32>
    %929 = arith.mulf %12, %928 : vector<8x32xf32>
    %930 = arith.subf %928, %876 : vector<8x32xf32>
    %931 = arith.mulf %12, %930 : vector<8x32xf32>
    %932 = arith.addf %876, %931 : vector<8x32xf32>
    %933 = vector.extract_strided_slice %525 {offsets = [56, 0], sizes = [8, 96], strides = [1, 1]} : vector<64x96xf32> to vector<8x96xf32>
    %934 = arith.truncf %904 : vector<8x32xf32> to vector<8x32xbf16>
    %cst_140 = arith.constant dense<0.000000e+00> : vector<8x96xf32>
    %935 = tpu.matmul %934, %528, %cst_140 {dimension_numbers = #tpu.dot_dimension_numbers<[1], [0], [0], [1], [0, 0, 1, 1], [], []>} : vector<8x32xbf16>, vector<32x96xbf16>, vector<8x96xf32> -> vector<8x96xf32>
    %936 = arith.addf %935, %534 : vector<8x96xf32>
    %937 = vector.extract_strided_slice %933 {offsets = [0, 0], sizes = [8, 64], strides = [1, 1]} : vector<8x96xf32> to vector<8x64xf32>
    %938 = vector.extract_strided_slice %936 {offsets = [0, 0], sizes = [8, 64], strides = [1, 1]} : vector<8x96xf32> to vector<8x64xf32>
    %939 = arith.addf %937, %938 : vector<8x64xf32>
    %940 = arith.negf %939 : vector<8x64xf32>
    %941 = math.exp %940 : vector<8x64xf32>
    %cst_141 = arith.constant 1.000000e+00 : f32
    %942 = vector.broadcast %cst_141 : f32 to vector<8x64xf32>
    %943 = arith.addf %942, %941 : vector<8x64xf32>
    %944 = arith.divf %942, %943 : vector<8x64xf32>
    %945 = vector.extract_strided_slice %944 {offsets = [0, 0], sizes = [8, 32], strides = [1, 1]} : vector<8x64xf32> to vector<8x32xf32>
    %946 = vector.extract_strided_slice %944 {offsets = [0, 32], sizes = [8, 32], strides = [1, 1]} : vector<8x64xf32> to vector<8x32xf32>
    %947 = vector.extract_strided_slice %933 {offsets = [0, 64], sizes = [8, 32], strides = [1, 1]} : vector<8x96xf32> to vector<8x32xf32>
    %948 = vector.extract_strided_slice %936 {offsets = [0, 64], sizes = [8, 32], strides = [1, 1]} : vector<8x96xf32> to vector<8x32xf32>
    %949 = arith.mulf %945, %948 : vector<8x32xf32>
    %950 = arith.addf %947, %949 : vector<8x32xf32>
    %951 = math.tanh %950 : vector<8x32xf32>
    %cst_142 = arith.constant 1.000000e+00 : f32
    %952 = vector.broadcast %cst_142 : f32 to vector<8x32xf32>
    %953 = arith.subf %952, %946 : vector<8x32xf32>
    %954 = arith.mulf %953, %951 : vector<8x32xf32>
    %955 = arith.mulf %946, %904 : vector<8x32xf32>
    %956 = arith.addf %954, %955 : vector<8x32xf32>
    %957 = arith.mulf %48, %956 : vector<8x32xf32>
    %958 = vector.extract_strided_slice %526 {offsets = [0, 0], sizes = [8, 96], strides = [1, 1]} : vector<64x96xf32> to vector<8x96xf32>
    %959 = arith.truncf %932 : vector<8x32xf32> to vector<8x32xbf16>
    %cst_143 = arith.constant dense<0.000000e+00> : vector<8x96xf32>
    %960 = tpu.matmul %959, %530, %cst_143 {dimension_numbers = #tpu.dot_dimension_numbers<[1], [0], [0], [1], [0, 0, 1, 1], [], []>} : vector<8x32xbf16>, vector<32x96xbf16>, vector<8x96xf32> -> vector<8x96xf32>
    %961 = arith.addf %960, %538 : vector<8x96xf32>
    %962 = vector.extract_strided_slice %958 {offsets = [0, 0], sizes = [8, 64], strides = [1, 1]} : vector<8x96xf32> to vector<8x64xf32>
    %963 = vector.extract_strided_slice %961 {offsets = [0, 0], sizes = [8, 64], strides = [1, 1]} : vector<8x96xf32> to vector<8x64xf32>
    %964 = arith.addf %962, %963 : vector<8x64xf32>
    %965 = arith.negf %964 : vector<8x64xf32>
    %966 = math.exp %965 : vector<8x64xf32>
    %cst_144 = arith.constant 1.000000e+00 : f32
    %967 = vector.broadcast %cst_144 : f32 to vector<8x64xf32>
    %968 = arith.addf %967, %966 : vector<8x64xf32>
    %969 = arith.divf %967, %968 : vector<8x64xf32>
    %970 = vector.extract_strided_slice %969 {offsets = [0, 0], sizes = [8, 32], strides = [1, 1]} : vector<8x64xf32> to vector<8x32xf32>
    %971 = vector.extract_strided_slice %969 {offsets = [0, 32], sizes = [8, 32], strides = [1, 1]} : vector<8x64xf32> to vector<8x32xf32>
    %972 = vector.extract_strided_slice %958 {offsets = [0, 64], sizes = [8, 32], strides = [1, 1]} : vector<8x96xf32> to vector<8x32xf32>
    %973 = vector.extract_strided_slice %961 {offsets = [0, 64], sizes = [8, 32], strides = [1, 1]} : vector<8x96xf32> to vector<8x32xf32>
    %974 = arith.mulf %970, %973 : vector<8x32xf32>
    %975 = arith.addf %972, %974 : vector<8x32xf32>
    %976 = math.tanh %975 : vector<8x32xf32>
    %cst_145 = arith.constant 1.000000e+00 : f32
    %977 = vector.broadcast %cst_145 : f32 to vector<8x32xf32>
    %978 = arith.subf %977, %971 : vector<8x32xf32>
    %979 = arith.mulf %978, %976 : vector<8x32xf32>
    %980 = arith.mulf %971, %932 : vector<8x32xf32>
    %981 = arith.addf %979, %980 : vector<8x32xf32>
    %982 = arith.mulf %6, %981 : vector<8x32xf32>
    %983 = tpu.concatenate %565, %621, %677, %733, %789, %845, %901, %957 in 0 : vector<8x32xf32>, vector<8x32xf32>, vector<8x32xf32>, vector<8x32xf32>, vector<8x32xf32>, vector<8x32xf32>, vector<8x32xf32>, vector<8x32xf32> -> vector<64x32xf32>
    %984 = tpu.concatenate %982, %929, %873, %817, %761, %705, %649, %593 in 0 : vector<8x32xf32>, vector<8x32xf32>, vector<8x32xf32>, vector<8x32xf32>, vector<8x32xf32>, vector<8x32xf32>, vector<8x32xf32>, vector<8x32xf32> -> vector<64x32xf32>
    %985 = arith.truncf %983 : vector<64x32xf32> to vector<64x32xbf16>
    %c0_146 = arith.constant 0 : index
    %c0_147 = arith.constant 0 : index
    %986 = vector.load %arg11[%c0_146, %c0_147] : memref<32x32xbf16, #tpu.memory_space<vmem>>, vector<32x32xbf16>
    %cst_148 = arith.constant dense<0.000000e+00> : vector<64x32xf32>
    %987 = tpu.matmul %985, %986, %cst_148 {dimension_numbers = #tpu.dot_dimension_numbers<[1], [0], [0], [1], [0, 0, 1, 1], [], []>} : vector<64x32xbf16>, vector<32x32xbf16>, vector<64x32xf32> -> vector<64x32xf32>
    %988 = arith.truncf %984 : vector<64x32xf32> to vector<64x32xbf16>
    %c0_149 = arith.constant 0 : index
    %c0_150 = arith.constant 0 : index
    %989 = vector.load %arg12[%c0_149, %c0_150] : memref<32x32xbf16, #tpu.memory_space<vmem>>, vector<32x32xbf16>
    %cst_151 = arith.constant dense<0.000000e+00> : vector<64x32xf32>
    %990 = tpu.matmul %988, %989, %cst_151 {dimension_numbers = #tpu.dot_dimension_numbers<[1], [0], [0], [1], [0, 0, 1, 1], [], []>} : vector<64x32xbf16>, vector<32x32xbf16>, vector<64x32xf32> -> vector<64x32xf32>
    %991 = arith.addf %987, %990 : vector<64x32xf32>
    %c0_152 = arith.constant 0 : index
    %c0_153 = arith.constant 0 : index
    %992 = vector.load %arg13[%c0_152, %c0_153] : memref<1x32xf32, #tpu.memory_space<vmem>>, vector<1x32xf32>
    %993 = vector.broadcast %992 : vector<1x32xf32> to vector<64x32xf32>
    %994 = arith.addf %991, %993 : vector<64x32xf32>
    %995 = arith.negf %994 : vector<64x32xf32>
    %996 = math.exp %995 : vector<64x32xf32>
    %cst_154 = arith.constant 1.000000e+00 : f32
    %997 = vector.broadcast %cst_154 : f32 to vector<64x32xf32>
    %998 = arith.addf %997, %996 : vector<64x32xf32>
    %999 = arith.divf %997, %998 : vector<64x32xf32>
    %1000 = arith.mulf %994, %999 : vector<64x32xf32>
    %1001 = arith.truncf %1000 : vector<64x32xf32> to vector<64x32xbf16>
    %c0_155 = arith.constant 0 : index
    %c0_156 = arith.constant 0 : index
    %1002 = vector.load %arg14[%c0_155, %c0_156] : memref<32x16xbf16, #tpu.memory_space<vmem>>, vector<32x16xbf16>
    %cst_157 = arith.constant dense<0.000000e+00> : vector<64x16xf32>
    %1003 = tpu.matmul %1001, %1002, %cst_157 {dimension_numbers = #tpu.dot_dimension_numbers<[1], [0], [0], [1], [0, 0, 1, 1], [], []>} : vector<64x32xbf16>, vector<32x16xbf16>, vector<64x16xf32> -> vector<64x16xf32>
    %c0_158 = arith.constant 0 : index
    %c0_159 = arith.constant 0 : index
    %1004 = vector.load %arg15[%c0_158, %c0_159] : memref<1x16xf32, #tpu.memory_space<vmem>>, vector<1x16xf32>
    %1005 = vector.broadcast %1004 : vector<1x16xf32> to vector<64x16xf32>
    %1006 = arith.addf %1003, %1005 : vector<64x16xf32>
    %1007 = arith.negf %1006 : vector<64x16xf32>
    %1008 = math.exp %1007 : vector<64x16xf32>
    %cst_160 = arith.constant 1.000000e+00 : f32
    %1009 = vector.broadcast %cst_160 : f32 to vector<64x16xf32>
    %1010 = arith.addf %1009, %1008 : vector<64x16xf32>
    %1011 = arith.divf %1009, %1010 : vector<64x16xf32>
    %1012 = arith.mulf %1006, %1011 : vector<64x16xf32>
    %1013 = arith.truncf %1012 : vector<64x16xf32> to vector<64x16xbf16>
    %c0_161 = arith.constant 0 : index
    %c0_162 = arith.constant 0 : index
    %1014 = vector.load %arg16[%c0_161, %c0_162] : memref<16x128xbf16, #tpu.memory_space<vmem>>, vector<16x128xbf16>
    %cst_163 = arith.constant dense<0.000000e+00> : vector<64x128xf32>
    %1015 = tpu.matmul %1013, %1014, %cst_163 {dimension_numbers = #tpu.dot_dimension_numbers<[1], [0], [0], [1], [0, 0, 1, 1], [], []>} : vector<64x16xbf16>, vector<16x128xbf16>, vector<64x128xf32> -> vector<64x128xf32>
    %c0_164 = arith.constant 0 : index
    %c0_165 = arith.constant 0 : index
    %1016 = vector.load %arg17[%c0_164, %c0_165] : memref<1x128xf32, #tpu.memory_space<vmem>>, vector<1x128xf32>
    %1017 = vector.broadcast %1016 : vector<1x128xf32> to vector<64x128xf32>
    %1018 = arith.addf %1015, %1017 : vector<64x128xf32>
    %c0_166 = arith.constant 0 : index
    %c0_167 = arith.constant 0 : index
    %1019 = vector.load %arg18[%c0_166, %c0_167] : memref<64x128xf32, #tpu.memory_space<vmem>>, vector<64x128xf32>
    tpu.vector_store %arg18[%c0_166, %c0_167], %1018 {strides = array<i32>} : memref<64x128xf32, #tpu.memory_space<vmem>>, vector<64x128xf32>,
    return
  }
}

</mosaic_0001>

<llo_original>
// kernel: squeeze.1
$region0: #{squeeze.1}
  %s0 = inlined_call_operand.vmem [shape: f32[64], index: 0, kind: input, shape index: {}]
  %s1 = inlined_call_operand.vmem [shape: f32[8,8], index: 1, kind: output, shape index: {}]
  $region1: #{squeeze.1} parent=0
    #allocation0 [shape = 'u8[4096]{0}', space=vmem, size = 0x1000, scoped, tag = 'scoped mem for input reshape']
    %s3 = sshll.u32 1, 1
    %s4 = ssub.s32 %s3, 1
    %v5 = vld [vmem:[%s0] sm:%s4]
    %6 = vst [vmem:[#allocation0] sm:%s4] %v5
    %v7 = vld [vmem:[#allocation0] sm:$0x1]
    %vm8 = vcmask 64512
    %9 = vst.msk [vmem:[%s1] sm:$0x1] %vm8, %v7
    %v10 = vld [vmem:[#allocation0] sm:$0x1]
    %11 = vrot.lane.b32.xlu0 %v10, 120
    %v12 = vpop.permute.xlu0 %11
    %vm13 = vcmask 64512
    %s14 = scalar_lea.vmem %s1, 1
    %15 = vst.msk [vmem:[%s14] sm:$0x1] %vm13, %v12
    %v16 = vld [vmem:[#allocation0] sm:$0x1]
    %17 = vrot.lane.b32.xlu0 %v16, 112
    %v18 = vpop.permute.xlu0 %17
    %vm19 = vcmask 64512
    %s20 = scalar_lea.vmem %s1, 2
    %21 = vst.msk [vmem:[%s20] sm:$0x1] %vm19, %v18
    %v22 = vld [vmem:[#allocation0] sm:$0x1]
    %23 = vrot.lane.b32.xlu0 %v22, 104
    %v24 = vpop.permute.xlu0 %23
    %vm25 = vcmask 64512
    %s26 = scalar_lea.vmem %s1, 3
    %27 = vst.msk [vmem:[%s26] sm:$0x1] %vm25, %v24
    %v28 = vld [vmem:[#allocation0] sm:$0x1]
    %29 = vrot.lane.b32.xlu0 %v28, 96
    %v30 = vpop.permute.xlu0 %29
    %vm31 = vcmask 64512
    %s32 = scalar_lea.vmem %s1, 4
    %33 = vst.msk [vmem:[%s32] sm:$0x1] %vm31, %v30
    %v34 = vld [vmem:[#allocation0] sm:$0x1]
    %35 = vrot.lane.b32.xlu0 %v34, 88
    %v36 = vpop.permute.xlu0 %35
    %vm37 = vcmask 64512
    %s38 = scalar_lea.vmem %s1, 5
    %39 = vst.msk [vmem:[%s38] sm:$0x1] %vm37, %v36
    %v40 = vld [vmem:[#allocation0] sm:$0x1]
    %41 = vrot.lane.b32.xlu0 %v40, 80
    %v42 = vpop.permute.xlu0 %41
    %vm43 = vcmask 64512
    %s44 = scalar_lea.vmem %s1, 6
    %45 = vst.msk [vmem:[%s44] sm:$0x1] %vm43, %v42
    %v46 = vld [vmem:[#allocation0] sm:$0x1]
    %47 = vrot.lane.b32.xlu0 %v46, 72
    %v48 = vpop.permute.xlu0 %47
    %vm49 = vcmask 64512
    %s50 = scalar_lea.vmem %s1, 7
    %51 = vst.msk [vmem:[%s50] sm:$0x1] %vm49, %v48

// kernel: epitope_forward.1
$region0: #{epitope_forward.1}
  #allocation0 [shape = 'u32[]', space=smem, size = 0x4, offset = 0x4, fixed_abs, tag = 'smem constant byte address 0x4 - core index']
  #allocation1 [shape = 'u32[144,128]{1,0:T(1,128)}', space=vmem, size = 0x12000, scoped, tag = 'internal scratch']
  %s0 = inlined_call_operand.vmem [shape: bf16[64,50], index: 0, kind: input, shape index: {}]
  %s1 = inlined_call_operand.vmem [shape: f32[8,1], index: 1, kind: input, shape index: {}]
  %s2 = inlined_call_operand.vmem [shape: bf16[50,256], index: 2, kind: input, shape index: {}]
  %s3 = inlined_call_operand.vmem [shape: f32[1,256], index: 3, kind: input, shape index: {}]
  %s4 = inlined_call_operand.vmem [shape: bf16[2,32,96], index: 4, kind: input, shape index: {}]
  %s5 = inlined_call_operand.vmem [shape: f32[2,1,96], index: 5, kind: input, shape index: {}]
  %s6 = inlined_call_operand.vmem [shape: bf16[32,256], index: 6, kind: input, shape index: {}]
  %s7 = inlined_call_operand.vmem [shape: bf16[32,256], index: 7, kind: input, shape index: {}]
  %s8 = inlined_call_operand.vmem [shape: f32[1,256], index: 8, kind: input, shape index: {}]
  %s9 = inlined_call_operand.vmem [shape: bf16[2,32,96], index: 9, kind: input, shape index: {}]
  %s10 = inlined_call_operand.vmem [shape: f32[2,1,96], index: 10, kind: input, shape index: {}]
  %s11 = inlined_call_operand.vmem [shape: bf16[32,32], index: 11, kind: input, shape index: {}]
  %s12 = inlined_call_operand.vmem [shape: bf16[32,32], index: 12, kind: input, shape index: {}]
  %s13 = inlined_call_operand.vmem [shape: f32[1,32], index: 13, kind: input, shape index: {}]
  %s14 = inlined_call_operand.vmem [shape: bf16[32,16], index: 14, kind: input, shape index: {}]
  %s15 = inlined_call_operand.vmem [shape: f32[1,16], index: 15, kind: input, shape index: {}]
  %s16 = inlined_call_operand.vmem [shape: bf16[16,128], index: 16, kind: input, shape index: {}]
  %s17 = inlined_call_operand.vmem [shape: f32[1,128], index: 17, kind: input, shape index: {}]
  %s18 = inlined_call_operand.vmem [shape: f32[64,128], index: 18, kind: output, shape index: {}]
  %s19 = sld [smem:[#allocation0]]
  $region82: #{epitope_forward.1} parent=0
    _
  %s21 = ssub.s32 1, %s19
  %s22 = scalar_select 0, %s21, %s19
  // Predicated region
  $region2: #{epitope_forward.1} parent=0 // pred_check
    _
  $region3: #{epitope_forward.1} parent=0 // pred_check_branch
    %24 = sbr.rel (0) target = $region5
  $region4: #{epitope_forward.1} parent=0 // pred_region
    _
  $region5: #{epitope_forward.1} parent=0 // pred_fallthru
    _
  // Predicated region
  $region6: #{epitope_forward.1} parent=0 // pred_check
    _
  $region7: #{epitope_forward.1} parent=0 // pred_check_branch
    %26 = sbr.rel (0) target = $region9
  $region8: #{epitope_forward.1} parent=0 // pred_region
    _
  $region9: #{epitope_forward.1} parent=0 // pred_fallthru
    _
  // Predicated region
  $region10: #{epitope_forward.1} parent=0 // pred_check
    _
  $region11: #{epitope_forward.1} parent=0 // pred_check_branch
    %28 = sbr.rel (0) target = $region13
  $region12: #{epitope_forward.1} parent=0 // pred_region
    _
  $region13: #{epitope_forward.1} parent=0 // pred_fallthru
    _
  // Predicated region
  $region14: #{epitope_forward.1} parent=0 // pred_check
    _
  $region15: #{epitope_forward.1} parent=0 // pred_check_branch
    %30 = sbr.rel (0) target = $region17
  $region16: #{epitope_forward.1} parent=0 // pred_region
    _
  $region17: #{epitope_forward.1} parent=0 // pred_fallthru
    _
  // Predicated region
  $region18: #{epitope_forward.1} parent=0 // pred_check
    _
  $region19: #{epitope_forward.1} parent=0 // pred_check_branch
    %32 = sbr.rel (0) target = $region21
  $region20: #{epitope_forward.1} parent=0 // pred_region
    _
  $region21: #{epitope_forward.1} parent=0 // pred_fallthru
    _
  // Predicated region
  $region22: #{epitope_forward.1} parent=0 // pred_check
    _
  $region23: #{epitope_forward.1} parent=0 // pred_check_branch
    %34 = sbr.rel (0) target = $region25
  $region24: #{epitope_forward.1} parent=0 // pred_region
    _
  $region25: #{epitope_forward.1} parent=0 // pred_fallthru
    _
  // Predicated region
  $region26: #{epitope_forward.1} parent=0 // pred_check
    _
  $region27: #{epitope_forward.1} parent=0 // pred_check_branch
    %36 = sbr.rel (0) target = $region29
  $region28: #{epitope_forward.1} parent=0 // pred_region
    _
  $region29: #{epitope_forward.1} parent=0 // pred_fallthru
    _
  // Predicated region
  $region30: #{epitope_forward.1} parent=0 // pred_check
    _
  $region31: #{epitope_forward.1} parent=0 // pred_check_branch
    %38 = sbr.rel (0) target = $region33
  $region32: #{epitope_forward.1} parent=0 // pred_region
    _
  $region33: #{epitope_forward.1} parent=0 // pred_fallthru
    _
  // Predicated region
  $region34: #{epitope_forward.1} parent=0 // pred_check
    _
  $region35: #{epitope_forward.1} parent=0 // pred_check_branch
    %40 = sbr.rel (0) target = $region37
  $region36: #{epitope_forward.1} parent=0 // pred_region
    _
  $region37: #{epitope_forward.1} parent=0 // pred_fallthru
    _
  // Predicated region
  $region38: #{epitope_forward.1} parent=0 // pred_check
    _
  $region39: #{epitope_forward.1} parent=0 // pred_check_branch
    %42 = sbr.rel (0) target = $region41
  $region40: #{epitope_forward.1} parent=0 // pred_region
    _
  $region41: #{epitope_forward.1} parent=0 // pred_fallthru
    _
  // Predicated region
  $region42: #{epitope_forward.1} parent=0 // pred_check
    _
  $region43: #{epitope_forward.1} parent=0 // pred_check_branch
    %44 = sbr.rel (0) target = $region45
  $region44: #{epitope_forward.1} parent=0 // pred_region
    _
  $region45: #{epitope_forward.1} parent=0 // pred_fallthru
    _
  // Predicated region
  $region46: #{epitope_forward.1} parent=0 // pred_check
    _
  $region47: #{epitope_forward.1} parent=0 // pred_check_branch
    %46 = sbr.rel (0) target = $region49
  $region48: #{epitope_forward.1} parent=0 // pred_region
    _
  $region49: #{epitope_forward.1} parent=0 // pred_fallthru
    _
  // Predicated region
  $region50: #{epitope_forward.1} parent=0 // pred_check
    _
  $region51: #{epitope_forward.1} parent=0 // pred_check_branch
    %48 = sbr.rel (0) target = $region53
  $region52: #{epitope_forward.1} parent=0 // pred_region
    _
  $region53: #{epitope_forward.1} parent=0 // pred_fallthru
    _
  // Predicated region
  $region54: #{epitope_forward.1} parent=0 // pred_check
    _
  $region55: #{epitope_forward.1} parent=0 // pred_check_branch
    %50 = sbr.rel (0) target = $region57
  $region56: #{epitope_forward.1} parent=0 // pred_region
    _
  $region57: #{epitope_forward.1} parent=0 // pred_fallthru
    _
  // Predicated region
  $region58: #{epitope_forward.1} parent=0 // pred_check
    _
  $region59: #{epitope_forward.1} parent=0 // pred_check_branch
    %52 = sbr.rel (0) target = $region61
  $region60: #{epitope_forward.1} parent=0 // pred_region
    _
  $region61: #{epitope_forward.1} parent=0 // pred_fallthru
    _
  // Predicated region
  $region62: #{epitope_forward.1} parent=0 // pred_check
    _
  $region63: #{epitope_forward.1} parent=0 // pred_check_branch
    %54 = sbr.rel (0) target = $region65
  $region64: #{epitope_forward.1} parent=0 // pred_region
    _
  $region65: #{epitope_forward.1} parent=0 // pred_fallthru
    _
  // Predicated region
  $region66: #{epitope_forward.1} parent=0 // pred_check
    _
  $region67: #{epitope_forward.1} parent=0 // pred_check_branch
    %56 = sbr.rel (0) target = $region69
  $region68: #{epitope_forward.1} parent=0 // pred_region
    _
  $region69: #{epitope_forward.1} parent=0 // pred_fallthru
    _
  // Predicated region
  $region70: #{epitope_forward.1} parent=0 // pred_check
    _
  $region71: #{epitope_forward.1} parent=0 // pred_check_branch
    %58 = sbr.rel (0) target = $region73
  $region72: #{epitope_forward.1} parent=0 // pred_region
    _
  $region73: #{epitope_forward.1} parent=0 // pred_fallthru
    _
  %v60 = vld [vmem:[%s1] sm:$0xff]
  %vm61 = vcmp.gt.f32.partialorder %v60, 0.0
  %v62 = vsel %vm61, 1, 0
  %v63 = vcvt.s32.f32 %v62
  %65 = vset.pattern.permute.xlu0 0
  %66 = vperm.xlu0 %65, %v63
  %v67 = vpop.permute.xlu0 %66
  %vm69 = vcmp.gt.f32.partialorder %v60, 1.0
  %v70 = vsel %vm69, 1, 0
  %v71 = vcvt.s32.f32 %v70
  %73 = vset.pattern.permute.xlu0 0
  %74 = vperm.xlu0 %73, %v71
  %v75 = vpop.permute.xlu0 %74
  %vm77 = vcmp.gt.f32.partialorder %v60, 2.0
  %v78 = vsel %vm77, 1, 0
  %v79 = vcvt.s32.f32 %v78
  %81 = vset.pattern.permute.xlu0 0
  %82 = vperm.xlu0 %81, %v79
  %v83 = vpop.permute.xlu0 %82
  %vm85 = vcmp.gt.f32.partialorder %v60, 3.0
  %v86 = vsel %vm85, 1, 0
  %v87 = vcvt.s32.f32 %v86
  %89 = vset.pattern.permute.xlu0 0
  %90 = vperm.xlu0 %89, %v87
  %v91 = vpop.permute.xlu0 %90
  %vm93 = vcmp.gt.f32.partialorder %v60, 4.0
  %v94 = vsel %vm93, 1, 0
  %v95 = vcvt.s32.f32 %v94
  %97 = vset.pattern.permute.xlu0 0
  %98 = vperm.xlu0 %97, %v95
  %v99 = vpop.permute.xlu0 %98
  %vm101 = vcmp.gt.f32.partialorder %v60, 5.0
  %v102 = vsel %vm101, 1, 0
  %v103 = vcvt.s32.f32 %v102
  %105 = vset.pattern.permute.xlu0 0
  %106 = vperm.xlu0 %105, %v103
  %v107 = vpop.permute.xlu0 %106
  %vm109 = vcmp.gt.f32.partialorder %v60, 6.0
  %v110 = vsel %vm109, 1, 0
  %v111 = vcvt.s32.f32 %v110
  %113 = vset.pattern.permute.xlu0 0
  %114 = vperm.xlu0 %113, %v111
  %v115 = vpop.permute.xlu0 %114
  %vm117 = vcmp.gt.f32.partialorder %v60, 7.0
  %v118 = vsel %vm117, 1, 0
  %v119 = vcvt.s32.f32 %v118
  %121 = vset.pattern.permute.xlu0 0
  %122 = vperm.xlu0 %121, %v119
  %v123 = vpop.permute.xlu0 %122
  %v125 = vld [vmem:[%s0] sm:$0xf]
  %v126 = vld [vmem:[%s0 + $0x4] sm:$0xf]
  %v127 = vld [vmem:[%s0 + $0x8] sm:$0xf]
  %v128 = vld [vmem:[%s0 + $0xc] sm:$0xf]
  %v129 = vld [vmem:[%s0 + $0x10] sm:$0xf]
  %v130 = vld [vmem:[%s0 + $0x14] sm:$0xf]
  %v131 = vld [vmem:[%s0 + $0x18] sm:$0xf]
  %v132 = vld [vmem:[%s0 + $0x1c] sm:$0xf]
  %v133 = vld [vmem:[%s2] sm:$0xff]
  %v134 = vld [vmem:[%s2 + $0x8] sm:$0xff]
  %v135 = vld [vmem:[%s2 + $0x10] sm:$0xff]
  %v136 = vld [vmem:[%s2 + $0x18] sm:$0xff]
  %v137 = vld [vmem:[%s2 + $0x20] sm:$0xff]
  %v138 = vld [vmem:[%s2 + $0x28] sm:$0xff]
  %v139 = vld [vmem:[%s2 + $0x30] sm:$0x11]
  %v140 = vld [vmem:[%s3] sm:$0x3]
  %v142 = vlaneseq
  %v143 = vshrl.u32 %v142, 7
  %v144 = vsub.s32 0, %v143
  %v145 = vrot.slane %v140, %v144
  %v146 = vlaneseq
  %v147 = vshrl.u32 %v146, 7
  %v148 = vsub.s32 1, %v147
  %v149 = vrot.slane %v140, %v148
  %v160 = vunpack.c.l.b16 %v125
  %v161 = vunpack.c.l.b16 %v126
  %v162 = vunpack.c.l.b16 %v127
  %v163 = vunpack.c.l.b16 %v128
  %v164 = vunpack.c.l.b16 %v129
  %v165 = vunpack.c.l.b16 %v130
  %v166 = vunpack.c.l.b16 %v131
  %v167 = vunpack.c.l.b16 %v132
  %v168 = vpack.c.b16 %v161, %v160
  %v169 = vpack.c.b16 %v163, %v162
  %v170 = vpack.c.b16 %v165, %v164
  %v171 = vpack.c.b16 %v167, %v166
  %v179 = vunpack.c.l.b16 %v133
  %v180 = vunpack.c.h.b16 %v133
  %v181 = vunpack.c.l.b16 %v134
  %v182 = vunpack.c.h.b16 %v134
  %v183 = vunpack.c.l.b16 %v135
  %v184 = vunpack.c.h.b16 %v135
  %v185 = vunpack.c.l.b16 %v136
  %v186 = vunpack.c.h.b16 %v136
  %v187 = vunpack.c.l.b16 %v137
  %v188 = vunpack.c.h.b16 %v137
  %v189 = vunpack.c.l.b16 %v138
  %v190 = vunpack.c.h.b16 %v138
  %v191 = vunpack.c.l.b16 %v139
  %v192 = vunpack.c.h.b16 %v139
  %v193 = vpack.c.b16 %v181, %v179
  %v194 = vpack.c.b16 %v182, %v180
  %v195 = vpack.c.b16 %v185, %v183
  %v196 = vpack.c.b16 %v186, %v184
  %v197 = vpack.c.b16 %v189, %v187
  %v198 = vpack.c.b16 %v190, %v188
  %v199 = vpack.c.b16 %v191, %v191
  %v200 = vpack.c.b16 %v192, %v192
  %vm207 = vcmask 408576
  %v209 = vsel %vm207, %v168, 0
  %v212 = vsel %vm207, %v169, 0
  %v215 = vsel %vm207, %v170, 0
  %v218 = vsel %vm207, %v171, 0
  %vm220 = vcmask 1040384
  %v222 = vsel %vm220, %v199, 0
  %v225 = vsel %vm220, %v200, 0
  %227 = vmatprep.subr.bf16.mxu0 0
  %228 = vmatpush1.bf16.msra.mxu0 0
  %229 = vmatprep.subr.bf16.mxu0 0
  %230 = vmatpush1.bf16.msra.mxu0 0
  %231 = vmatprep.subr.bf16.mxu0 0
  %232 = vmatpush1.bf16.msra.mxu0 0
  %233 = vmatprep.subr.bf16.mxu0 0
  %234 = vmatpush1.bf16.msra.mxu0 0
  %235 = vmatprep.subr.bf16.mxu0 %v225
  %236 = vmatpush1.bf16.msra.mxu0 %v222
  %237 = vmatprep.subr.bf16.mxu0 %v198
  %238 = vmatpush1.bf16.msra.mxu0 %v197
  %239 = vmatprep.subr.bf16.mxu0 %v196
  %240 = vmatpush1.bf16.msra.mxu0 %v195
  %241 = vmatprep.subr.bf16.mxu0 %v194
  %242 = vmatpush1.bf16.msra.mxu0 %v193
  %243 = vmatprep.subr.bf16.mxu0 0
  %244 = vmatpush2.bf16.msra.mxu0 0
  %245 = vmatprep.subr.bf16.mxu0 0
  %246 = vmatpush2.bf16.msra.mxu0 0
  %247 = vmatprep.subr.bf16.mxu0 0
  %248 = vmatpush2.bf16.msra.mxu0 0
  %249 = vmatprep.subr.bf16.mxu0 0
  %250 = vmatpush2.bf16.msra.mxu0 0
  %251 = vmatprep.subr.bf16.mxu0 0
  %252 = vmatpush2.bf16.msra.mxu0 0
  %253 = vmatprep.subr.bf16.mxu0 0
  %254 = vmatpush2.bf16.msra.mxu0 0
  %255 = vmatprep.subr.bf16.mxu0 0
  %256 = vmatpush2.bf16.msra.mxu0 0
  %257 = vmatprep.subr.bf16.mxu0 0
  %258 = vmatpush2.bf16.msra.mxu0 0
  %259 = vmatprep.mubr.bf16.mxu0 0
  %260 = vmatmul.mubr.bf16.gmra.mxu0 %v209
  %v261 = vpop.f32.mrf.mxu0
  %v262 = vadd.f32 %v145, %v261
  %v263 = vpop.f32.mrf.mxu0
  %v264 = vadd.f32 %v149, %v263
  %v265 = vpop.f32.mrf.mxu0
  %v266 = vadd.f32 %v145, %v265
  %v267 = vpop.f32.mrf.mxu0
  %v268 = vadd.f32 %v149, %v267
  %269 = vmatprep.mubr.bf16.mxu0 0
  %270 = vmatmul.mubr.bf16.gmra.mxu0 %v212
  %v271 = vpop.f32.mrf.mxu0
  %v272 = vadd.f32 %v145, %v271
  %v273 = vpop.f32.mrf.mxu0
  %v274 = vadd.f32 %v149, %v273
  %v275 = vpop.f32.mrf.mxu0
  %v276 = vadd.f32 %v145, %v275
  %v277 = vpop.f32.mrf.mxu0
  %v278 = vadd.f32 %v149, %v277
  %279 = vmatprep.mubr.bf16.mxu0 0
  %280 = vmatmul.mubr.bf16.gmra.mxu0 %v215
  %v281 = vpop.f32.mrf.mxu0
  %v282 = vadd.f32 %v145, %v281
  %v283 = vpop.f32.mrf.mxu0
  %v284 = vadd.f32 %v149, %v283
  %v285 = vpop.f32.mrf.mxu0
  %v286 = vadd.f32 %v145, %v285
  %v287 = vpop.f32.mrf.mxu0
  %v288 = vadd.f32 %v149, %v287
  %289 = vmatprep.mubr.bf16.mxu0 0
  %290 = vmatmul.mubr.bf16.gmra.mxu0 %v218
  %v291 = vpop.f32.mrf.mxu0
  %v292 = vadd.f32 %v145, %v291
  %v293 = vpop.f32.mrf.mxu0
  %v294 = vadd.f32 %v149, %v293
  %v295 = vpop.f32.mrf.mxu0
  %v296 = vadd.f32 %v145, %v295
  %v297 = vpop.f32.mrf.mxu0
  %v298 = vadd.f32 %v149, %v297
  %299 = vdwg.mxu0
  %v300 = vld [vmem:[%s4] sm:$0xf]
  %v301 = vld [vmem:[%s4 + $0x4] sm:$0xf]
  %v302 = vld [vmem:[%s4 + $0x8] sm:$0xf]
  %v303 = vld [vmem:[%s4 + $0xc] sm:$0xf]
  %s304 = scalar_lea.vmem %s4, 16
  %v305 = vld [vmem:[%s304] sm:$0xf]
  %v306 = vld [vmem:[%s304 + $0x4] sm:$0xf]
  %v307 = vld [vmem:[%s304 + $0x8] sm:$0xf]
  %v308 = vld [vmem:[%s304 + $0xc] sm:$0xf]
  %v309 = vld [vmem:[%s5] sm:$0x1]
  %v311 = vlaneseq
  %v312 = vshrl.u32 %v311, 7
  %v313 = vsub.s32 0, %v312
  %v314 = vrot.slane %v309, %v313
  %s316 = scalar_lea.vmem %s5, 1
  %v317 = vld [vmem:[%s316] sm:$0x1]
  %v319 = vlaneseq
  %v320 = vshrl.u32 %v319, 7
  %v321 = vsub.s32 0, %v320
  %v322 = vrot.slane %v317, %v321
  %v328 = vunpack.c.l.b16 %v300
  %v329 = vunpack.c.l.b16 %v301
  %v330 = vunpack.c.l.b16 %v302
  %v331 = vunpack.c.l.b16 %v303
  %v332 = vpack.c.b16 %v329, %v328
  %v333 = vpack.c.b16 %v331, %v330
  %vm336 = vcmask 261120
  %v338 = vsel %vm336, 0, 0
  %340 = vmatprep.subr.bf16.mxu0 0
  %341 = vmatpush1.bf16.msra.mxu0 0
  %342 = vmatprep.subr.bf16.mxu0 0
  %343 = vmatpush1.bf16.msra.mxu0 0
  %344 = vmatprep.subr.bf16.mxu0 0
  %345 = vmatpush1.bf16.msra.mxu0 0
  %346 = vmatprep.subr.bf16.mxu0 0
  %347 = vmatpush1.bf16.msra.mxu0 0
  %348 = vmatprep.subr.bf16.mxu0 0
  %349 = vmatpush1.bf16.msra.mxu0 0
  %350 = vmatprep.subr.bf16.mxu0 0
  %351 = vmatpush1.bf16.msra.mxu0 0
  %352 = vmatprep.subr.bf16.mxu0 0
  %353 = vmatpush1.bf16.msra.mxu0 %v333
  %354 = vmatprep.subr.bf16.mxu0 0
  %355 = vmatpush1.bf16.msra.mxu0 %v332
  %356 = vmatprep.subr.bf16.mxu0 0
  %357 = vmatpush2.bf16.msra.mxu0 0
  %358 = vmatprep.subr.bf16.mxu0 0
  %359 = vmatpush2.bf16.msra.mxu0 0
  %360 = vmatprep.subr.bf16.mxu0 0
  %361 = vmatpush2.bf16.msra.mxu0 0
  %362 = vmatprep.subr.bf16.mxu0 0
  %363 = vmatpush2.bf16.msra.mxu0 0
  %364 = vmatprep.subr.bf16.mxu0 0
  %365 = vmatpush2.bf16.msra.mxu0 0
  %366 = vmatprep.subr.bf16.mxu0 0
  %367 = vmatpush2.bf16.msra.mxu0 0
  %368 = vmatprep.subr.bf16.mxu0 0
  %369 = vmatpush2.bf16.msra.mxu0 0
  %370 = vmatprep.subr.bf16.mxu0 0
  %371 = vmatpush2.bf16.msra.mxu0 0
  %372 = vmatprep.mubr.bf16.mxu0 0
  %373 = vmatmul.mubr.bf16.gmra.mxu0 %v338
  %v374 = vpop.f32.mrf.mxu0
  %v375 = vadd.f32 %v314, %v374
  %v376 = vpop.f32.mrf.mxu0
  %v377 = vpop.f32.mrf.mxu0
  %v378 = vpop.f32.mrf.mxu0
  %379 = vdwg.mxu0
  %v380 = vadd.f32 %v262, %v375
  %v381 = vxor.u32 %v380, 2147483648
  %v382 = vmul.f32 %v381, 1.442695
  %v383 = vpow.pop %v382
  %v384 = vadd.f32 %v383, 1.0
  %v385 = vrcp.pop %v384
  %v386 = vmul.f32 1.0, %v385
  %388 = vrot.lane.b32.xlu0 %v375, 64
  %v389 = vpop.permute.xlu0 %388
  %v391 = vmul.f32 %v386, %v389
  %393 = vrot.lane.b32.xlu0 %v391, 64
  %v394 = vpop.permute.xlu0 %393
  %v396 = vadd.f32 %v262, %v394
  %v397 = vtanh.pop %v396
  %v398 = vsub.f32 1.0, %v386
  %400 = vrot.lane.b32.xlu0 %v397, 96
  %v401 = vpop.permute.xlu0 %400
  %v403 = vmul.f32 %v398, %v401
  %v404 = vmul.f32 %v386, 0.0
  %v405 = vadd.f32 %v403, %v404
  %v406 = vmul.f32 %v67, %v405
  %v407 = vadd.f32 %v406, 0.0
  %v412 = vunpack.c.l.b16 %v305
  %v413 = vunpack.c.l.b16 %v306
  %v414 = vunpack.c.l.b16 %v307
  %v415 = vunpack.c.l.b16 %v308
  %v416 = vpack.c.b16 %v413, %v412
  %v417 = vpack.c.b16 %v415, %v414
  %420 = vmatprep.subr.bf16.mxu0 0
  %421 = vmatpush1.bf16.msra.mxu0 0
  %422 = vmatprep.subr.bf16.mxu0 0
  %423 = vmatpush1.bf16.msra.mxu0 0
  %424 = vmatprep.subr.bf16.mxu0 0
  %425 = vmatpush1.bf16.msra.mxu0 0
  %426 = vmatprep.subr.bf16.mxu0 0
  %427 = vmatpush1.bf16.msra.mxu0 0
  %428 = vmatprep.subr.bf16.mxu0 0
  %429 = vmatpush1.bf16.msra.mxu0 0
  %430 = vmatprep.subr.bf16.mxu0 0
  %431 = vmatpush1.bf16.msra.mxu0 0
  %432 = vmatprep.subr.bf16.mxu0 0
  %433 = vmatpush1.bf16.msra.mxu0 %v417
  %434 = vmatprep.subr.bf16.mxu0 0
  %435 = vmatpush1.bf16.msra.mxu0 %v416
  %436 = vmatprep.subr.bf16.mxu0 0
  %437 = vmatpush2.bf16.msra.mxu0 0
  %438 = vmatprep.subr.bf16.mxu0 0
  %439 = vmatpush2.bf16.msra.mxu0 0
  %440 = vmatprep.subr.bf16.mxu0 0
  %441 = vmatpush2.bf16.msra.mxu0 0
  %442 = vmatprep.subr.bf16.mxu0 0
  %443 = vmatpush2.bf16.msra.mxu0 0
  %444 = vmatprep.subr.bf16.mxu0 0
  %445 = vmatpush2.bf16.msra.mxu0 0
  %446 = vmatprep.subr.bf16.mxu0 0
  %447 = vmatpush2.bf16.msra.mxu0 0
  %448 = vmatprep.subr.bf16.mxu0 0
  %449 = vmatpush2.bf16.msra.mxu0 0
  %450 = vmatprep.subr.bf16.mxu0 0
  %451 = vmatpush2.bf16.msra.mxu0 0
  %452 = vmatprep.mubr.bf16.mxu0 0
  %453 = vmatmul.mubr.bf16.gmra.mxu0 %v338
  %v454 = vpop.f32.mrf.mxu0
  %v455 = vadd.f32 %v322, %v454
  %v456 = vpop.f32.mrf.mxu0
  %v457 = vpop.f32.mrf.mxu0
  %v458 = vpop.f32.mrf.mxu0
  %459 = vdwg.mxu0
  %v460 = vadd.f32 %v298, %v455
  %v461 = vxor.u32 %v460, 2147483648
  %v462 = vmul.f32 %v461, 1.442695
  %v463 = vpow.pop %v462
  %v464 = vadd.f32 %v463, 1.0
  %v465 = vrcp.pop %v464
  %v466 = vmul.f32 1.0, %v465
  %468 = vrot.lane.b32.xlu0 %v455, 64
  %v469 = vpop.permute.xlu0 %468
  %v471 = vmul.f32 %v466, %v469
  %473 = vrot.lane.b32.xlu0 %v471, 64
  %v474 = vpop.permute.xlu0 %473
  %v476 = vadd.f32 %v298, %v474
  %v477 = vtanh.pop %v476
  %v478 = vsub.f32 1.0, %v466
  %480 = vrot.lane.b32.xlu0 %v477, 96
  %v481 = vpop.permute.xlu0 %480
  %v483 = vmul.f32 %v478, %v481
  %v484 = vmul.f32 %v466, 0.0
  %v485 = vadd.f32 %v483, %v484
  %v486 = vmul.f32 %v123, %v485
  %v487 = vadd.f32 %v486, 0.0
  %v488 = vpack.c.bf16 %v407, %v407
  %490 = vrot.lane.b32.xlu0 %v488, 96
  %v491 = vpop.permute.xlu0 %490
  %v493 = vsel %vm336, %v491, 0
  %495 = vmatprep.subr.bf16.mxu0 0
  %496 = vmatpush1.bf16.msra.mxu0 0
  %497 = vmatprep.subr.bf16.mxu0 0
  %498 = vmatpush1.bf16.msra.mxu0 0
  %499 = vmatprep.subr.bf16.mxu0 0
  %500 = vmatpush1.bf16.msra.mxu0 0
  %501 = vmatprep.subr.bf16.mxu0 0
  %502 = vmatpush1.bf16.msra.mxu0 0
  %503 = vmatprep.subr.bf16.mxu0 0
  %504 = vmatpush1.bf16.msra.mxu0 0
  %505 = vmatprep.subr.bf16.mxu0 0
  %506 = vmatpush1.bf16.msra.mxu0 0
  %507 = vmatprep.subr.bf16.mxu0 0
  %508 = vmatpush1.bf16.msra.mxu0 %v333
  %509 = vmatprep.subr.bf16.mxu0 0
  %510 = vmatpush1.bf16.msra.mxu0 %v332
  %511 = vmatprep.subr.bf16.mxu0 0
  %512 = vmatpush2.bf16.msra.mxu0 0
  %513 = vmatprep.subr.bf16.mxu0 0
  %514 = vmatpush2.bf16.msra.mxu0 0
  %515 = vmatprep.subr.bf16.mxu0 0
  %516 = vmatpush2.bf16.msra.mxu0 0
  %517 = vmatprep.subr.bf16.mxu0 0
  %518 = vmatpush2.bf16.msra.mxu0 0
  %519 = vmatprep.subr.bf16.mxu0 0
  %520 = vmatpush2.bf16.msra.mxu0 0
  %521 = vmatprep.subr.bf16.mxu0 0
  %522 = vmatpush2.bf16.msra.mxu0 0
  %523 = vmatprep.subr.bf16.mxu0 0
  %524 = vmatpush2.bf16.msra.mxu0 0
  %525 = vmatprep.subr.bf16.mxu0 0
  %526 = vmatpush2.bf16.msra.mxu0 0
  %527 = vmatprep.mubr.bf16.mxu0 0
  %528 = vmatmul.mubr.bf16.gmra.mxu0 %v493
  %v529 = vpop.f32.mrf.mxu0
  %v530 = vadd.f32 %v314, %v529
  %v531 = vpop.f32.mrf.mxu0
  %v532 = vpop.f32.mrf.mxu0
  %v533 = vpop.f32.mrf.mxu0
  %534 = vdwg.mxu0
  %v535 = vadd.f32 %v266, %v530
  %v536 = vxor.u32 %v535, 2147483648
  %v537 = vmul.f32 %v536, 1.442695
  %v538 = vpow.pop %v537
  %v539 = vadd.f32 %v538, 1.0
  %v540 = vrcp.pop %v539
  %v541 = vmul.f32 1.0, %v540
  %543 = vrot.lane.b32.xlu0 %v530, 64
  %v544 = vpop.permute.xlu0 %543
  %v546 = vmul.f32 %v541, %v544
  %548 = vrot.lane.b32.xlu0 %v546, 64
  %v549 = vpop.permute.xlu0 %548
  %v551 = vadd.f32 %v266, %v549
  %v552 = vtanh.pop %v551
  %v553 = vsub.f32 1.0, %v541
  %555 = vrot.lane.b32.xlu0 %v552, 96
  %v556 = vpop.permute.xlu0 %555
  %v558 = vmul.f32 %v553, %v556
  %v559 = vmul.f32 %v541, %v407
  %v560 = vadd.f32 %v558, %v559
  %v561 = vmul.f32 %v75, %v560
  %v562 = vsub.f32 %v560, %v407
  %v563 = vmul.f32 %v75, %v562
  %v564 = vadd.f32 %v407, %v563
  %v565 = vpack.c.bf16 %v487, %v487
  %567 = vrot.lane.b32.xlu0 %v565, 96
  %v568 = vpop.permute.xlu0 %567
  %v570 = vsel %vm336, %v568, 0
  %572 = vmatprep.subr.bf16.mxu0 0
  %573 = vmatpush1.bf16.msra.mxu0 0
  %574 = vmatprep.subr.bf16.mxu0 0
  %575 = vmatpush1.bf16.msra.mxu0 0
  %576 = vmatprep.subr.bf16.mxu0 0
  %577 = vmatpush1.bf16.msra.mxu0 0
  %578 = vmatprep.subr.bf16.mxu0 0
  %579 = vmatpush1.bf16.msra.mxu0 0
  %580 = vmatprep.subr.bf16.mxu0 0
  %581 = vmatpush1.bf16.msra.mxu0 0
  %582 = vmatprep.subr.bf16.mxu0 0
  %583 = vmatpush1.bf16.msra.mxu0 0
  %584 = vmatprep.subr.bf16.mxu0 0
  %585 = vmatpush1.bf16.msra.mxu0 %v417
  %586 = vmatprep.subr.bf16.mxu0 0
  %587 = vmatpush1.bf16.msra.mxu0 %v416
  %588 = vmatprep.subr.bf16.mxu0 0
  %589 = vmatpush2.bf16.msra.mxu0 0
  %590 = vmatprep.subr.bf16.mxu0 0
  %591 = vmatpush2.bf16.msra.mxu0 0
  %592 = vmatprep.subr.bf16.mxu0 0
  %593 = vmatpush2.bf16.msra.mxu0 0
  %594 = vmatprep.subr.bf16.mxu0 0
  %595 = vmatpush2.bf16.msra.mxu0 0
  %596 = vmatprep.subr.bf16.mxu0 0
  %597 = vmatpush2.bf16.msra.mxu0 0
  %598 = vmatprep.subr.bf16.mxu0 0
  %599 = vmatpush2.bf16.msra.mxu0 0
  %600 = vmatprep.subr.bf16.mxu0 0
  %601 = vmatpush2.bf16.msra.mxu0 0
  %602 = vmatprep.subr.bf16.mxu0 0
  %603 = vmatpush2.bf16.msra.mxu0 0
  %604 = vmatprep.mubr.bf16.mxu0 0
  %605 = vmatmul.mubr.bf16.gmra.mxu0 %v570
  %v606 = vpop.f32.mrf.mxu0
  %v607 = vadd.f32 %v322, %v606
  %v608 = vpop.f32.mrf.mxu0
  %v609 = vpop.f32.mrf.mxu0
  %v610 = vpop.f32.mrf.mxu0
  %611 = vdwg.mxu0
  %v612 = vadd.f32 %v294, %v607
  %v613 = vxor.u32 %v612, 2147483648
  %v614 = vmul.f32 %v613, 1.442695
  %v615 = vpow.pop %v614
  %v616 = vadd.f32 %v615, 1.0
  %v617 = vrcp.pop %v616
  %v618 = vmul.f32 1.0, %v617
  %620 = vrot.lane.b32.xlu0 %v607, 64
  %v621 = vpop.permute.xlu0 %620
  %v623 = vmul.f32 %v618, %v621
  %625 = vrot.lane.b32.xlu0 %v623, 64
  %v626 = vpop.permute.xlu0 %625
  %v628 = vadd.f32 %v294, %v626
  %v629 = vtanh.pop %v628
  %v630 = vsub.f32 1.0, %v618
  %632 = vrot.lane.b32.xlu0 %v629, 96
  %v633 = vpop.permute.xlu0 %632
  %v635 = vmul.f32 %v630, %v633
  %v636 = vmul.f32 %v618, %v487
  %v637 = vadd.f32 %v635, %v636
  %v638 = vmul.f32 %v115, %v637
  %v639 = vsub.f32 %v637, %v487
  %v640 = vmul.f32 %v115, %v639
  %v641 = vadd.f32 %v487, %v640
  %v642 = vpack.c.bf16 %v564, %v564
  %644 = vrot.lane.b32.xlu0 %v642, 96
  %v645 = vpop.permute.xlu0 %644
  %v647 = vsel %vm336, %v645, 0
  %649 = vmatprep.subr.bf16.mxu0 0
  %650 = vmatpush1.bf16.msra.mxu0 0
  %651 = vmatprep.subr.bf16.mxu0 0
  %652 = vmatpush1.bf16.msra.mxu0 0
  %653 = vmatprep.subr.bf16.mxu0 0
  %654 = vmatpush1.bf16.msra.mxu0 0
  %655 = vmatprep.subr.bf16.mxu0 0
  %656 = vmatpush1.bf16.msra.mxu0 0
  %657 = vmatprep.subr.bf16.mxu0 0
  %658 = vmatpush1.bf16.msra.mxu0 0
  %659 = vmatprep.subr.bf16.mxu0 0
  %660 = vmatpush1.bf16.msra.mxu0 0
  %661 = vmatprep.subr.bf16.mxu0 0
  %662 = vmatpush1.bf16.msra.mxu0 %v333
  %663 = vmatprep.subr.bf16.mxu0 0
  %664 = vmatpush1.bf16.msra.mxu0 %v332
  %665 = vmatprep.subr.bf16.mxu0 0
  %666 = vmatpush2.bf16.msra.mxu0 0
  %667 = vmatprep.subr.bf16.mxu0 0
  %668 = vmatpush2.bf16.msra.mxu0 0
  %669 = vmatprep.subr.bf16.mxu0 0
  %670 = vmatpush2.bf16.msra.mxu0 0
  %671 = vmatprep.subr.bf16.mxu0 0
  %672 = vmatpush2.bf16.msra.mxu0 0
  %673 = vmatprep.subr.bf16.mxu0 0
  %674 = vmatpush2.bf16.msra.mxu0 0
  %675 = vmatprep.subr.bf16.mxu0 0
  %676 = vmatpush2.bf16.msra.mxu0 0
  %677 = vmatprep.subr.bf16.mxu0 0
  %678 = vmatpush2.bf16.msra.mxu0 0
  %679 = vmatprep.subr.bf16.mxu0 0
  %680 = vmatpush2.bf16.msra.mxu0 0
  %681 = vmatprep.mubr.bf16.mxu0 0
  %682 = vmatmul.mubr.bf16.gmra.mxu0 %v647
  %v683 = vpop.f32.mrf.mxu0
  %v684 = vadd.f32 %v314, %v683
  %v685 = vpop.f32.mrf.mxu0
  %v686 = vpop.f32.mrf.mxu0
  %v687 = vpop.f32.mrf.mxu0
  %688 = vdwg.mxu0
  %v689 = vadd.f32 %v272, %v684
  %v690 = vxor.u32 %v689, 2147483648
  %v691 = vmul.f32 %v690, 1.442695
  %v692 = vpow.pop %v691
  %v693 = vadd.f32 %v692, 1.0
  %v694 = vrcp.pop %v693
  %v695 = vmul.f32 1.0, %v694
  %697 = vrot.lane.b32.xlu0 %v684, 64
  %v698 = vpop.permute.xlu0 %697
  %v700 = vmul.f32 %v695, %v698
  %702 = vrot.lane.b32.xlu0 %v700, 64
  %v703 = vpop.permute.xlu0 %702
  %v705 = vadd.f32 %v272, %v703
  %v706 = vtanh.pop %v705
  %v707 = vsub.f32 1.0, %v695
  %709 = vrot.lane.b32.xlu0 %v706, 96
  %v710 = vpop.permute.xlu0 %709
  %v712 = vmul.f32 %v707, %v710
  %v713 = vmul.f32 %v695, %v564
  %v714 = vadd.f32 %v712, %v713
  %v715 = vmul.f32 %v83, %v714
  %v716 = vsub.f32 %v714, %v564
  %v717 = vmul.f32 %v83, %v716
  %v718 = vadd.f32 %v564, %v717
  %v719 = vpack.c.bf16 %v641, %v641
  %721 = vrot.lane.b32.xlu0 %v719, 96
  %v722 = vpop.permute.xlu0 %721
  %v724 = vsel %vm336, %v722, 0
  %726 = vmatprep.subr.bf16.mxu0 0
  %727 = vmatpush1.bf16.msra.mxu0 0
  %728 = vmatprep.subr.bf16.mxu0 0
  %729 = vmatpush1.bf16.msra.mxu0 0
  %730 = vmatprep.subr.bf16.mxu0 0
  %731 = vmatpush1.bf16.msra.mxu0 0
  %732 = vmatprep.subr.bf16.mxu0 0
  %733 = vmatpush1.bf16.msra.mxu0 0
  %734 = vmatprep.subr.bf16.mxu0 0
  %735 = vmatpush1.bf16.msra.mxu0 0
  %736 = vmatprep.subr.bf16.mxu0 0
  %737 = vmatpush1.bf16.msra.mxu0 0
  %738 = vmatprep.subr.bf16.mxu0 0
  %739 = vmatpush1.bf16.msra.mxu0 %v417
  %740 = vmatprep.subr.bf16.mxu0 0
  %741 = vmatpush1.bf16.msra.mxu0 %v416
  %742 = vmatprep.subr.bf16.mxu0 0
  %743 = vmatpush2.bf16.msra.mxu0 0
  %744 = vmatprep.subr.bf16.mxu0 0
  %745 = vmatpush2.bf16.msra.mxu0 0
  %746 = vmatprep.subr.bf16.mxu0 0
  %747 = vmatpush2.bf16.msra.mxu0 0
  %748 = vmatprep.subr.bf16.mxu0 0
  %749 = vmatpush2.bf16.msra.mxu0 0
  %750 = vmatprep.subr.bf16.mxu0 0
  %751 = vmatpush2.bf16.msra.mxu0 0
  %752 = vmatprep.subr.bf16.mxu0 0
  %753 = vmatpush2.bf16.msra.mxu0 0
  %754 = vmatprep.subr.bf16.mxu0 0
  %755 = vmatpush2.bf16.msra.mxu0 0
  %756 = vmatprep.subr.bf16.mxu0 0
  %757 = vmatpush2.bf16.msra.mxu0 0
  %758 = vmatprep.mubr.bf16.mxu0 0
  %759 = vmatmul.mubr.bf16.gmra.mxu0 %v724
  %v760 = vpop.f32.mrf.mxu0
  %v761 = vadd.f32 %v322, %v760
  %v762 = vpop.f32.mrf.mxu0
  %v763 = vpop.f32.mrf.mxu0
  %v764 = vpop.f32.mrf.mxu0
  %765 = vdwg.mxu0
  %v766 = vadd.f32 %v288, %v761
  %v767 = vxor.u32 %v766, 2147483648
  %v768 = vmul.f32 %v767, 1.442695
  %v769 = vpow.pop %v768
  %v770 = vadd.f32 %v769, 1.0
  %v771 = vrcp.pop %v770
  %v772 = vmul.f32 1.0, %v771
  %774 = vrot.lane.b32.xlu0 %v761, 64
  %v775 = vpop.permute.xlu0 %774
  %v777 = vmul.f32 %v772, %v775
  %779 = vrot.lane.b32.xlu0 %v777, 64
  %v780 = vpop.permute.xlu0 %779
  %v782 = vadd.f32 %v288, %v780
  %v783 = vtanh.pop %v782
  %v784 = vsub.f32 1.0, %v772
  %786 = vrot.lane.b32.xlu0 %v783, 96
  %v787 = vpop.permute.xlu0 %786
  %v789 = vmul.f32 %v784, %v787
  %v790 = vmul.f32 %v772, %v641
  %v791 = vadd.f32 %v789, %v790
  %v792 = vmul.f32 %v107, %v791
  %v793 = vsub.f32 %v791, %v641
  %v794 = vmul.f32 %v107, %v793
  %v795 = vadd.f32 %v641, %v794
  %v796 = vpack.c.bf16 %v718, %v718
  %798 = vrot.lane.b32.xlu0 %v796, 96
  %v799 = vpop.permute.xlu0 %798
  %v801 = vsel %vm336, %v799, 0
  %803 = vmatprep.subr.bf16.mxu0 0
  %804 = vmatpush1.bf16.msra.mxu0 0
  %805 = vmatprep.subr.bf16.mxu0 0
  %806 = vmatpush1.bf16.msra.mxu0 0
  %807 = vmatprep.subr.bf16.mxu0 0
  %808 = vmatpush1.bf16.msra.mxu0 0
  %809 = vmatprep.subr.bf16.mxu0 0
  %810 = vmatpush1.bf16.msra.mxu0 0
  %811 = vmatprep.subr.bf16.mxu0 0
  %812 = vmatpush1.bf16.msra.mxu0 0
  %813 = vmatprep.subr.bf16.mxu0 0
  %814 = vmatpush1.bf16.msra.mxu0 0
  %815 = vmatprep.subr.bf16.mxu0 0
  %816 = vmatpush1.bf16.msra.mxu0 %v333
  %817 = vmatprep.subr.bf16.mxu0 0
  %818 = vmatpush1.bf16.msra.mxu0 %v332
  %819 = vmatprep.subr.bf16.mxu0 0
  %820 = vmatpush2.bf16.msra.mxu0 0
  %821 = vmatprep.subr.bf16.mxu0 0
  %822 = vmatpush2.bf16.msra.mxu0 0
  %823 = vmatprep.subr.bf16.mxu0 0
  %824 = vmatpush2.bf16.msra.mxu0 0
  %825 = vmatprep.subr.bf16.mxu0 0
  %826 = vmatpush2.bf16.msra.mxu0 0
  %827 = vmatprep.subr.bf16.mxu0 0
  %828 = vmatpush2.bf16.msra.mxu0 0
  %829 = vmatprep.subr.bf16.mxu0 0
  %830 = vmatpush2.bf16.msra.mxu0 0
  %831 = vmatprep.subr.bf16.mxu0 0
  %832 = vmatpush2.bf16.msra.mxu0 0
  %833 = vmatprep.subr.bf16.mxu0 0
  %834 = vmatpush2.bf16.msra.mxu0 0
  %835 = vmatprep.mubr.bf16.mxu0 0
  %836 = vmatmul.mubr.bf16.gmra.mxu0 %v801
  %v837 = vpop.f32.mrf.mxu0
  %v838 = vadd.f32 %v314, %v837
  %v839 = vpop.f32.mrf.mxu0
  %v840 = vpop.f32.mrf.mxu0
  %v841 = vpop.f32.mrf.mxu0
  %842 = vdwg.mxu0
  %v843 = vadd.f32 %v276, %v838
  %v844 = vxor.u32 %v843, 2147483648
  %v845 = vmul.f32 %v844, 1.442695
  %v846 = vpow.pop %v845
  %v847 = vadd.f32 %v846, 1.0
  %v848 = vrcp.pop %v847
  %v849 = vmul.f32 1.0, %v848
  %851 = vrot.lane.b32.xlu0 %v838, 64
  %v852 = vpop.permute.xlu0 %851
  %v854 = vmul.f32 %v849, %v852
  %856 = vrot.lane.b32.xlu0 %v854, 64
  %v857 = vpop.permute.xlu0 %856
  %v859 = vadd.f32 %v276, %v857
  %v860 = vtanh.pop %v859
  %v861 = vsub.f32 1.0, %v849
  %863 = vrot.lane.b32.xlu0 %v860, 96
  %v864 = vpop.permute.xlu0 %863
  %v866 = vmul.f32 %v861, %v864
  %v867 = vmul.f32 %v849, %v718
  %v868 = vadd.f32 %v866, %v867
  %v869 = vmul.f32 %v91, %v868
  %v870 = vsub.f32 %v868, %v718
  %v871 = vmul.f32 %v91, %v870
  %v872 = vadd.f32 %v718, %v871
  %v873 = vpack.c.bf16 %v795, %v795
  %875 = vrot.lane.b32.xlu0 %v873, 96
  %v876 = vpop.permute.xlu0 %875
  %v878 = vsel %vm336, %v876, 0
  %880 = vmatprep.subr.bf16.mxu0 0
  %881 = vmatpush1.bf16.msra.mxu0 0
  %882 = vmatprep.subr.bf16.mxu0 0
  %883 = vmatpush1.bf16.msra.mxu0 0
  %884 = vmatprep.subr.bf16.mxu0 0
  %885 = vmatpush1.bf16.msra.mxu0 0
  %886 = vmatprep.subr.bf16.mxu0 0
  %887 = vmatpush1.bf16.msra.mxu0 0
  %888 = vmatprep.subr.bf16.mxu0 0
  %889 = vmatpush1.bf16.msra.mxu0 0
  %890 = vmatprep.subr.bf16.mxu0 0
  %891 = vmatpush1.bf16.msra.mxu0 0
  %892 = vmatprep.subr.bf16.mxu0 0
  %893 = vmatpush1.bf16.msra.mxu0 %v417
  %894 = vmatprep.subr.bf16.mxu0 0
  %895 = vmatpush1.bf16.msra.mxu0 %v416
  %896 = vmatprep.subr.bf16.mxu0 0
  %897 = vmatpush2.bf16.msra.mxu0 0
  %898 = vmatprep.subr.bf16.mxu0 0
  %899 = vmatpush2.bf16.msra.mxu0 0
  %900 = vmatprep.subr.bf16.mxu0 0
  %901 = vmatpush2.bf16.msra.mxu0 0
  %902 = vmatprep.subr.bf16.mxu0 0
  %903 = vmatpush2.bf16.msra.mxu0 0
  %904 = vmatprep.subr.bf16.mxu0 0
  %905 = vmatpush2.bf16.msra.mxu0 0
  %906 = vmatprep.subr.bf16.mxu0 0
  %907 = vmatpush2.bf16.msra.mxu0 0
  %908 = vmatprep.subr.bf16.mxu0 0
  %909 = vmatpush2.bf16.msra.mxu0 0
  %910 = vmatprep.subr.bf16.mxu0 0
  %911 = vmatpush2.bf16.msra.mxu0 0
  %912 = vmatprep.mubr.bf16.mxu0 0
  %913 = vmatmul.mubr.bf16.gmra.mxu0 %v878
  %v914 = vpop.f32.mrf.mxu0
  %v915 = vadd.f32 %v322, %v914
  %v916 = vpop.f32.mrf.mxu0
  %v917 = vpop.f32.mrf.mxu0
  %v918 = vpop.f32.mrf.mxu0
  %919 = vdwg.mxu0
  %v920 = vadd.f32 %v284, %v915
  %v921 = vxor.u32 %v920, 2147483648
  %v922 = vmul.f32 %v921, 1.442695
  %v923 = vpow.pop %v922
  %v924 = vadd.f32 %v923, 1.0
  %v925 = vrcp.pop %v924
  %v926 = vmul.f32 1.0, %v925
  %928 = vrot.lane.b32.xlu0 %v915, 64
  %v929 = vpop.permute.xlu0 %928
  %v931 = vmul.f32 %v926, %v929
  %933 = vrot.lane.b32.xlu0 %v931, 64
  %v934 = vpop.permute.xlu0 %933
  %v936 = vadd.f32 %v284, %v934
  %v937 = vtanh.pop %v936
  %v938 = vsub.f32 1.0, %v926
  %940 = vrot.lane.b32.xlu0 %v937, 96
  %v941 = vpop.permute.xlu0 %940
  %v943 = vmul.f32 %v938, %v941
  %v944 = vmul.f32 %v926, %v795
  %v945 = vadd.f32 %v943, %v944
  %v946 = vmul.f32 %v99, %v945
  %v947 = vsub.f32 %v945, %v795
  %v948 = vmul.f32 %v99, %v947
  %v949 = vadd.f32 %v795, %v948
  %v950 = vpack.c.bf16 %v872, %v872
  %952 = vrot.lane.b32.xlu0 %v950, 96
  %v953 = vpop.permute.xlu0 %952
  %v955 = vsel %vm336, %v953, 0
  %957 = vmatprep.subr.bf16.mxu0 0
  %958 = vmatpush1.bf16.msra.mxu0 0
  %959 = vmatprep.subr.bf16.mxu0 0
  %960 = vmatpush1.bf16.msra.mxu0 0
  %961 = vmatprep.subr.bf16.mxu0 0
  %962 = vmatpush1.bf16.msra.mxu0 0
  %963 = vmatprep.subr.bf16.mxu0 0
  %964 = vmatpush1.bf16.msra.mxu0 0
  %965 = vmatprep.subr.bf16.mxu0 0
  %966 = vmatpush1.bf16.msra.mxu0 0
  %967 = vmatprep.subr.bf16.mxu0 0
  %968 = vmatpush1.bf16.msra.mxu0 0
  %969 = vmatprep.subr.bf16.mxu0 0
  %970 = vmatpush1.bf16.msra.mxu0 %v333
  %971 = vmatprep.subr.bf16.mxu0 0
  %972 = vmatpush1.bf16.msra.mxu0 %v332
  %973 = vmatprep.subr.bf16.mxu0 0
  %974 = vmatpush2.bf16.msra.mxu0 0
  %975 = vmatprep.subr.bf16.mxu0 0
  %976 = vmatpush2.bf16.msra.mxu0 0
  %977 = vmatprep.subr.bf16.mxu0 0
  %978 = vmatpush2.bf16.msra.mxu0 0
  %979 = vmatprep.subr.bf16.mxu0 0
  %980 = vmatpush2.bf16.msra.mxu0 0
  %981 = vmatprep.subr.bf16.mxu0 0
  %982 = vmatpush2.bf16.msra.mxu0 0
  %983 = vmatprep.subr.bf16.mxu0 0
  %984 = vmatpush2.bf16.msra.mxu0 0
  %985 = vmatprep.subr.bf16.mxu0 0
  %986 = vmatpush2.bf16.msra.mxu0 0
  %987 = vmatprep.subr.bf16.mxu0 0
  %988 = vmatpush2.bf16.msra.mxu0 0
  %989 = vmatprep.mubr.bf16.mxu0 0
  %990 = vmatmul.mubr.bf16.gmra.mxu0 %v955
  %v991 = vpop.f32.mrf.mxu0
  %v992 = vadd.f32 %v314, %v991
  %v993 = vpop.f32.mrf.mxu0
  %v994 = vpop.f32.mrf.mxu0
  %v995 = vpop.f32.mrf.mxu0
  %996 = vdwg.mxu0
  %v997 = vadd.f32 %v282, %v992
  %v998 = vxor.u32 %v997, 2147483648
  %v999 = vmul.f32 %v998, 1.442695
  %v1000 = vpow.pop %v999
  %v1001 = vadd.f32 %v1000, 1.0
  %v1002 = vrcp.pop %v1001
  %v1003 = vmul.f32 1.0, %v1002
  %1005 = vrot.lane.b32.xlu0 %v992, 64
  %v1006 = vpop.permute.xlu0 %1005
  %v1008 = vmul.f32 %v1003, %v1006
  %1010 = vrot.lane.b32.xlu0 %v1008, 64
  %v1011 = vpop.permute.xlu0 %1010
  %v1013 = vadd.f32 %v282, %v1011
  %v1014 = vtanh.pop %v1013
  %v1015 = vsub.f32 1.0, %v1003
  %1017 = vrot.lane.b32.xlu0 %v1014, 96
  %v1018 = vpop.permute.xlu0 %1017
  %v1020 = vmul.f32 %v1015, %v1018
  %v1021 = vmul.f32 %v1003, %v872
  %v1022 = vadd.f32 %v1020, %v1021
  %v1023 = vmul.f32 %v99, %v1022
  %v1024 = vsub.f32 %v1022, %v872
  %v1025 = vmul.f32 %v99, %v1024
  %v1026 = vadd.f32 %v872, %v1025
  %v1027 = vpack.c.bf16 %v949, %v949
  %1029 = vrot.lane.b32.xlu0 %v1027, 96
  %v1030 = vpop.permute.xlu0 %1029
  %v1032 = vsel %vm336, %v1030, 0
  %1034 = vmatprep.subr.bf16.mxu0 0
  %1035 = vmatpush1.bf16.msra.mxu0 0
  %1036 = vmatprep.subr.bf16.mxu0 0
  %1037 = vmatpush1.bf16.msra.mxu0 0
  %1038 = vmatprep.subr.bf16.mxu0 0
  %1039 = vmatpush1.bf16.msra.mxu0 0
  %1040 = vmatprep.subr.bf16.mxu0 0
  %1041 = vmatpush1.bf16.msra.mxu0 0
  %1042 = vmatprep.subr.bf16.mxu0 0
  %1043 = vmatpush1.bf16.msra.mxu0 0
  %1044 = vmatprep.subr.bf16.mxu0 0
  %1045 = vmatpush1.bf16.msra.mxu0 0
  %1046 = vmatprep.subr.bf16.mxu0 0
  %1047 = vmatpush1.bf16.msra.mxu0 %v417
  %1048 = vmatprep.subr.bf16.mxu0 0
  %1049 = vmatpush1.bf16.msra.mxu0 %v416
  %1050 = vmatprep.subr.bf16.mxu0 0
  %1051 = vmatpush2.bf16.msra.mxu0 0
  %1052 = vmatprep.subr.bf16.mxu0 0
  %1053 = vmatpush2.bf16.msra.mxu0 0
  %1054 = vmatprep.subr.bf16.mxu0 0
  %1055 = vmatpush2.bf16.msra.mxu0 0
  %1056 = vmatprep.subr.bf16.mxu0 0
  %1057 = vmatpush2.bf16.msra.mxu0 0
  %1058 = vmatprep.subr.bf16.mxu0 0
  %1059 = vmatpush2.bf16.msra.mxu0 0
  %1060 = vmatprep.subr.bf16.mxu0 0
  %1061 = vmatpush2.bf16.msra.mxu0 0
  %1062 = vmatprep.subr.bf16.mxu0 0
  %1063 = vmatpush2.bf16.msra.mxu0 0
  %1064 = vmatprep.subr.bf16.mxu0 0
  %1065 = vmatpush2.bf16.msra.mxu0 0
  %1066 = vmatprep.mubr.bf16.mxu0 0
  %1067 = vmatmul.mubr.bf16.gmra.mxu0 %v1032
  %v1068 = vpop.f32.mrf.mxu0
  %v1069 = vadd.f32 %v322, %v1068
  %v1070 = vpop.f32.mrf.mxu0
  %v1071 = vpop.f32.mrf.mxu0
  %v1072 = vpop.f32.mrf.mxu0
  %1073 = vdwg.mxu0
  %v1074 = vadd.f32 %v278, %v1069
  %v1075 = vxor.u32 %v1074, 2147483648
  %v1076 = vmul.f32 %v1075, 1.442695
  %v1077 = vpow.pop %v1076
  %v1078 = vadd.f32 %v1077, 1.0
  %v1079 = vrcp.pop %v1078
  %v1080 = vmul.f32 1.0, %v1079
  %1082 = vrot.lane.b32.xlu0 %v1069, 64
  %v1083 = vpop.permute.xlu0 %1082
  %v1085 = vmul.f32 %v1080, %v1083
  %1087 = vrot.lane.b32.xlu0 %v1085, 64
  %v1088 = vpop.permute.xlu0 %1087
  %v1090 = vadd.f32 %v278, %v1088
  %v1091 = vtanh.pop %v1090
  %v1092 = vsub.f32 1.0, %v1080
  %1094 = vrot.lane.b32.xlu0 %v1091, 96
  %v1095 = vpop.permute.xlu0 %1094
  %v1097 = vmul.f32 %v1092, %v1095
  %v1098 = vmul.f32 %v1080, %v949
  %v1099 = vadd.f32 %v1097, %v1098
  %v1100 = vmul.f32 %v91, %v1099
  %v1101 = vsub.f32 %v1099, %v949
  %v1102 = vmul.f32 %v91, %v1101
  %v1103 = vadd.f32 %v949, %v1102
  %v1104 = vpack.c.bf16 %v1026, %v1026
  %1106 = vrot.lane.b32.xlu0 %v1104, 96
  %v1107 = vpop.permute.xlu0 %1106
  %v1109 = vsel %vm336, %v1107, 0
  %1111 = vmatprep.subr.bf16.mxu0 0
  %1112 = vmatpush1.bf16.msra.mxu0 0
  %1113 = vmatprep.subr.bf16.mxu0 0
  %1114 = vmatpush1.bf16.msra.mxu0 0
  %1115 = vmatprep.subr.bf16.mxu0 0
  %1116 = vmatpush1.bf16.msra.mxu0 0
  %1117 = vmatprep.subr.bf16.mxu0 0
  %1118 = vmatpush1.bf16.msra.mxu0 0
  %1119 = vmatprep.subr.bf16.mxu0 0
  %1120 = vmatpush1.bf16.msra.mxu0 0
  %1121 = vmatprep.subr.bf16.mxu0 0
  %1122 = vmatpush1.bf16.msra.mxu0 0
  %1123 = vmatprep.subr.bf16.mxu0 0
  %1124 = vmatpush1.bf16.msra.mxu0 %v333
  %1125 = vmatprep.subr.bf16.mxu0 0
  %1126 = vmatpush1.bf16.msra.mxu0 %v332
  %1127 = vmatprep.subr.bf16.mxu0 0
  %1128 = vmatpush2.bf16.msra.mxu0 0
  %1129 = vmatprep.subr.bf16.mxu0 0
  %1130 = vmatpush2.bf16.msra.mxu0 0
  %1131 = vmatprep.subr.bf16.mxu0 0
  %1132 = vmatpush2.bf16.msra.mxu0 0
  %1133 = vmatprep.subr.bf16.mxu0 0
  %1134 = vmatpush2.bf16.msra.mxu0 0
  %1135 = vmatprep.subr.bf16.mxu0 0
  %1136 = vmatpush2.bf16.msra.mxu0 0
  %1137 = vmatprep.subr.bf16.mxu0 0
  %1138 = vmatpush2.bf16.msra.mxu0 0
  %1139 = vmatprep.subr.bf16.mxu0 0
  %1140 = vmatpush2.bf16.msra.mxu0 0
  %1141 = vmatprep.subr.bf16.mxu0 0
  %1142 = vmatpush2.bf16.msra.mxu0 0
  %1143 = vmatprep.mubr.bf16.mxu0 0
  %1144 = vmatmul.mubr.bf16.gmra.mxu0 %v1109
  %v1145 = vpop.f32.mrf.mxu0
  %v1146 = vadd.f32 %v314, %v1145
  %v1147 = vpop.f32.mrf.mxu0
  %v1148 = vpop.f32.mrf.mxu0
  %v1149 = vpop.f32.mrf.mxu0
  %1150 = vdwg.mxu0
  %v1151 = vadd.f32 %v286, %v1146
  %v1152 = vxor.u32 %v1151, 2147483648
  %v1153 = vmul.f32 %v1152, 1.442695
  %v1154 = vpow.pop %v1153
  %v1155 = vadd.f32 %v1154, 1.0
  %v1156 = vrcp.pop %v1155
  %v1157 = vmul.f32 1.0, %v1156
  %1159 = vrot.lane.b32.xlu0 %v1146, 64
  %v1160 = vpop.permute.xlu0 %1159
  %v1162 = vmul.f32 %v1157, %v1160
  %1164 = vrot.lane.b32.xlu0 %v1162, 64
  %v1165 = vpop.permute.xlu0 %1164
  %v1167 = vadd.f32 %v286, %v1165
  %v1168 = vtanh.pop %v1167
  %v1169 = vsub.f32 1.0, %v1157
  %1171 = vrot.lane.b32.xlu0 %v1168, 96
  %v1172 = vpop.permute.xlu0 %1171
  %v1174 = vmul.f32 %v1169, %v1172
  %v1175 = vmul.f32 %v1157, %v1026
  %v1176 = vadd.f32 %v1174, %v1175
  %v1177 = vmul.f32 %v107, %v1176
  %v1178 = vsub.f32 %v1176, %v1026
  %v1179 = vmul.f32 %v107, %v1178
  %v1180 = vadd.f32 %v1026, %v1179
  %v1181 = vpack.c.bf16 %v1103, %v1103
  %1183 = vrot.lane.b32.xlu0 %v1181, 96
  %v1184 = vpop.permute.xlu0 %1183
  %v1186 = vsel %vm336, %v1184, 0
  %1188 = vmatprep.subr.bf16.mxu0 0
  %1189 = vmatpush1.bf16.msra.mxu0 0
  %1190 = vmatprep.subr.bf16.mxu0 0
  %1191 = vmatpush1.bf16.msra.mxu0 0
  %1192 = vmatprep.subr.bf16.mxu0 0
  %1193 = vmatpush1.bf16.msra.mxu0 0
  %1194 = vmatprep.subr.bf16.mxu0 0
  %1195 = vmatpush1.bf16.msra.mxu0 0
  %1196 = vmatprep.subr.bf16.mxu0 0
  %1197 = vmatpush1.bf16.msra.mxu0 0
  %1198 = vmatprep.subr.bf16.mxu0 0
  %1199 = vmatpush1.bf16.msra.mxu0 0
  %1200 = vmatprep.subr.bf16.mxu0 0
  %1201 = vmatpush1.bf16.msra.mxu0 %v417
  %1202 = vmatprep.subr.bf16.mxu0 0
  %1203 = vmatpush1.bf16.msra.mxu0 %v416
  %1204 = vmatprep.subr.bf16.mxu0 0
  %1205 = vmatpush2.bf16.msra.mxu0 0
  %1206 = vmatprep.subr.bf16.mxu0 0
  %1207 = vmatpush2.bf16.msra.mxu0 0
  %1208 = vmatprep.subr.bf16.mxu0 0
  %1209 = vmatpush2.bf16.msra.mxu0 0
  %1210 = vmatprep.subr.bf16.mxu0 0
  %1211 = vmatpush2.bf16.msra.mxu0 0
  %1212 = vmatprep.subr.bf16.mxu0 0
  %1213 = vmatpush2.bf16.msra.mxu0 0
  %1214 = vmatprep.subr.bf16.mxu0 0
  %1215 = vmatpush2.bf16.msra.mxu0 0
  %1216 = vmatprep.subr.bf16.mxu0 0
  %1217 = vmatpush2.bf16.msra.mxu0 0
  %1218 = vmatprep.subr.bf16.mxu0 0
  %1219 = vmatpush2.bf16.msra.mxu0 0
  %1220 = vmatprep.mubr.bf16.mxu0 0
  %1221 = vmatmul.mubr.bf16.gmra.mxu0 %v1186
  %v1222 = vpop.f32.mrf.mxu0
  %v1223 = vadd.f32 %v322, %v1222
  %v1224 = vpop.f32.mrf.mxu0
  %v1225 = vpop.f32.mrf.mxu0
  %v1226 = vpop.f32.mrf.mxu0
  %1227 = vdwg.mxu0
  %v1228 = vadd.f32 %v274, %v1223
  %v1229 = vxor.u32 %v1228, 2147483648
  %v1230 = vmul.f32 %v1229, 1.442695
  %v1231 = vpow.pop %v1230
  %v1232 = vadd.f32 %v1231, 1.0
  %v1233 = vrcp.pop %v1232
  %v1234 = vmul.f32 1.0, %v1233
  %1236 = vrot.lane.b32.xlu0 %v1223, 64
  %v1237 = vpop.permute.xlu0 %1236
  %v1239 = vmul.f32 %v1234, %v1237
  %1241 = vrot.lane.b32.xlu0 %v1239, 64
  %v1242 = vpop.permute.xlu0 %1241
  %v1244 = vadd.f32 %v274, %v1242
  %v1245 = vtanh.pop %v1244
  %v1246 = vsub.f32 1.0, %v1234
  %1248 = vrot.lane.b32.xlu0 %v1245, 96
  %v1249 = vpop.permute.xlu0 %1248
  %v1251 = vmul.f32 %v1246, %v1249
  %v1252 = vmul.f32 %v1234, %v1103
  %v1253 = vadd.f32 %v1251, %v1252
  %v1254 = vmul.f32 %v83, %v1253
  %v1255 = vsub.f32 %v1253, %v1103
  %v1256 = vmul.f32 %v83, %v1255
  %v1257 = vadd.f32 %v1103, %v1256
  %v1258 = vpack.c.bf16 %v1180, %v1180
  %1260 = vrot.lane.b32.xlu0 %v1258, 96
  %v1261 = vpop.permute.xlu0 %1260
  %v1263 = vsel %vm336, %v1261, 0
  %1265 = vmatprep.subr.bf16.mxu0 0
  %1266 = vmatpush1.bf16.msra.mxu0 0
  %1267 = vmatprep.subr.bf16.mxu0 0
  %1268 = vmatpush1.bf16.msra.mxu0 0
  %1269 = vmatprep.subr.bf16.mxu0 0
  %1270 = vmatpush1.bf16.msra.mxu0 0
  %1271 = vmatprep.subr.bf16.mxu0 0
  %1272 = vmatpush1.bf16.msra.mxu0 0
  %1273 = vmatprep.subr.bf16.mxu0 0
  %1274 = vmatpush1.bf16.msra.mxu0 0
  %1275 = vmatprep.subr.bf16.mxu0 0
  %1276 = vmatpush1.bf16.msra.mxu0 0
  %1277 = vmatprep.subr.bf16.mxu0 0
  %1278 = vmatpush1.bf16.msra.mxu0 %v333
  %1279 = vmatprep.subr.bf16.mxu0 0
  %1280 = vmatpush1.bf16.msra.mxu0 %v332
  %1281 = vmatprep.subr.bf16.mxu0 0
  %1282 = vmatpush2.bf16.msra.mxu0 0
  %1283 = vmatprep.subr.bf16.mxu0 0
  %1284 = vmatpush2.bf16.msra.mxu0 0
  %1285 = vmatprep.subr.bf16.mxu0 0
  %1286 = vmatpush2.bf16.msra.mxu0 0
  %1287 = vmatprep.subr.bf16.mxu0 0
  %1288 = vmatpush2.bf16.msra.mxu0 0
  %1289 = vmatprep.subr.bf16.mxu0 0
  %1290 = vmatpush2.bf16.msra.mxu0 0
  %1291 = vmatprep.subr.bf16.mxu0 0
  %1292 = vmatpush2.bf16.msra.mxu0 0
  %1293 = vmatprep.subr.bf16.mxu0 0
  %1294 = vmatpush2.bf16.msra.mxu0 0
  %1295 = vmatprep.subr.bf16.mxu0 0
  %1296 = vmatpush2.bf16.msra.mxu0 0
  %1297 = vmatprep.mubr.bf16.mxu0 0
  %1298 = vmatmul.mubr.bf16.gmra.mxu0 %v1263
  %v1299 = vpop.f32.mrf.mxu0
  %v1300 = vadd.f32 %v314, %v1299
  %v1301 = vpop.f32.mrf.mxu0
  %v1302 = vpop.f32.mrf.mxu0
  %v1303 = vpop.f32.mrf.mxu0
  %1304 = vdwg.mxu0
  %v1305 = vadd.f32 %v292, %v1300
  %v1306 = vxor.u32 %v1305, 2147483648
  %v1307 = vmul.f32 %v1306, 1.442695
  %v1308 = vpow.pop %v1307
  %v1309 = vadd.f32 %v1308, 1.0
  %v1310 = vrcp.pop %v1309
  %v1311 = vmul.f32 1.0, %v1310
  %1313 = vrot.lane.b32.xlu0 %v1300, 64
  %v1314 = vpop.permute.xlu0 %1313
  %v1316 = vmul.f32 %v1311, %v1314
  %1318 = vrot.lane.b32.xlu0 %v1316, 64
  %v1319 = vpop.permute.xlu0 %1318
  %v1321 = vadd.f32 %v292, %v1319
  %v1322 = vtanh.pop %v1321
  %v1323 = vsub.f32 1.0, %v1311
  %1325 = vrot.lane.b32.xlu0 %v1322, 96
  %v1326 = vpop.permute.xlu0 %1325
  %v1328 = vmul.f32 %v1323, %v1326
  %v1329 = vmul.f32 %v1311, %v1180
  %v1330 = vadd.f32 %v1328, %v1329
  %v1331 = vmul.f32 %v115, %v1330
  %v1332 = vsub.f32 %v1330, %v1180
  %v1333 = vmul.f32 %v115, %v1332
  %v1334 = vadd.f32 %v1180, %v1333
  %v1335 = vpack.c.bf16 %v1257, %v1257
  %1337 = vrot.lane.b32.xlu0 %v1335, 96
  %v1338 = vpop.permute.xlu0 %1337
  %v1340 = vsel %vm336, %v1338, 0
  %1342 = vmatprep.subr.bf16.mxu0 0
  %1343 = vmatpush1.bf16.msra.mxu0 0
  %1344 = vmatprep.subr.bf16.mxu0 0
  %1345 = vmatpush1.bf16.msra.mxu0 0
  %1346 = vmatprep.subr.bf16.mxu0 0
  %1347 = vmatpush1.bf16.msra.mxu0 0
  %1348 = vmatprep.subr.bf16.mxu0 0
  %1349 = vmatpush1.bf16.msra.mxu0 0
  %1350 = vmatprep.subr.bf16.mxu0 0
  %1351 = vmatpush1.bf16.msra.mxu0 0
  %1352 = vmatprep.subr.bf16.mxu0 0
  %1353 = vmatpush1.bf16.msra.mxu0 0
  %1354 = vmatprep.subr.bf16.mxu0 0
  %1355 = vmatpush1.bf16.msra.mxu0 %v417
  %1356 = vmatprep.subr.bf16.mxu0 0
  %1357 = vmatpush1.bf16.msra.mxu0 %v416
  %1358 = vmatprep.subr.bf16.mxu0 0
  %1359 = vmatpush2.bf16.msra.mxu0 0
  %1360 = vmatprep.subr.bf16.mxu0 0
  %1361 = vmatpush2.bf16.msra.mxu0 0
  %1362 = vmatprep.subr.bf16.mxu0 0
  %1363 = vmatpush2.bf16.msra.mxu0 0
  %1364 = vmatprep.subr.bf16.mxu0 0
  %1365 = vmatpush2.bf16.msra.mxu0 0
  %1366 = vmatprep.subr.bf16.mxu0 0
  %1367 = vmatpush2.bf16.msra.mxu0 0
  %1368 = vmatprep.subr.bf16.mxu0 0
  %1369 = vmatpush2.bf16.msra.mxu0 0
  %1370 = vmatprep.subr.bf16.mxu0 0
  %1371 = vmatpush2.bf16.msra.mxu0 0
  %1372 = vmatprep.subr.bf16.mxu0 0
  %1373 = vmatpush2.bf16.msra.mxu0 0
  %1374 = vmatprep.mubr.bf16.mxu0 0
  %1375 = vmatmul.mubr.bf16.gmra.mxu0 %v1340
  %v1376 = vpop.f32.mrf.mxu0
  %v1377 = vadd.f32 %v322, %v1376
  %v1378 = vpop.f32.mrf.mxu0
  %v1379 = vpop.f32.mrf.mxu0
  %v1380 = vpop.f32.mrf.mxu0
  %1381 = vdwg.mxu0
  %v1382 = vadd.f32 %v268, %v1377
  %v1383 = vxor.u32 %v1382, 2147483648
  %v1384 = vmul.f32 %v1383, 1.442695
  %v1385 = vpow.pop %v1384
  %v1386 = vadd.f32 %v1385, 1.0
  %v1387 = vrcp.pop %v1386
  %v1388 = vmul.f32 1.0, %v1387
  %1390 = vrot.lane.b32.xlu0 %v1377, 64
  %v1391 = vpop.permute.xlu0 %1390
  %v1393 = vmul.f32 %v1388, %v1391
  %1395 = vrot.lane.b32.xlu0 %v1393, 64
  %v1396 = vpop.permute.xlu0 %1395
  %v1398 = vadd.f32 %v268, %v1396
  %v1399 = vtanh.pop %v1398
  %v1400 = vsub.f32 1.0, %v1388
  %1402 = vrot.lane.b32.xlu0 %v1399, 96
  %v1403 = vpop.permute.xlu0 %1402
  %v1405 = vmul.f32 %v1400, %v1403
  %v1406 = vmul.f32 %v1388, %v1257
  %v1407 = vadd.f32 %v1405, %v1406
  %v1408 = vmul.f32 %v75, %v1407
  %v1409 = vsub.f32 %v1407, %v1257
  %v1410 = vmul.f32 %v75, %v1409
  %v1411 = vadd.f32 %v1257, %v1410
  %v1412 = vpack.c.bf16 %v1334, %v1334
  %1414 = vrot.lane.b32.xlu0 %v1412, 96
  %v1415 = vpop.permute.xlu0 %1414
  %v1417 = vsel %vm336, %v1415, 0
  %1419 = vmatprep.subr.bf16.mxu0 0
  %1420 = vmatpush1.bf16.msra.mxu0 0
  %1421 = vmatprep.subr.bf16.mxu0 0
  %1422 = vmatpush1.bf16.msra.mxu0 0
  %1423 = vmatprep.subr.bf16.mxu0 0
  %1424 = vmatpush1.bf16.msra.mxu0 0
  %1425 = vmatprep.subr.bf16.mxu0 0
  %1426 = vmatpush1.bf16.msra.mxu0 0
  %1427 = vmatprep.subr.bf16.mxu0 0
  %1428 = vmatpush1.bf16.msra.mxu0 0
  %1429 = vmatprep.subr.bf16.mxu0 0
  %1430 = vmatpush1.bf16.msra.mxu0 0
  %1431 = vmatprep.subr.bf16.mxu0 0
  %1432 = vmatpush1.bf16.msra.mxu0 %v333
  %1433 = vmatprep.subr.bf16.mxu0 0
  %1434 = vmatpush1.bf16.msra.mxu0 %v332
  %1435 = vmatprep.subr.bf16.mxu0 0
  %1436 = vmatpush2.bf16.msra.mxu0 0
  %1437 = vmatprep.subr.bf16.mxu0 0
  %1438 = vmatpush2.bf16.msra.mxu0 0
  %1439 = vmatprep.subr.bf16.mxu0 0
  %1440 = vmatpush2.bf16.msra.mxu0 0
  %1441 = vmatprep.subr.bf16.mxu0 0
  %1442 = vmatpush2.bf16.msra.mxu0 0
  %1443 = vmatprep.subr.bf16.mxu0 0
  %1444 = vmatpush2.bf16.msra.mxu0 0
  %1445 = vmatprep.subr.bf16.mxu0 0
  %1446 = vmatpush2.bf16.msra.mxu0 0
  %1447 = vmatprep.subr.bf16.mxu0 0
  %1448 = vmatpush2.bf16.msra.mxu0 0
  %1449 = vmatprep.subr.bf16.mxu0 0
  %1450 = vmatpush2.bf16.msra.mxu0 0
  %1451 = vmatprep.mubr.bf16.mxu0 0
  %1452 = vmatmul.mubr.bf16.gmra.mxu0 %v1417
  %v1453 = vpop.f32.mrf.mxu0
  %v1454 = vadd.f32 %v314, %v1453
  %v1455 = vpop.f32.mrf.mxu0
  %v1456 = vpop.f32.mrf.mxu0
  %v1457 = vpop.f32.mrf.mxu0
  %1458 = vdwg.mxu0
  %v1459 = vadd.f32 %v296, %v1454
  %v1460 = vxor.u32 %v1459, 2147483648
  %v1461 = vmul.f32 %v1460, 1.442695
  %v1462 = vpow.pop %v1461
  %v1463 = vadd.f32 %v1462, 1.0
  %v1464 = vrcp.pop %v1463
  %v1465 = vmul.f32 1.0, %v1464
  %1467 = vrot.lane.b32.xlu0 %v1454, 64
  %v1468 = vpop.permute.xlu0 %1467
  %v1470 = vmul.f32 %v1465, %v1468
  %1472 = vrot.lane.b32.xlu0 %v1470, 64
  %v1473 = vpop.permute.xlu0 %1472
  %v1475 = vadd.f32 %v296, %v1473
  %v1476 = vtanh.pop %v1475
  %v1477 = vsub.f32 1.0, %v1465
  %1479 = vrot.lane.b32.xlu0 %v1476, 96
  %v1480 = vpop.permute.xlu0 %1479
  %v1482 = vmul.f32 %v1477, %v1480
  %v1483 = vmul.f32 %v1465, %v1334
  %v1484 = vadd.f32 %v1482, %v1483
  %v1485 = vmul.f32 %v123, %v1484
  %v1486 = vpack.c.bf16 %v1411, %v1411
  %1488 = vrot.lane.b32.xlu0 %v1486, 96
  %v1489 = vpop.permute.xlu0 %1488
  %v1491 = vsel %vm336, %v1489, 0
  %1493 = vmatprep.subr.bf16.mxu0 0
  %1494 = vmatpush1.bf16.msra.mxu0 0
  %1495 = vmatprep.subr.bf16.mxu0 0
  %1496 = vmatpush1.bf16.msra.mxu0 0
  %1497 = vmatprep.subr.bf16.mxu0 0
  %1498 = vmatpush1.bf16.msra.mxu0 0
  %1499 = vmatprep.subr.bf16.mxu0 0
  %1500 = vmatpush1.bf16.msra.mxu0 0
  %1501 = vmatprep.subr.bf16.mxu0 0
  %1502 = vmatpush1.bf16.msra.mxu0 0
  %1503 = vmatprep.subr.bf16.mxu0 0
  %1504 = vmatpush1.bf16.msra.mxu0 0
  %1505 = vmatprep.subr.bf16.mxu0 0
  %1506 = vmatpush1.bf16.msra.mxu0 %v417
  %1507 = vmatprep.subr.bf16.mxu0 0
  %1508 = vmatpush1.bf16.msra.mxu0 %v416
  %1509 = vmatprep.subr.bf16.mxu0 0
  %1510 = vmatpush2.bf16.msra.mxu0 0
  %1511 = vmatprep.subr.bf16.mxu0 0
  %1512 = vmatpush2.bf16.msra.mxu0 0
  %1513 = vmatprep.subr.bf16.mxu0 0
  %1514 = vmatpush2.bf16.msra.mxu0 0
  %1515 = vmatprep.subr.bf16.mxu0 0
  %1516 = vmatpush2.bf16.msra.mxu0 0
  %1517 = vmatprep.subr.bf16.mxu0 0
  %1518 = vmatpush2.bf16.msra.mxu0 0
  %1519 = vmatprep.subr.bf16.mxu0 0
  %1520 = vmatpush2.bf16.msra.mxu0 0
  %1521 = vmatprep.subr.bf16.mxu0 0
  %1522 = vmatpush2.bf16.msra.mxu0 0
  %1523 = vmatprep.subr.bf16.mxu0 0
  %1524 = vmatpush2.bf16.msra.mxu0 0
  %1525 = vmatprep.mubr.bf16.mxu0 0
  %1526 = vmatmul.mubr.bf16.gmra.mxu0 %v1491
  %v1527 = vpop.f32.mrf.mxu0
  %v1528 = vadd.f32 %v322, %v1527
  %v1529 = vpop.f32.mrf.mxu0
  %v1530 = vpop.f32.mrf.mxu0
  %v1531 = vpop.f32.mrf.mxu0
  %1532 = vdwg.mxu0
  %v1533 = vadd.f32 %v264, %v1528
  %v1534 = vxor.u32 %v1533, 2147483648
  %v1535 = vmul.f32 %v1534, 1.442695
  %v1536 = vpow.pop %v1535
  %v1537 = vadd.f32 %v1536, 1.0
  %v1538 = vrcp.pop %v1537
  %v1539 = vmul.f32 1.0, %v1538
  %1541 = vrot.lane.b32.xlu0 %v1528, 64
  %v1542 = vpop.permute.xlu0 %1541
  %v1544 = vmul.f32 %v1539, %v1542
  %1546 = vrot.lane.b32.xlu0 %v1544, 64
  %v1547 = vpop.permute.xlu0 %1546
  %v1549 = vadd.f32 %v264, %v1547
  %v1550 = vtanh.pop %v1549
  %v1551 = vsub.f32 1.0, %v1539
  %1553 = vrot.lane.b32.xlu0 %v1550, 96
  %v1554 = vpop.permute.xlu0 %1553
  %v1556 = vmul.f32 %v1551, %v1554
  %v1557 = vmul.f32 %v1539, %v1411
  %v1558 = vadd.f32 %v1556, %v1557
  %v1559 = vmul.f32 %v67, %v1558
  %v1560 = vpack.c.bf16 %v561, %v406
  %v1561 = vpack.c.bf16 %v869, %v715
  %v1562 = vpack.c.bf16 %v1177, %v1023
  %v1563 = vpack.c.bf16 %v1485, %v1331
  %v1564 = vld [vmem:[%s6] sm:$0xff]
  %v1565 = vld [vmem:[%s6 + $0x8] sm:$0xff]
  %v1566 = vld [vmem:[%s6 + $0x10] sm:$0xff]
  %v1567 = vld [vmem:[%s6 + $0x18] sm:$0xff]
  %v1568 = vpack.c.bf16 %v1408, %v1559
  %v1569 = vpack.c.bf16 %v1100, %v1254
  %v1570 = vpack.c.bf16 %v792, %v946
  %v1571 = vpack.c.bf16 %v486, %v638
  %v1572 = vld [vmem:[%s7] sm:$0xff]
  %v1573 = vld [vmem:[%s7 + $0x8] sm:$0xff]
  %v1574 = vld [vmem:[%s7 + $0x10] sm:$0xff]
  %v1575 = vld [vmem:[%s7 + $0x18] sm:$0xff]
  %1580 = vrot.lane.b32.xlu0 %v1568, 96
  %v1581 = vpop.permute.xlu0 %1580
  %1582 = vrot.lane.b32.xlu0 %v1569, 96
  %v1583 = vpop.permute.xlu0 %1582
  %1584 = vrot.lane.b32.xlu0 %v1570, 96
  %v1585 = vpop.permute.xlu0 %1584
  %1586 = vrot.lane.b32.xlu0 %v1571, 96
  %v1587 = vpop.permute.xlu0 %1586
  %v1592 = vunpack.c.l.b16 %v1572
  %v1593 = vunpack.c.h.b16 %v1572
  %v1594 = vunpack.c.l.b16 %v1573
  %v1595 = vunpack.c.h.b16 %v1573
  %v1596 = vunpack.c.l.b16 %v1574
  %v1597 = vunpack.c.h.b16 %v1574
  %v1598 = vunpack.c.l.b16 %v1575
  %v1599 = vunpack.c.h.b16 %v1575
  %v1600 = vpack.c.b16 %v1594, %v1592
  %v1601 = vpack.c.b16 %v1595, %v1593
  %v1602 = vpack.c.b16 %v1598, %v1596
  %v1603 = vpack.c.b16 %v1599, %v1597
  %v1609 = vsel %vm336, %v1581, 0
  %v1612 = vsel %vm336, %v1583, 0
  %v1615 = vsel %vm336, %v1585, 0
  %v1618 = vsel %vm336, %v1587, 0
  %1620 = vmatprep.subr.bf16.mxu0 0
  %1621 = vmatpush1.bf16.msra.mxu0 0
  %1622 = vmatprep.subr.bf16.mxu0 0
  %1623 = vmatpush1.bf16.msra.mxu0 0
  %1624 = vmatprep.subr.bf16.mxu0 0
  %1625 = vmatpush1.bf16.msra.mxu0 0
  %1626 = vmatprep.subr.bf16.mxu0 0
  %1627 = vmatpush1.bf16.msra.mxu0 0
  %1628 = vmatprep.subr.bf16.mxu0 0
  %1629 = vmatpush1.bf16.msra.mxu0 0
  %1630 = vmatprep.subr.bf16.mxu0 0
  %1631 = vmatpush1.bf16.msra.mxu0 0
  %1632 = vmatprep.subr.bf16.mxu0 %v1603
  %1633 = vmatpush1.bf16.msra.mxu0 %v1602
  %1634 = vmatprep.subr.bf16.mxu0 %v1601
  %1635 = vmatpush1.bf16.msra.mxu0 %v1600
  %1636 = vmatprep.subr.bf16.mxu0 0
  %1637 = vmatpush2.bf16.msra.mxu0 0
  %1638 = vmatprep.subr.bf16.mxu0 0
  %1639 = vmatpush2.bf16.msra.mxu0 0
  %1640 = vmatprep.subr.bf16.mxu0 0
  %1641 = vmatpush2.bf16.msra.mxu0 0
  %1642 = vmatprep.subr.bf16.mxu0 0
  %1643 = vmatpush2.bf16.msra.mxu0 0
  %1644 = vmatprep.subr.bf16.mxu0 0
  %1645 = vmatpush2.bf16.msra.mxu0 0
  %1646 = vmatprep.subr.bf16.mxu0 0
  %1647 = vmatpush2.bf16.msra.mxu0 0
  %1648 = vmatprep.subr.bf16.mxu0 0
  %1649 = vmatpush2.bf16.msra.mxu0 0
  %1650 = vmatprep.subr.bf16.mxu0 0
  %1651 = vmatpush2.bf16.msra.mxu0 0
  %1652 = vmatprep.mubr.bf16.mxu0 0
  %1653 = vmatmul.mubr.bf16.gmra.mxu0 %v1609
  %v1654 = vpop.f32.mrf.mxu0
  %v1655 = vadd.f32 0.0, %v1654
  %v1656 = vpop.f32.mrf.mxu0
  %v1657 = vadd.f32 0.0, %v1656
  %v1658 = vpop.f32.mrf.mxu0
  %v1659 = vadd.f32 0.0, %v1658
  %v1660 = vpop.f32.mrf.mxu0
  %v1661 = vadd.f32 0.0, %v1660
  %1662 = vmatprep.mubr.bf16.mxu0 0
  %1663 = vmatmul.mubr.bf16.gmra.mxu0 %v1612
  %v1664 = vpop.f32.mrf.mxu0
  %v1665 = vadd.f32 0.0, %v1664
  %v1666 = vpop.f32.mrf.mxu0
  %v1667 = vadd.f32 0.0, %v1666
  %v1668 = vpop.f32.mrf.mxu0
  %v1669 = vadd.f32 0.0, %v1668
  %v1670 = vpop.f32.mrf.mxu0
  %v1671 = vadd.f32 0.0, %v1670
  %1672 = vmatprep.mubr.bf16.mxu0 0
  %1673 = vmatmul.mubr.bf16.gmra.mxu0 %v1615
  %v1674 = vpop.f32.mrf.mxu0
  %v1675 = vadd.f32 0.0, %v1674
  %v1676 = vpop.f32.mrf.mxu0
  %v1677 = vadd.f32 0.0, %v1676
  %v1678 = vpop.f32.mrf.mxu0
  %v1679 = vadd.f32 0.0, %v1678
  %v1680 = vpop.f32.mrf.mxu0
  %v1681 = vadd.f32 0.0, %v1680
  %1682 = vmatprep.mubr.bf16.mxu0 0
  %1683 = vmatmul.mubr.bf16.gmra.mxu0 %v1618
  %v1684 = vpop.f32.mrf.mxu0
  %v1685 = vadd.f32 0.0, %v1684
  %v1686 = vpop.f32.mrf.mxu0
  %v1687 = vadd.f32 0.0, %v1686
  %v1688 = vpop.f32.mrf.mxu0
  %v1689 = vadd.f32 0.0, %v1688
  %v1690 = vpop.f32.mrf.mxu0
  %v1691 = vadd.f32 0.0, %v1690
  %1692 = vdwg.mxu0
  %1697 = vrot.lane.b32.xlu0 %v1560, 96
  %v1698 = vpop.permute.xlu0 %1697
  %1699 = vrot.lane.b32.xlu0 %v1561, 96
  %v1700 = vpop.permute.xlu0 %1699
  %1701 = vrot.lane.b32.xlu0 %v1562, 96
  %v1702 = vpop.permute.xlu0 %1701
  %1703 = vrot.lane.b32.xlu0 %v1563, 96
  %v1704 = vpop.permute.xlu0 %1703
  %v1709 = vunpack.c.l.b16 %v1564
  %v1710 = vunpack.c.h.b16 %v1564
  %v1711 = vunpack.c.l.b16 %v1565
  %v1712 = vunpack.c.h.b16 %v1565
  %v1713 = vunpack.c.l.b16 %v1566
  %v1714 = vunpack.c.h.b16 %v1566
  %v1715 = vunpack.c.l.b16 %v1567
  %v1716 = vunpack.c.h.b16 %v1567
  %v1717 = vpack.c.b16 %v1711, %v1709
  %v1718 = vpack.c.b16 %v1712, %v1710
  %v1719 = vpack.c.b16 %v1715, %v1713
  %v1720 = vpack.c.b16 %v1716, %v1714
  %v1726 = vsel %vm336, %v1698, 0
  %v1729 = vsel %vm336, %v1700, 0
  %v1732 = vsel %vm336, %v1702, 0
  %v1735 = vsel %vm336, %v1704, 0
  %1737 = vmatprep.subr.bf16.mxu0 0
  %1738 = vmatpush1.bf16.msra.mxu0 0
  %1739 = vmatprep.subr.bf16.mxu0 0
  %1740 = vmatpush1.bf16.msra.mxu0 0
  %1741 = vmatprep.subr.bf16.mxu0 0
  %1742 = vmatpush1.bf16.msra.mxu0 0
  %1743 = vmatprep.subr.bf16.mxu0 0
  %1744 = vmatpush1.bf16.msra.mxu0 0
  %1745 = vmatprep.subr.bf16.mxu0 0
  %1746 = vmatpush1.bf16.msra.mxu0 0
  %1747 = vmatprep.subr.bf16.mxu0 0
  %1748 = vmatpush1.bf16.msra.mxu0 0
  %1749 = vmatprep.subr.bf16.mxu0 %v1720
  %1750 = vmatpush1.bf16.msra.mxu0 %v1719
  %1751 = vmatprep.subr.bf16.mxu0 %v1718
  %1752 = vmatpush1.bf16.msra.mxu0 %v1717
  %1753 = vmatprep.subr.bf16.mxu0 0
  %1754 = vmatpush2.bf16.msra.mxu0 0
  %1755 = vmatprep.subr.bf16.mxu0 0
  %1756 = vmatpush2.bf16.msra.mxu0 0
  %1757 = vmatprep.subr.bf16.mxu0 0
  %1758 = vmatpush2.bf16.msra.mxu0 0
  %1759 = vmatprep.subr.bf16.mxu0 0
  %1760 = vmatpush2.bf16.msra.mxu0 0
  %1761 = vmatprep.subr.bf16.mxu0 0
  %1762 = vmatpush2.bf16.msra.mxu0 0
  %1763 = vmatprep.subr.bf16.mxu0 0
  %1764 = vmatpush2.bf16.msra.mxu0 0
  %1765 = vmatprep.subr.bf16.mxu0 0
  %1766 = vmatpush2.bf16.msra.mxu0 0
  %1767 = vmatprep.subr.bf16.mxu0 0
  %1768 = vmatpush2.bf16.msra.mxu0 0
  %1769 = vmatprep.mubr.bf16.mxu0 0
  %1770 = vmatmul.mubr.bf16.gmra.mxu0 %v1726
  %v1771 = vpop.f32.mrf.mxu0
  %v1772 = vadd.f32 %v1655, %v1771
  %v1773 = vpop.f32.mrf.mxu0
  %v1774 = vadd.f32 %v1657, %v1773
  %v1775 = vpop.f32.mrf.mxu0
  %v1776 = vadd.f32 %v1659, %v1775
  %v1777 = vpop.f32.mrf.mxu0
  %v1778 = vadd.f32 %v1661, %v1777
  %1779 = vmatprep.mubr.bf16.mxu0 0
  %1780 = vmatmul.mubr.bf16.gmra.mxu0 %v1729
  %v1781 = vpop.f32.mrf.mxu0
  %v1782 = vadd.f32 %v1665, %v1781
  %v1783 = vpop.f32.mrf.mxu0
  %v1784 = vadd.f32 %v1667, %v1783
  %v1785 = vpop.f32.mrf.mxu0
  %v1786 = vadd.f32 %v1669, %v1785
  %v1787 = vpop.f32.mrf.mxu0
  %v1788 = vadd.f32 %v1671, %v1787
  %1789 = vmatprep.mubr.bf16.mxu0 0
  %1790 = vmatmul.mubr.bf16.gmra.mxu0 %v1732
  %v1791 = vpop.f32.mrf.mxu0
  %v1792 = vadd.f32 %v1675, %v1791
  %v1793 = vpop.f32.mrf.mxu0
  %v1794 = vadd.f32 %v1677, %v1793
  %v1795 = vpop.f32.mrf.mxu0
  %v1796 = vadd.f32 %v1679, %v1795
  %v1797 = vpop.f32.mrf.mxu0
  %v1798 = vadd.f32 %v1681, %v1797
  %1799 = vmatprep.mubr.bf16.mxu0 0
  %1800 = vmatmul.mubr.bf16.gmra.mxu0 %v1735
  %v1801 = vpop.f32.mrf.mxu0
  %v1802 = vadd.f32 %v1685, %v1801
  %v1803 = vpop.f32.mrf.mxu0
  %v1804 = vadd.f32 %v1687, %v1803
  %v1805 = vpop.f32.mrf.mxu0
  %v1806 = vadd.f32 %v1689, %v1805
  %v1807 = vpop.f32.mrf.mxu0
  %v1808 = vadd.f32 %v1691, %v1807
  %1809 = vdwg.mxu0
  %v1810 = vld [vmem:[%s8] sm:$0x3]
  %v1812 = vlaneseq
  %v1813 = vshrl.u32 %v1812, 7
  %v1814 = vsub.s32 0, %v1813
  %v1815 = vrot.slane %v1810, %v1814
  %v1816 = vlaneseq
  %v1817 = vshrl.u32 %v1816, 7
  %v1818 = vsub.s32 1, %v1817
  %v1819 = vrot.slane %v1810, %v1818
  %v1822 = vadd.f32 %v1772, %v1815
  %v1823 = vadd.f32 %v1774, %v1819
  %v1824 = vadd.f32 %v1776, %v1815
  %v1825 = vadd.f32 %v1778, %v1819
  %v1826 = vadd.f32 %v1782, %v1815
  %v1827 = vadd.f32 %v1784, %v1819
  %v1828 = vadd.f32 %v1786, %v1815
  %v1829 = vadd.f32 %v1788, %v1819
  %v1830 = vadd.f32 %v1792, %v1815
  %v1831 = vadd.f32 %v1794, %v1819
  %v1832 = vadd.f32 %v1796, %v1815
  %v1833 = vadd.f32 %v1798, %v1819
  %v1834 = vadd.f32 %v1802, %v1815
  %v1835 = vadd.f32 %v1804, %v1819
  %v1836 = vadd.f32 %v1806, %v1815
  %v1837 = vadd.f32 %v1808, %v1819
  %v1838 = vld [vmem:[%s9] sm:$0xf]
  %v1839 = vld [vmem:[%s9 + $0x4] sm:$0xf]
  %v1840 = vld [vmem:[%s9 + $0x8] sm:$0xf]
  %v1841 = vld [vmem:[%s9 + $0xc] sm:$0xf]
  %s1842 = scalar_lea.vmem %s9, 16
  %v1843 = vld [vmem:[%s1842] sm:$0xf]
  %v1844 = vld [vmem:[%s1842 + $0x4] sm:$0xf]
  %v1845 = vld [vmem:[%s1842 + $0x8] sm:$0xf]
  %v1846 = vld [vmem:[%s1842 + $0xc] sm:$0xf]
  %v1847 = vld [vmem:[%s10] sm:$0x1]
  %v1849 = vlaneseq
  %v1850 = vshrl.u32 %v1849, 7
  %v1851 = vsub.s32 0, %v1850
  %v1852 = vrot.slane %v1847, %v1851
  %s1854 = scalar_lea.vmem %s10, 1
  %v1855 = vld [vmem:[%s1854] sm:$0x1]
  %v1857 = vlaneseq
  %v1858 = vshrl.u32 %v1857, 7
  %v1859 = vsub.s32 0, %v1858
  %v1860 = vrot.slane %v1855, %v1859
  %v1866 = vunpack.c.l.b16 %v1838
  %v1867 = vunpack.c.l.b16 %v1839
  %v1868 = vunpack.c.l.b16 %v1840
  %v1869 = vunpack.c.l.b16 %v1841
  %v1870 = vpack.c.b16 %v1867, %v1866
  %v1871 = vpack.c.b16 %v1869, %v1868
  %1874 = vmatprep.subr.bf16.mxu0 0
  %1875 = vmatpush1.bf16.msra.mxu0 0
  %1876 = vmatprep.subr.bf16.mxu0 0
  %1877 = vmatpush1.bf16.msra.mxu0 0
  %1878 = vmatprep.subr.bf16.mxu0 0
  %1879 = vmatpush1.bf16.msra.mxu0 0
  %1880 = vmatprep.subr.bf16.mxu0 0
  %1881 = vmatpush1.bf16.msra.mxu0 0
  %1882 = vmatprep.subr.bf16.mxu0 0
  %1883 = vmatpush1.bf16.msra.mxu0 0
  %1884 = vmatprep.subr.bf16.mxu0 0
  %1885 = vmatpush1.bf16.msra.mxu0 0
  %1886 = vmatprep.subr.bf16.mxu0 0
  %1887 = vmatpush1.bf16.msra.mxu0 %v1871
  %1888 = vmatprep.subr.bf16.mxu0 0
  %1889 = vmatpush1.bf16.msra.mxu0 %v1870
  %1890 = vmatprep.subr.bf16.mxu0 0
  %1891 = vmatpush2.bf16.msra.mxu0 0
  %1892 = vmatprep.subr.bf16.mxu0 0
  %1893 = vmatpush2.bf16.msra.mxu0 0
  %1894 = vmatprep.subr.bf16.mxu0 0
  %1895 = vmatpush2.bf16.msra.mxu0 0
  %1896 = vmatprep.subr.bf16.mxu0 0
  %1897 = vmatpush2.bf16.msra.mxu0 0
  %1898 = vmatprep.subr.bf16.mxu0 0
  %1899 = vmatpush2.bf16.msra.mxu0 0
  %1900 = vmatprep.subr.bf16.mxu0 0
  %1901 = vmatpush2.bf16.msra.mxu0 0
  %1902 = vmatprep.subr.bf16.mxu0 0
  %1903 = vmatpush2.bf16.msra.mxu0 0
  %1904 = vmatprep.subr.bf16.mxu0 0
  %1905 = vmatpush2.bf16.msra.mxu0 0
  %1906 = vmatprep.mubr.bf16.mxu0 0
  %1907 = vmatmul.mubr.bf16.gmra.mxu0 %v338
  %v1908 = vpop.f32.mrf.mxu0
  %v1909 = vadd.f32 %v1852, %v1908
  %v1910 = vpop.f32.mrf.mxu0
  %v1911 = vpop.f32.mrf.mxu0
  %v1912 = vpop.f32.mrf.mxu0
  %1913 = vdwg.mxu0
  %v1914 = vadd.f32 %v1822, %v1909
  %v1915 = vxor.u32 %v1914, 2147483648
  %v1916 = vmul.f32 %v1915, 1.442695
  %v1917 = vpow.pop %v1916
  %v1918 = vadd.f32 %v1917, 1.0
  %v1919 = vrcp.pop %v1918
  %v1920 = vmul.f32 1.0, %v1919
  %1922 = vrot.lane.b32.xlu0 %v1909, 64
  %v1923 = vpop.permute.xlu0 %1922
  %v1925 = vmul.f32 %v1920, %v1923
  %1927 = vrot.lane.b32.xlu0 %v1925, 64
  %v1928 = vpop.permute.xlu0 %1927
  %v1930 = vadd.f32 %v1822, %v1928
  %v1931 = vtanh.pop %v1930
  %v1932 = vsub.f32 1.0, %v1920
  %1934 = vrot.lane.b32.xlu0 %v1931, 96
  %v1935 = vpop.permute.xlu0 %1934
  %v1937 = vmul.f32 %v1932, %v1935
  %v1938 = vmul.f32 %v1920, 0.0
  %v1939 = vadd.f32 %v1937, %v1938
  %v1940 = vmul.f32 %v67, %v1939
  %v1941 = vadd.f32 %v1940, 0.0
  %v1946 = vunpack.c.l.b16 %v1843
  %v1947 = vunpack.c.l.b16 %v1844
  %v1948 = vunpack.c.l.b16 %v1845
  %v1949 = vunpack.c.l.b16 %v1846
  %v1950 = vpack.c.b16 %v1947, %v1946
  %v1951 = vpack.c.b16 %v1949, %v1948
  %1954 = vmatprep.subr.bf16.mxu0 0
  %1955 = vmatpush1.bf16.msra.mxu0 0
  %1956 = vmatprep.subr.bf16.mxu0 0
  %1957 = vmatpush1.bf16.msra.mxu0 0
  %1958 = vmatprep.subr.bf16.mxu0 0
  %1959 = vmatpush1.bf16.msra.mxu0 0
  %1960 = vmatprep.subr.bf16.mxu0 0
  %1961 = vmatpush1.bf16.msra.mxu0 0
  %1962 = vmatprep.subr.bf16.mxu0 0
  %1963 = vmatpush1.bf16.msra.mxu0 0
  %1964 = vmatprep.subr.bf16.mxu0 0
  %1965 = vmatpush1.bf16.msra.mxu0 0
  %1966 = vmatprep.subr.bf16.mxu0 0
  %1967 = vmatpush1.bf16.msra.mxu0 %v1951
  %1968 = vmatprep.subr.bf16.mxu0 0
  %1969 = vmatpush1.bf16.msra.mxu0 %v1950
  %1970 = vmatprep.subr.bf16.mxu0 0
  %1971 = vmatpush2.bf16.msra.mxu0 0
  %1972 = vmatprep.subr.bf16.mxu0 0
  %1973 = vmatpush2.bf16.msra.mxu0 0
  %1974 = vmatprep.subr.bf16.mxu0 0
  %1975 = vmatpush2.bf16.msra.mxu0 0
  %1976 = vmatprep.subr.bf16.mxu0 0
  %1977 = vmatpush2.bf16.msra.mxu0 0
  %1978 = vmatprep.subr.bf16.mxu0 0
  %1979 = vmatpush2.bf16.msra.mxu0 0
  %1980 = vmatprep.subr.bf16.mxu0 0
  %1981 = vmatpush2.bf16.msra.mxu0 0
  %1982 = vmatprep.subr.bf16.mxu0 0
  %1983 = vmatpush2.bf16.msra.mxu0 0
  %1984 = vmatprep.subr.bf16.mxu0 0
  %1985 = vmatpush2.bf16.msra.mxu0 0
  %1986 = vmatprep.mubr.bf16.mxu0 0
  %1987 = vmatmul.mubr.bf16.gmra.mxu0 %v338
  %v1988 = vpop.f32.mrf.mxu0
  %v1989 = vadd.f32 %v1860, %v1988
  %v1990 = vpop.f32.mrf.mxu0
  %v1991 = vpop.f32.mrf.mxu0
  %v1992 = vpop.f32.mrf.mxu0
  %1993 = vdwg.mxu0
  %v1994 = vadd.f32 %v1837, %v1989
  %v1995 = vxor.u32 %v1994, 2147483648
  %v1996 = vmul.f32 %v1995, 1.442695
  %v1997 = vpow.pop %v1996
  %v1998 = vadd.f32 %v1997, 1.0
  %v1999 = vrcp.pop %v1998
  %v2000 = vmul.f32 1.0, %v1999
  %2002 = vrot.lane.b32.xlu0 %v1989, 64
  %v2003 = vpop.permute.xlu0 %2002
  %v2005 = vmul.f32 %v2000, %v2003
  %2007 = vrot.lane.b32.xlu0 %v2005, 64
  %v2008 = vpop.permute.xlu0 %2007
  %v2010 = vadd.f32 %v1837, %v2008
  %v2011 = vtanh.pop %v2010
  %v2012 = vsub.f32 1.0, %v2000
  %2014 = vrot.lane.b32.xlu0 %v2011, 96
  %v2015 = vpop.permute.xlu0 %2014
  %v2017 = vmul.f32 %v2012, %v2015
  %v2018 = vmul.f32 %v2000, 0.0
  %v2019 = vadd.f32 %v2017, %v2018
  %v2020 = vmul.f32 %v123, %v2019
  %v2021 = vadd.f32 %v2020, 0.0
  %v2022 = vpack.c.bf16 %v1941, %v1941
  %2024 = vrot.lane.b32.xlu0 %v2022, 96
  %v2025 = vpop.permute.xlu0 %2024
  %v2027 = vsel %vm336, %v2025, 0
  %2029 = vmatprep.subr.bf16.mxu0 0
  %2030 = vmatpush1.bf16.msra.mxu0 0
  %2031 = vmatprep.subr.bf16.mxu0 0
  %2032 = vmatpush1.bf16.msra.mxu0 0
  %2033 = vmatprep.subr.bf16.mxu0 0
  %2034 = vmatpush1.bf16.msra.mxu0 0
  %2035 = vmatprep.subr.bf16.mxu0 0
  %2036 = vmatpush1.bf16.msra.mxu0 0
  %2037 = vmatprep.subr.bf16.mxu0 0
  %2038 = vmatpush1.bf16.msra.mxu0 0
  %2039 = vmatprep.subr.bf16.mxu0 0
  %2040 = vmatpush1.bf16.msra.mxu0 0
  %2041 = vmatprep.subr.bf16.mxu0 0
  %2042 = vmatpush1.bf16.msra.mxu0 %v1871
  %2043 = vmatprep.subr.bf16.mxu0 0
  %2044 = vmatpush1.bf16.msra.mxu0 %v1870
  %2045 = vmatprep.subr.bf16.mxu0 0
  %2046 = vmatpush2.bf16.msra.mxu0 0
  %2047 = vmatprep.subr.bf16.mxu0 0
  %2048 = vmatpush2.bf16.msra.mxu0 0
  %2049 = vmatprep.subr.bf16.mxu0 0
  %2050 = vmatpush2.bf16.msra.mxu0 0
  %2051 = vmatprep.subr.bf16.mxu0 0
  %2052 = vmatpush2.bf16.msra.mxu0 0
  %2053 = vmatprep.subr.bf16.mxu0 0
  %2054 = vmatpush2.bf16.msra.mxu0 0
  %2055 = vmatprep.subr.bf16.mxu0 0
  %2056 = vmatpush2.bf16.msra.mxu0 0
  %2057 = vmatprep.subr.bf16.mxu0 0
  %2058 = vmatpush2.bf16.msra.mxu0 0
  %2059 = vmatprep.subr.bf16.mxu0 0
  %2060 = vmatpush2.bf16.msra.mxu0 0
  %2061 = vmatprep.mubr.bf16.mxu0 0
  %2062 = vmatmul.mubr.bf16.gmra.mxu0 %v2027
  %v2063 = vpop.f32.mrf.mxu0
  %v2064 = vadd.f32 %v1852, %v2063
  %v2065 = vpop.f32.mrf.mxu0
  %v2066 = vpop.f32.mrf.mxu0
  %v2067 = vpop.f32.mrf.mxu0
  %2068 = vdwg.mxu0
  %v2069 = vadd.f32 %v1824, %v2064
  %v2070 = vxor.u32 %v2069, 2147483648
  %v2071 = vmul.f32 %v2070, 1.442695
  %v2072 = vpow.pop %v2071
  %v2073 = vadd.f32 %v2072, 1.0
  %v2074 = vrcp.pop %v2073
  %v2075 = vmul.f32 1.0, %v2074
  %2077 = vrot.lane.b32.xlu0 %v2064, 64
  %v2078 = vpop.permute.xlu0 %2077
  %v2080 = vmul.f32 %v2075, %v2078
  %2082 = vrot.lane.b32.xlu0 %v2080, 64
  %v2083 = vpop.permute.xlu0 %2082
  %v2085 = vadd.f32 %v1824, %v2083
  %v2086 = vtanh.pop %v2085
  %v2087 = vsub.f32 1.0, %v2075
  %2089 = vrot.lane.b32.xlu0 %v2086, 96
  %v2090 = vpop.permute.xlu0 %2089
  %v2092 = vmul.f32 %v2087, %v2090
  %v2093 = vmul.f32 %v2075, %v1941
  %v2094 = vadd.f32 %v2092, %v2093
  %v2095 = vmul.f32 %v75, %v2094
  %v2096 = vsub.f32 %v2094, %v1941
  %v2097 = vmul.f32 %v75, %v2096
  %v2098 = vadd.f32 %v1941, %v2097
  %v2099 = vpack.c.bf16 %v2021, %v2021
  %2101 = vrot.lane.b32.xlu0 %v2099, 96
  %v2102 = vpop.permute.xlu0 %2101
  %v2104 = vsel %vm336, %v2102, 0
  %2106 = vmatprep.subr.bf16.mxu0 0
  %2107 = vmatpush1.bf16.msra.mxu0 0
  %2108 = vmatprep.subr.bf16.mxu0 0
  %2109 = vmatpush1.bf16.msra.mxu0 0
  %2110 = vmatprep.subr.bf16.mxu0 0
  %2111 = vmatpush1.bf16.msra.mxu0 0
  %2112 = vmatprep.subr.bf16.mxu0 0
  %2113 = vmatpush1.bf16.msra.mxu0 0
  %2114 = vmatprep.subr.bf16.mxu0 0
  %2115 = vmatpush1.bf16.msra.mxu0 0
  %2116 = vmatprep.subr.bf16.mxu0 0
  %2117 = vmatpush1.bf16.msra.mxu0 0
  %2118 = vmatprep.subr.bf16.mxu0 0
  %2119 = vmatpush1.bf16.msra.mxu0 %v1951
  %2120 = vmatprep.subr.bf16.mxu0 0
  %2121 = vmatpush1.bf16.msra.mxu0 %v1950
  %2122 = vmatprep.subr.bf16.mxu0 0
  %2123 = vmatpush2.bf16.msra.mxu0 0
  %2124 = vmatprep.subr.bf16.mxu0 0
  %2125 = vmatpush2.bf16.msra.mxu0 0
  %2126 = vmatprep.subr.bf16.mxu0 0
  %2127 = vmatpush2.bf16.msra.mxu0 0
  %2128 = vmatprep.subr.bf16.mxu0 0
  %2129 = vmatpush2.bf16.msra.mxu0 0
  %2130 = vmatprep.subr.bf16.mxu0 0
  %2131 = vmatpush2.bf16.msra.mxu0 0
  %2132 = vmatprep.subr.bf16.mxu0 0
  %2133 = vmatpush2.bf16.msra.mxu0 0
  %2134 = vmatprep.subr.bf16.mxu0 0
  %2135 = vmatpush2.bf16.msra.mxu0 0
  %2136 = vmatprep.subr.bf16.mxu0 0
  %2137 = vmatpush2.bf16.msra.mxu0 0
  %2138 = vmatprep.mubr.bf16.mxu0 0
  %2139 = vmatmul.mubr.bf16.gmra.mxu0 %v2104
  %v2140 = vpop.f32.mrf.mxu0
  %v2141 = vadd.f32 %v1860, %v2140
  %v2142 = vpop.f32.mrf.mxu0
  %v2143 = vpop.f32.mrf.mxu0
  %v2144 = vpop.f32.mrf.mxu0
  %2145 = vdwg.mxu0
  %v2146 = vadd.f32 %v1835, %v2141
  %v2147 = vxor.u32 %v2146, 2147483648
  %v2148 = vmul.f32 %v2147, 1.442695
  %v2149 = vpow.pop %v2148
  %v2150 = vadd.f32 %v2149, 1.0
  %v2151 = vrcp.pop %v2150
  %v2152 = vmul.f32 1.0, %v2151
  %2154 = vrot.lane.b32.xlu0 %v2141, 64
  %v2155 = vpop.permute.xlu0 %2154
  %v2157 = vmul.f32 %v2152, %v2155
  %2159 = vrot.lane.b32.xlu0 %v2157, 64
  %v2160 = vpop.permute.xlu0 %2159
  %v2162 = vadd.f32 %v1835, %v2160
  %v2163 = vtanh.pop %v2162
  %v2164 = vsub.f32 1.0, %v2152
  %2166 = vrot.lane.b32.xlu0 %v2163, 96
  %v2167 = vpop.permute.xlu0 %2166
  %v2169 = vmul.f32 %v2164, %v2167
  %v2170 = vmul.f32 %v2152, %v2021
  %v2171 = vadd.f32 %v2169, %v2170
  %v2172 = vmul.f32 %v115, %v2171
  %v2173 = vsub.f32 %v2171, %v2021
  %v2174 = vmul.f32 %v115, %v2173
  %v2175 = vadd.f32 %v2021, %v2174
  %v2176 = vpack.c.bf16 %v2098, %v2098
  %2178 = vrot.lane.b32.xlu0 %v2176, 96
  %v2179 = vpop.permute.xlu0 %2178
  %v2181 = vsel %vm336, %v2179, 0
  %2183 = vmatprep.subr.bf16.mxu0 0
  %2184 = vmatpush1.bf16.msra.mxu0 0
  %2185 = vmatprep.subr.bf16.mxu0 0
  %2186 = vmatpush1.bf16.msra.mxu0 0
  %2187 = vmatprep.subr.bf16.mxu0 0
  %2188 = vmatpush1.bf16.msra.mxu0 0
  %2189 = vmatprep.subr.bf16.mxu0 0
  %2190 = vmatpush1.bf16.msra.mxu0 0
  %2191 = vmatprep.subr.bf16.mxu0 0
  %2192 = vmatpush1.bf16.msra.mxu0 0
  %2193 = vmatprep.subr.bf16.mxu0 0
  %2194 = vmatpush1.bf16.msra.mxu0 0
  %2195 = vmatprep.subr.bf16.mxu0 0
  %2196 = vmatpush1.bf16.msra.mxu0 %v1871
  %2197 = vmatprep.subr.bf16.mxu0 0
  %2198 = vmatpush1.bf16.msra.mxu0 %v1870
  %2199 = vmatprep.subr.bf16.mxu0 0
  %2200 = vmatpush2.bf16.msra.mxu0 0
  %2201 = vmatprep.subr.bf16.mxu0 0
  %2202 = vmatpush2.bf16.msra.mxu0 0
  %2203 = vmatprep.subr.bf16.mxu0 0
  %2204 = vmatpush2.bf16.msra.mxu0 0
  %2205 = vmatprep.subr.bf16.mxu0 0
  %2206 = vmatpush2.bf16.msra.mxu0 0
  %2207 = vmatprep.subr.bf16.mxu0 0
  %2208 = vmatpush2.bf16.msra.mxu0 0
  %2209 = vmatprep.subr.bf16.mxu0 0
  %2210 = vmatpush2.bf16.msra.mxu0 0
  %2211 = vmatprep.subr.bf16.mxu0 0
  %2212 = vmatpush2.bf16.msra.mxu0 0
  %2213 = vmatprep.subr.bf16.mxu0 0
  %2214 = vmatpush2.bf16.msra.mxu0 0
  %2215 = vmatprep.mubr.bf16.mxu0 0
  %2216 = vmatmul.mubr.bf16.gmra.mxu0 %v2181
  %v2217 = vpop.f32.mrf.mxu0
  %v2218 = vadd.f32 %v1852, %v2217
  %v2219 = vpop.f32.mrf.mxu0
  %v2220 = vpop.f32.mrf.mxu0
  %v2221 = vpop.f32.mrf.mxu0
  %2222 = vdwg.mxu0
  %v2223 = vadd.f32 %v1826, %v2218
  %v2224 = vxor.u32 %v2223, 2147483648
  %v2225 = vmul.f32 %v2224, 1.442695
  %v2226 = vpow.pop %v2225
  %v2227 = vadd.f32 %v2226, 1.0
  %v2228 = vrcp.pop %v2227
  %v2229 = vmul.f32 1.0, %v2228
  %2231 = vrot.lane.b32.xlu0 %v2218, 64
  %v2232 = vpop.permute.xlu0 %2231
  %v2234 = vmul.f32 %v2229, %v2232
  %2236 = vrot.lane.b32.xlu0 %v2234, 64
  %v2237 = vpop.permute.xlu0 %2236
  %v2239 = vadd.f32 %v1826, %v2237
  %v2240 = vtanh.pop %v2239
  %v2241 = vsub.f32 1.0, %v2229
  %2243 = vrot.lane.b32.xlu0 %v2240, 96
  %v2244 = vpop.permute.xlu0 %2243
  %v2246 = vmul.f32 %v2241, %v2244
  %v2247 = vmul.f32 %v2229, %v2098
  %v2248 = vadd.f32 %v2246, %v2247
  %v2249 = vmul.f32 %v83, %v2248
  %v2250 = vsub.f32 %v2248, %v2098
  %v2251 = vmul.f32 %v83, %v2250
  %v2252 = vadd.f32 %v2098, %v2251
  %v2253 = vpack.c.bf16 %v2175, %v2175
  %2255 = vrot.lane.b32.xlu0 %v2253, 96
  %v2256 = vpop.permute.xlu0 %2255
  %v2258 = vsel %vm336, %v2256, 0
  %2260 = vmatprep.subr.bf16.mxu0 0
  %2261 = vmatpush1.bf16.msra.mxu0 0
  %2262 = vmatprep.subr.bf16.mxu0 0
  %2263 = vmatpush1.bf16.msra.mxu0 0
  %2264 = vmatprep.subr.bf16.mxu0 0
  %2265 = vmatpush1.bf16.msra.mxu0 0
  %2266 = vmatprep.subr.bf16.mxu0 0
  %2267 = vmatpush1.bf16.msra.mxu0 0
  %2268 = vmatprep.subr.bf16.mxu0 0
  %2269 = vmatpush1.bf16.msra.mxu0 0
  %2270 = vmatprep.subr.bf16.mxu0 0
  %2271 = vmatpush1.bf16.msra.mxu0 0
  %2272 = vmatprep.subr.bf16.mxu0 0
  %2273 = vmatpush1.bf16.msra.mxu0 %v1951
  %2274 = vmatprep.subr.bf16.mxu0 0
  %2275 = vmatpush1.bf16.msra.mxu0 %v1950
  %2276 = vmatprep.subr.bf16.mxu0 0
  %2277 = vmatpush2.bf16.msra.mxu0 0
  %2278 = vmatprep.subr.bf16.mxu0 0
  %2279 = vmatpush2.bf16.msra.mxu0 0
  %2280 = vmatprep.subr.bf16.mxu0 0
  %2281 = vmatpush2.bf16.msra.mxu0 0
  %2282 = vmatprep.subr.bf16.mxu0 0
  %2283 = vmatpush2.bf16.msra.mxu0 0
  %2284 = vmatprep.subr.bf16.mxu0 0
  %2285 = vmatpush2.bf16.msra.mxu0 0
  %2286 = vmatprep.subr.bf16.mxu0 0
  %2287 = vmatpush2.bf16.msra.mxu0 0
  %2288 = vmatprep.subr.bf16.mxu0 0
  %2289 = vmatpush2.bf16.msra.mxu0 0
  %2290 = vmatprep.subr.bf16.mxu0 0
  %2291 = vmatpush2.bf16.msra.mxu0 0
  %2292 = vmatprep.mubr.bf16.mxu0 0
  %2293 = vmatmul.mubr.bf16.gmra.mxu0 %v2258
  %v2294 = vpop.f32.mrf.mxu0
  %v2295 = vadd.f32 %v1860, %v2294
  %v2296 = vpop.f32.mrf.mxu0
  %v2297 = vpop.f32.mrf.mxu0
  %v2298 = vpop.f32.mrf.mxu0
  %2299 = vdwg.mxu0
  %v2300 = vadd.f32 %v1833, %v2295
  %v2301 = vxor.u32 %v2300, 2147483648
  %v2302 = vmul.f32 %v2301, 1.442695
  %v2303 = vpow.pop %v2302
  %v2304 = vadd.f32 %v2303, 1.0
  %v2305 = vrcp.pop %v2304
  %v2306 = vmul.f32 1.0, %v2305
  %2308 = vrot.lane.b32.xlu0 %v2295, 64
  %v2309 = vpop.permute.xlu0 %2308
  %v2311 = vmul.f32 %v2306, %v2309
  %2313 = vrot.lane.b32.xlu0 %v2311, 64
  %v2314 = vpop.permute.xlu0 %2313
  %v2316 = vadd.f32 %v1833, %v2314
  %v2317 = vtanh.pop %v2316
  %v2318 = vsub.f32 1.0, %v2306
  %2320 = vrot.lane.b32.xlu0 %v2317, 96
  %v2321 = vpop.permute.xlu0 %2320
  %v2323 = vmul.f32 %v2318, %v2321
  %v2324 = vmul.f32 %v2306, %v2175
  %v2325 = vadd.f32 %v2323, %v2324
  %v2326 = vmul.f32 %v107, %v2325
  %v2327 = vsub.f32 %v2325, %v2175
  %v2328 = vmul.f32 %v107, %v2327
  %v2329 = vadd.f32 %v2175, %v2328
  %v2330 = vpack.c.bf16 %v2252, %v2252
  %2332 = vrot.lane.b32.xlu0 %v2330, 96
  %v2333 = vpop.permute.xlu0 %2332
  %v2335 = vsel %vm336, %v2333, 0
  %2337 = vmatprep.subr.bf16.mxu0 0
  %2338 = vmatpush1.bf16.msra.mxu0 0
  %2339 = vmatprep.subr.bf16.mxu0 0
  %2340 = vmatpush1.bf16.msra.mxu0 0
  %2341 = vmatprep.subr.bf16.mxu0 0
  %2342 = vmatpush1.bf16.msra.mxu0 0
  %2343 = vmatprep.subr.bf16.mxu0 0
  %2344 = vmatpush1.bf16.msra.mxu0 0
  %2345 = vmatprep.subr.bf16.mxu0 0
  %2346 = vmatpush1.bf16.msra.mxu0 0
  %2347 = vmatprep.subr.bf16.mxu0 0
  %2348 = vmatpush1.bf16.msra.mxu0 0
  %2349 = vmatprep.subr.bf16.mxu0 0
  %2350 = vmatpush1.bf16.msra.mxu0 %v1871
  %2351 = vmatprep.subr.bf16.mxu0 0
  %2352 = vmatpush1.bf16.msra.mxu0 %v1870
  %2353 = vmatprep.subr.bf16.mxu0 0
  %2354 = vmatpush2.bf16.msra.mxu0 0
  %2355 = vmatprep.subr.bf16.mxu0 0
  %2356 = vmatpush2.bf16.msra.mxu0 0
  %2357 = vmatprep.subr.bf16.mxu0 0
  %2358 = vmatpush2.bf16.msra.mxu0 0
  %2359 = vmatprep.subr.bf16.mxu0 0
  %2360 = vmatpush2.bf16.msra.mxu0 0
  %2361 = vmatprep.subr.bf16.mxu0 0
  %2362 = vmatpush2.bf16.msra.mxu0 0
  %2363 = vmatprep.subr.bf16.mxu0 0
  %2364 = vmatpush2.bf16.msra.mxu0 0
  %2365 = vmatprep.subr.bf16.mxu0 0
  %2366 = vmatpush2.bf16.msra.mxu0 0
  %2367 = vmatprep.subr.bf16.mxu0 0
  %2368 = vmatpush2.bf16.msra.mxu0 0
  %2369 = vmatprep.mubr.bf16.mxu0 0
  %2370 = vmatmul.mubr.bf16.gmra.mxu0 %v2335
  %v2371 = vpop.f32.mrf.mxu0
  %v2372 = vadd.f32 %v1852, %v2371
  %v2373 = vpop.f32.mrf.mxu0
  %v2374 = vpop.f32.mrf.mxu0
  %v2375 = vpop.f32.mrf.mxu0
  %2376 = vdwg.mxu0
  %v2377 = vadd.f32 %v1828, %v2372
  %v2378 = vxor.u32 %v2377, 2147483648
  %v2379 = vmul.f32 %v2378, 1.442695
  %v2380 = vpow.pop %v2379
  %v2381 = vadd.f32 %v2380, 1.0
  %v2382 = vrcp.pop %v2381
  %v2383 = vmul.f32 1.0, %v2382
  %2385 = vrot.lane.b32.xlu0 %v2372, 64
  %v2386 = vpop.permute.xlu0 %2385
  %v2388 = vmul.f32 %v2383, %v2386
  %2390 = vrot.lane.b32.xlu0 %v2388, 64
  %v2391 = vpop.permute.xlu0 %2390
  %v2393 = vadd.f32 %v1828, %v2391
  %v2394 = vtanh.pop %v2393
  %v2395 = vsub.f32 1.0, %v2383
  %2397 = vrot.lane.b32.xlu0 %v2394, 96
  %v2398 = vpop.permute.xlu0 %2397
  %v2400 = vmul.f32 %v2395, %v2398
  %v2401 = vmul.f32 %v2383, %v2252
  %v2402 = vadd.f32 %v2400, %v2401
  %v2403 = vmul.f32 %v91, %v2402
  %v2404 = vsub.f32 %v2402, %v2252
  %v2405 = vmul.f32 %v91, %v2404
  %v2406 = vadd.f32 %v2252, %v2405
  %v2407 = vpack.c.bf16 %v2329, %v2329
  %2409 = vrot.lane.b32.xlu0 %v2407, 96
  %v2410 = vpop.permute.xlu0 %2409
  %v2412 = vsel %vm336, %v2410, 0
  %2414 = vmatprep.subr.bf16.mxu0 0
  %2415 = vmatpush1.bf16.msra.mxu0 0
  %2416 = vmatprep.subr.bf16.mxu0 0
  %2417 = vmatpush1.bf16.msra.mxu0 0
  %2418 = vmatprep.subr.bf16.mxu0 0
  %2419 = vmatpush1.bf16.msra.mxu0 0
  %2420 = vmatprep.subr.bf16.mxu0 0
  %2421 = vmatpush1.bf16.msra.mxu0 0
  %2422 = vmatprep.subr.bf16.mxu0 0
  %2423 = vmatpush1.bf16.msra.mxu0 0
  %2424 = vmatprep.subr.bf16.mxu0 0
  %2425 = vmatpush1.bf16.msra.mxu0 0
  %2426 = vmatprep.subr.bf16.mxu0 0
  %2427 = vmatpush1.bf16.msra.mxu0 %v1951
  %2428 = vmatprep.subr.bf16.mxu0 0
  %2429 = vmatpush1.bf16.msra.mxu0 %v1950
  %2430 = vmatprep.subr.bf16.mxu0 0
  %2431 = vmatpush2.bf16.msra.mxu0 0
  %2432 = vmatprep.subr.bf16.mxu0 0
  %2433 = vmatpush2.bf16.msra.mxu0 0
  %2434 = vmatprep.subr.bf16.mxu0 0
  %2435 = vmatpush2.bf16.msra.mxu0 0
  %2436 = vmatprep.subr.bf16.mxu0 0
  %2437 = vmatpush2.bf16.msra.mxu0 0
  %2438 = vmatprep.subr.bf16.mxu0 0
  %2439 = vmatpush2.bf16.msra.mxu0 0
  %2440 = vmatprep.subr.bf16.mxu0 0
  %2441 = vmatpush2.bf16.msra.mxu0 0
  %2442 = vmatprep.subr.bf16.mxu0 0
  %2443 = vmatpush2.bf16.msra.mxu0 0
  %2444 = vmatprep.subr.bf16.mxu0 0
  %2445 = vmatpush2.bf16.msra.mxu0 0
  %2446 = vmatprep.mubr.bf16.mxu0 0
  %2447 = vmatmul.mubr.bf16.gmra.mxu0 %v2412
  %v2448 = vpop.f32.mrf.mxu0
  %v2449 = vadd.f32 %v1860, %v2448
  %v2450 = vpop.f32.mrf.mxu0
  %v2451 = vpop.f32.mrf.mxu0
  %v2452 = vpop.f32.mrf.mxu0
  %2453 = vdwg.mxu0
  %v2454 = vadd.f32 %v1831, %v2449
  %v2455 = vxor.u32 %v2454, 2147483648
  %v2456 = vmul.f32 %v2455, 1.442695
  %v2457 = vpow.pop %v2456
  %v2458 = vadd.f32 %v2457, 1.0
  %v2459 = vrcp.pop %v2458
  %v2460 = vmul.f32 1.0, %v2459
  %2462 = vrot.lane.b32.xlu0 %v2449, 64
  %v2463 = vpop.permute.xlu0 %2462
  %v2465 = vmul.f32 %v2460, %v2463
  %2467 = vrot.lane.b32.xlu0 %v2465, 64
  %v2468 = vpop.permute.xlu0 %2467
  %v2470 = vadd.f32 %v1831, %v2468
  %v2471 = vtanh.pop %v2470
  %v2472 = vsub.f32 1.0, %v2460
  %2474 = vrot.lane.b32.xlu0 %v2471, 96
  %v2475 = vpop.permute.xlu0 %2474
  %v2477 = vmul.f32 %v2472, %v2475
  %v2478 = vmul.f32 %v2460, %v2329
  %v2479 = vadd.f32 %v2477, %v2478
  %v2480 = vmul.f32 %v99, %v2479
  %v2481 = vsub.f32 %v2479, %v2329
  %v2482 = vmul.f32 %v99, %v2481
  %v2483 = vadd.f32 %v2329, %v2482
  %v2484 = vpack.c.bf16 %v2406, %v2406
  %2486 = vrot.lane.b32.xlu0 %v2484, 96
  %v2487 = vpop.permute.xlu0 %2486
  %v2489 = vsel %vm336, %v2487, 0
  %2491 = vmatprep.subr.bf16.mxu0 0
  %2492 = vmatpush1.bf16.msra.mxu0 0
  %2493 = vmatprep.subr.bf16.mxu0 0
  %2494 = vmatpush1.bf16.msra.mxu0 0
  %2495 = vmatprep.subr.bf16.mxu0 0
  %2496 = vmatpush1.bf16.msra.mxu0 0
  %2497 = vmatprep.subr.bf16.mxu0 0
  %2498 = vmatpush1.bf16.msra.mxu0 0
  %2499 = vmatprep.subr.bf16.mxu0 0
  %2500 = vmatpush1.bf16.msra.mxu0 0
  %2501 = vmatprep.subr.bf16.mxu0 0
  %2502 = vmatpush1.bf16.msra.mxu0 0
  %2503 = vmatprep.subr.bf16.mxu0 0
  %2504 = vmatpush1.bf16.msra.mxu0 %v1871
  %2505 = vmatprep.subr.bf16.mxu0 0
  %2506 = vmatpush1.bf16.msra.mxu0 %v1870
  %2507 = vmatprep.subr.bf16.mxu0 0
  %2508 = vmatpush2.bf16.msra.mxu0 0
  %2509 = vmatprep.subr.bf16.mxu0 0
  %2510 = vmatpush2.bf16.msra.mxu0 0
  %2511 = vmatprep.subr.bf16.mxu0 0
  %2512 = vmatpush2.bf16.msra.mxu0 0
  %2513 = vmatprep.subr.bf16.mxu0 0
  %2514 = vmatpush2.bf16.msra.mxu0 0
  %2515 = vmatprep.subr.bf16.mxu0 0
  %2516 = vmatpush2.bf16.msra.mxu0 0
  %2517 = vmatprep.subr.bf16.mxu0 0
  %2518 = vmatpush2.bf16.msra.mxu0 0
  %2519 = vmatprep.subr.bf16.mxu0 0
  %2520 = vmatpush2.bf16.msra.mxu0 0
  %2521 = vmatprep.subr.bf16.mxu0 0
  %2522 = vmatpush2.bf16.msra.mxu0 0
  %2523 = vmatprep.mubr.bf16.mxu0 0
  %2524 = vmatmul.mubr.bf16.gmra.mxu0 %v2489
  %v2525 = vpop.f32.mrf.mxu0
  %v2526 = vadd.f32 %v1852, %v2525
  %v2527 = vpop.f32.mrf.mxu0
  %v2528 = vpop.f32.mrf.mxu0
  %v2529 = vpop.f32.mrf.mxu0
  %2530 = vdwg.mxu0
  %v2531 = vadd.f32 %v1830, %v2526
  %v2532 = vxor.u32 %v2531, 2147483648
  %v2533 = vmul.f32 %v2532, 1.442695
  %v2534 = vpow.pop %v2533
  %v2535 = vadd.f32 %v2534, 1.0
  %v2536 = vrcp.pop %v2535
  %v2537 = vmul.f32 1.0, %v2536
  %2539 = vrot.lane.b32.xlu0 %v2526, 64
  %v2540 = vpop.permute.xlu0 %2539
  %v2542 = vmul.f32 %v2537, %v2540
  %2544 = vrot.lane.b32.xlu0 %v2542, 64
  %v2545 = vpop.permute.xlu0 %2544
  %v2547 = vadd.f32 %v1830, %v2545
  %v2548 = vtanh.pop %v2547
  %v2549 = vsub.f32 1.0, %v2537
  %2551 = vrot.lane.b32.xlu0 %v2548, 96
  %v2552 = vpop.permute.xlu0 %2551
  %v2554 = vmul.f32 %v2549, %v2552
  %v2555 = vmul.f32 %v2537, %v2406
  %v2556 = vadd.f32 %v2554, %v2555
  %v2557 = vmul.f32 %v99, %v2556
  %v2558 = vsub.f32 %v2556, %v2406
  %v2559 = vmul.f32 %v99, %v2558
  %v2560 = vadd.f32 %v2406, %v2559
  %v2561 = vpack.c.bf16 %v2483, %v2483
  %2563 = vrot.lane.b32.xlu0 %v2561, 96
  %v2564 = vpop.permute.xlu0 %2563
  %v2566 = vsel %vm336, %v2564, 0
  %2568 = vmatprep.subr.bf16.mxu0 0
  %2569 = vmatpush1.bf16.msra.mxu0 0
  %2570 = vmatprep.subr.bf16.mxu0 0
  %2571 = vmatpush1.bf16.msra.mxu0 0
  %2572 = vmatprep.subr.bf16.mxu0 0
  %2573 = vmatpush1.bf16.msra.mxu0 0
  %2574 = vmatprep.subr.bf16.mxu0 0
  %2575 = vmatpush1.bf16.msra.mxu0 0
  %2576 = vmatprep.subr.bf16.mxu0 0
  %2577 = vmatpush1.bf16.msra.mxu0 0
  %2578 = vmatprep.subr.bf16.mxu0 0
  %2579 = vmatpush1.bf16.msra.mxu0 0
  %2580 = vmatprep.subr.bf16.mxu0 0
  %2581 = vmatpush1.bf16.msra.mxu0 %v1951
  %2582 = vmatprep.subr.bf16.mxu0 0
  %2583 = vmatpush1.bf16.msra.mxu0 %v1950
  %2584 = vmatprep.subr.bf16.mxu0 0
  %2585 = vmatpush2.bf16.msra.mxu0 0
  %2586 = vmatprep.subr.bf16.mxu0 0
  %2587 = vmatpush2.bf16.msra.mxu0 0
  %2588 = vmatprep.subr.bf16.mxu0 0
  %2589 = vmatpush2.bf16.msra.mxu0 0
  %2590 = vmatprep.subr.bf16.mxu0 0
  %2591 = vmatpush2.bf16.msra.mxu0 0
  %2592 = vmatprep.subr.bf16.mxu0 0
  %2593 = vmatpush2.bf16.msra.mxu0 0
  %2594 = vmatprep.subr.bf16.mxu0 0
  %2595 = vmatpush2.bf16.msra.mxu0 0
  %2596 = vmatprep.subr.bf16.mxu0 0
  %2597 = vmatpush2.bf16.msra.mxu0 0
  %2598 = vmatprep.subr.bf16.mxu0 0
  %2599 = vmatpush2.bf16.msra.mxu0 0
  %2600 = vmatprep.mubr.bf16.mxu0 0
  %2601 = vmatmul.mubr.bf16.gmra.mxu0 %v2566
  %v2602 = vpop.f32.mrf.mxu0
  %v2603 = vadd.f32 %v1860, %v2602
  %v2604 = vpop.f32.mrf.mxu0
  %v2605 = vpop.f32.mrf.mxu0
  %v2606 = vpop.f32.mrf.mxu0
  %2607 = vdwg.mxu0
  %v2608 = vadd.f32 %v1829, %v2603
  %v2609 = vxor.u32 %v2608, 2147483648
  %v2610 = vmul.f32 %v2609, 1.442695
  %v2611 = vpow.pop %v2610
  %v2612 = vadd.f32 %v2611, 1.0
  %v2613 = vrcp.pop %v2612
  %v2614 = vmul.f32 1.0, %v2613
  %2616 = vrot.lane.b32.xlu0 %v2603, 64
  %v2617 = vpop.permute.xlu0 %2616
  %v2619 = vmul.f32 %v2614, %v2617
  %2621 = vrot.lane.b32.xlu0 %v2619, 64
  %v2622 = vpop.permute.xlu0 %2621
  %v2624 = vadd.f32 %v1829, %v2622
  %v2625 = vtanh.pop %v2624
  %v2626 = vsub.f32 1.0, %v2614
  %2628 = vrot.lane.b32.xlu0 %v2625, 96
  %v2629 = vpop.permute.xlu0 %2628
  %v2631 = vmul.f32 %v2626, %v2629
  %v2632 = vmul.f32 %v2614, %v2483
  %v2633 = vadd.f32 %v2631, %v2632
  %v2634 = vmul.f32 %v91, %v2633
  %v2635 = vsub.f32 %v2633, %v2483
  %v2636 = vmul.f32 %v91, %v2635
  %v2637 = vadd.f32 %v2483, %v2636
  %v2638 = vpack.c.bf16 %v2560, %v2560
  %2640 = vrot.lane.b32.xlu0 %v2638, 96
  %v2641 = vpop.permute.xlu0 %2640
  %v2643 = vsel %vm336, %v2641, 0
  %2645 = vmatprep.subr.bf16.mxu0 0
  %2646 = vmatpush1.bf16.msra.mxu0 0
  %2647 = vmatprep.subr.bf16.mxu0 0
  %2648 = vmatpush1.bf16.msra.mxu0 0
  %2649 = vmatprep.subr.bf16.mxu0 0
  %2650 = vmatpush1.bf16.msra.mxu0 0
  %2651 = vmatprep.subr.bf16.mxu0 0
  %2652 = vmatpush1.bf16.msra.mxu0 0
  %2653 = vmatprep.subr.bf16.mxu0 0
  %2654 = vmatpush1.bf16.msra.mxu0 0
  %2655 = vmatprep.subr.bf16.mxu0 0
  %2656 = vmatpush1.bf16.msra.mxu0 0
  %2657 = vmatprep.subr.bf16.mxu0 0
  %2658 = vmatpush1.bf16.msra.mxu0 %v1871
  %2659 = vmatprep.subr.bf16.mxu0 0
  %2660 = vmatpush1.bf16.msra.mxu0 %v1870
  %2661 = vmatprep.subr.bf16.mxu0 0
  %2662 = vmatpush2.bf16.msra.mxu0 0
  %2663 = vmatprep.subr.bf16.mxu0 0
  %2664 = vmatpush2.bf16.msra.mxu0 0
  %2665 = vmatprep.subr.bf16.mxu0 0
  %2666 = vmatpush2.bf16.msra.mxu0 0
  %2667 = vmatprep.subr.bf16.mxu0 0
  %2668 = vmatpush2.bf16.msra.mxu0 0
  %2669 = vmatprep.subr.bf16.mxu0 0
  %2670 = vmatpush2.bf16.msra.mxu0 0
  %2671 = vmatprep.subr.bf16.mxu0 0
  %2672 = vmatpush2.bf16.msra.mxu0 0
  %2673 = vmatprep.subr.bf16.mxu0 0
  %2674 = vmatpush2.bf16.msra.mxu0 0
  %2675 = vmatprep.subr.bf16.mxu0 0
  %2676 = vmatpush2.bf16.msra.mxu0 0
  %2677 = vmatprep.mubr.bf16.mxu0 0
  %2678 = vmatmul.mubr.bf16.gmra.mxu0 %v2643
  %v2679 = vpop.f32.mrf.mxu0
  %v2680 = vadd.f32 %v1852, %v2679
  %v2681 = vpop.f32.mrf.mxu0
  %v2682 = vpop.f32.mrf.mxu0
  %v2683 = vpop.f32.mrf.mxu0
  %2684 = vdwg.mxu0
  %v2685 = vadd.f32 %v1832, %v2680
  %v2686 = vxor.u32 %v2685, 2147483648
  %v2687 = vmul.f32 %v2686, 1.442695
  %v2688 = vpow.pop %v2687
  %v2689 = vadd.f32 %v2688, 1.0
  %v2690 = vrcp.pop %v2689
  %v2691 = vmul.f32 1.0, %v2690
  %2693 = vrot.lane.b32.xlu0 %v2680, 64
  %v2694 = vpop.permute.xlu0 %2693
  %v2696 = vmul.f32 %v2691, %v2694
  %2698 = vrot.lane.b32.xlu0 %v2696, 64
  %v2699 = vpop.permute.xlu0 %2698
  %v2701 = vadd.f32 %v1832, %v2699
  %v2702 = vtanh.pop %v2701
  %v2703 = vsub.f32 1.0, %v2691
  %2705 = vrot.lane.b32.xlu0 %v2702, 96
  %v2706 = vpop.permute.xlu0 %2705
  %v2708 = vmul.f32 %v2703, %v2706
  %v2709 = vmul.f32 %v2691, %v2560
  %v2710 = vadd.f32 %v2708, %v2709
  %v2711 = vmul.f32 %v107, %v2710
  %v2712 = vsub.f32 %v2710, %v2560
  %v2713 = vmul.f32 %v107, %v2712
  %v2714 = vadd.f32 %v2560, %v2713
  %v2715 = vpack.c.bf16 %v2637, %v2637
  %2717 = vrot.lane.b32.xlu0 %v2715, 96
  %v2718 = vpop.permute.xlu0 %2717
  %v2720 = vsel %vm336, %v2718, 0
  %2722 = vmatprep.subr.bf16.mxu0 0
  %2723 = vmatpush1.bf16.msra.mxu0 0
  %2724 = vmatprep.subr.bf16.mxu0 0
  %2725 = vmatpush1.bf16.msra.mxu0 0
  %2726 = vmatprep.subr.bf16.mxu0 0
  %2727 = vmatpush1.bf16.msra.mxu0 0
  %2728 = vmatprep.subr.bf16.mxu0 0
  %2729 = vmatpush1.bf16.msra.mxu0 0
  %2730 = vmatprep.subr.bf16.mxu0 0
  %2731 = vmatpush1.bf16.msra.mxu0 0
  %2732 = vmatprep.subr.bf16.mxu0 0
  %2733 = vmatpush1.bf16.msra.mxu0 0
  %2734 = vmatprep.subr.bf16.mxu0 0
  %2735 = vmatpush1.bf16.msra.mxu0 %v1951
  %2736 = vmatprep.subr.bf16.mxu0 0
  %2737 = vmatpush1.bf16.msra.mxu0 %v1950
  %2738 = vmatprep.subr.bf16.mxu0 0
  %2739 = vmatpush2.bf16.msra.mxu0 0
  %2740 = vmatprep.subr.bf16.mxu0 0
  %2741 = vmatpush2.bf16.msra.mxu0 0
  %2742 = vmatprep.subr.bf16.mxu0 0
  %2743 = vmatpush2.bf16.msra.mxu0 0
  %2744 = vmatprep.subr.bf16.mxu0 0
  %2745 = vmatpush2.bf16.msra.mxu0 0
  %2746 = vmatprep.subr.bf16.mxu0 0
  %2747 = vmatpush2.bf16.msra.mxu0 0
  %2748 = vmatprep.subr.bf16.mxu0 0
  %2749 = vmatpush2.bf16.msra.mxu0 0
  %2750 = vmatprep.subr.bf16.mxu0 0
  %2751 = vmatpush2.bf16.msra.mxu0 0
  %2752 = vmatprep.subr.bf16.mxu0 0
  %2753 = vmatpush2.bf16.msra.mxu0 0
  %2754 = vmatprep.mubr.bf16.mxu0 0
  %2755 = vmatmul.mubr.bf16.gmra.mxu0 %v2720
  %v2756 = vpop.f32.mrf.mxu0
  %v2757 = vadd.f32 %v1860, %v2756
  %v2758 = vpop.f32.mrf.mxu0
  %v2759 = vpop.f32.mrf.mxu0
  %v2760 = vpop.f32.mrf.mxu0
  %2761 = vdwg.mxu0
  %v2762 = vadd.f32 %v1827, %v2757
  %v2763 = vxor.u32 %v2762, 2147483648
  %v2764 = vmul.f32 %v2763, 1.442695
  %v2765 = vpow.pop %v2764
  %v2766 = vadd.f32 %v2765, 1.0
  %v2767 = vrcp.pop %v2766
  %v2768 = vmul.f32 1.0, %v2767
  %2770 = vrot.lane.b32.xlu0 %v2757, 64
  %v2771 = vpop.permute.xlu0 %2770
  %v2773 = vmul.f32 %v2768, %v2771
  %2775 = vrot.lane.b32.xlu0 %v2773, 64
  %v2776 = vpop.permute.xlu0 %2775
  %v2778 = vadd.f32 %v1827, %v2776
  %v2779 = vtanh.pop %v2778
  %v2780 = vsub.f32 1.0, %v2768
  %2782 = vrot.lane.b32.xlu0 %v2779, 96
  %v2783 = vpop.permute.xlu0 %2782
  %v2785 = vmul.f32 %v2780, %v2783
  %v2786 = vmul.f32 %v2768, %v2637
  %v2787 = vadd.f32 %v2785, %v2786
  %v2788 = vmul.f32 %v83, %v2787
  %v2789 = vsub.f32 %v2787, %v2637
  %v2790 = vmul.f32 %v83, %v2789
  %v2791 = vadd.f32 %v2637, %v2790
  %v2792 = vpack.c.bf16 %v2714, %v2714
  %2794 = vrot.lane.b32.xlu0 %v2792, 96
  %v2795 = vpop.permute.xlu0 %2794
  %v2797 = vsel %vm336, %v2795, 0
  %2799 = vmatprep.subr.bf16.mxu0 0
  %2800 = vmatpush1.bf16.msra.mxu0 0
  %2801 = vmatprep.subr.bf16.mxu0 0
  %2802 = vmatpush1.bf16.msra.mxu0 0
  %2803 = vmatprep.subr.bf16.mxu0 0
  %2804 = vmatpush1.bf16.msra.mxu0 0
  %2805 = vmatprep.subr.bf16.mxu0 0
  %2806 = vmatpush1.bf16.msra.mxu0 0
  %2807 = vmatprep.subr.bf16.mxu0 0
  %2808 = vmatpush1.bf16.msra.mxu0 0
  %2809 = vmatprep.subr.bf16.mxu0 0
  %2810 = vmatpush1.bf16.msra.mxu0 0
  %2811 = vmatprep.subr.bf16.mxu0 0
  %2812 = vmatpush1.bf16.msra.mxu0 %v1871
  %2813 = vmatprep.subr.bf16.mxu0 0
  %2814 = vmatpush1.bf16.msra.mxu0 %v1870
  %2815 = vmatprep.subr.bf16.mxu0 0
  %2816 = vmatpush2.bf16.msra.mxu0 0
  %2817 = vmatprep.subr.bf16.mxu0 0
  %2818 = vmatpush2.bf16.msra.mxu0 0
  %2819 = vmatprep.subr.bf16.mxu0 0
  %2820 = vmatpush2.bf16.msra.mxu0 0
  %2821 = vmatprep.subr.bf16.mxu0 0
  %2822 = vmatpush2.bf16.msra.mxu0 0
  %2823 = vmatprep.subr.bf16.mxu0 0
  %2824 = vmatpush2.bf16.msra.mxu0 0
  %2825 = vmatprep.subr.bf16.mxu0 0
  %2826 = vmatpush2.bf16.msra.mxu0 0
  %2827 = vmatprep.subr.bf16.mxu0 0
  %2828 = vmatpush2.bf16.msra.mxu0 0
  %2829 = vmatprep.subr.bf16.mxu0 0
  %2830 = vmatpush2.bf16.msra.mxu0 0
  %2831 = vmatprep.mubr.bf16.mxu0 0
  %2832 = vmatmul.mubr.bf16.gmra.mxu0 %v2797
  %v2833 = vpop.f32.mrf.mxu0
  %v2834 = vadd.f32 %v1852, %v2833
  %v2835 = vpop.f32.mrf.mxu0
  %v2836 = vpop.f32.mrf.mxu0
  %v2837 = vpop.f32.mrf.mxu0
  %2838 = vdwg.mxu0
  %v2839 = vadd.f32 %v1834, %v2834
  %v2840 = vxor.u32 %v2839, 2147483648
  %v2841 = vmul.f32 %v2840, 1.442695
  %v2842 = vpow.pop %v2841
  %v2843 = vadd.f32 %v2842, 1.0
  %v2844 = vrcp.pop %v2843
  %v2845 = vmul.f32 1.0, %v2844
  %2847 = vrot.lane.b32.xlu0 %v2834, 64
  %v2848 = vpop.permute.xlu0 %2847
  %v2850 = vmul.f32 %v2845, %v2848
  %2852 = vrot.lane.b32.xlu0 %v2850, 64
  %v2853 = vpop.permute.xlu0 %2852
  %v2855 = vadd.f32 %v1834, %v2853
  %v2856 = vtanh.pop %v2855
  %v2857 = vsub.f32 1.0, %v2845
  %2859 = vrot.lane.b32.xlu0 %v2856, 96
  %v2860 = vpop.permute.xlu0 %2859
  %v2862 = vmul.f32 %v2857, %v2860
  %v2863 = vmul.f32 %v2845, %v2714
  %v2864 = vadd.f32 %v2862, %v2863
  %v2865 = vmul.f32 %v115, %v2864
  %v2866 = vsub.f32 %v2864, %v2714
  %v2867 = vmul.f32 %v115, %v2866
  %v2868 = vadd.f32 %v2714, %v2867
  %v2869 = vpack.c.bf16 %v2791, %v2791
  %2871 = vrot.lane.b32.xlu0 %v2869, 96
  %v2872 = vpop.permute.xlu0 %2871
  %v2874 = vsel %vm336, %v2872, 0
  %2876 = vmatprep.subr.bf16.mxu0 0
  %2877 = vmatpush1.bf16.msra.mxu0 0
  %2878 = vmatprep.subr.bf16.mxu0 0
  %2879 = vmatpush1.bf16.msra.mxu0 0
  %2880 = vmatprep.subr.bf16.mxu0 0
  %2881 = vmatpush1.bf16.msra.mxu0 0
  %2882 = vmatprep.subr.bf16.mxu0 0
  %2883 = vmatpush1.bf16.msra.mxu0 0
  %2884 = vmatprep.subr.bf16.mxu0 0
  %2885 = vmatpush1.bf16.msra.mxu0 0
  %2886 = vmatprep.subr.bf16.mxu0 0
  %2887 = vmatpush1.bf16.msra.mxu0 0
  %2888 = vmatprep.subr.bf16.mxu0 0
  %2889 = vmatpush1.bf16.msra.mxu0 %v1951
  %2890 = vmatprep.subr.bf16.mxu0 0
  %2891 = vmatpush1.bf16.msra.mxu0 %v1950
  %2892 = vmatprep.subr.bf16.mxu0 0
  %2893 = vmatpush2.bf16.msra.mxu0 0
  %2894 = vmatprep.subr.bf16.mxu0 0
  %2895 = vmatpush2.bf16.msra.mxu0 0
  %2896 = vmatprep.subr.bf16.mxu0 0
  %2897 = vmatpush2.bf16.msra.mxu0 0
  %2898 = vmatprep.subr.bf16.mxu0 0
  %2899 = vmatpush2.bf16.msra.mxu0 0
  %2900 = vmatprep.subr.bf16.mxu0 0
  %2901 = vmatpush2.bf16.msra.mxu0 0
  %2902 = vmatprep.subr.bf16.mxu0 0
  %2903 = vmatpush2.bf16.msra.mxu0 0
  %2904 = vmatprep.subr.bf16.mxu0 0
  %2905 = vmatpush2.bf16.msra.mxu0 0
  %2906 = vmatprep.subr.bf16.mxu0 0
  %2907 = vmatpush2.bf16.msra.mxu0 0
  %2908 = vmatprep.mubr.bf16.mxu0 0
  %2909 = vmatmul.mubr.bf16.gmra.mxu0 %v2874
  %v2910 = vpop.f32.mrf.mxu0
  %v2911 = vadd.f32 %v1860, %v2910
  %v2912 = vpop.f32.mrf.mxu0
  %v2913 = vpop.f32.mrf.mxu0
  %v2914 = vpop.f32.mrf.mxu0
  %2915 = vdwg.mxu0
  %v2916 = vadd.f32 %v1825, %v2911
  %v2917 = vxor.u32 %v2916, 2147483648
  %v2918 = vmul.f32 %v2917, 1.442695
  %v2919 = vpow.pop %v2918
  %v2920 = vadd.f32 %v2919, 1.0
  %v2921 = vrcp.pop %v2920
  %v2922 = vmul.f32 1.0, %v2921
  %2924 = vrot.lane.b32.xlu0 %v2911, 64
  %v2925 = vpop.permute.xlu0 %2924
  %v2927 = vmul.f32 %v2922, %v2925
  %2929 = vrot.lane.b32.xlu0 %v2927, 64
  %v2930 = vpop.permute.xlu0 %2929
  %v2932 = vadd.f32 %v1825, %v2930
  %v2933 = vtanh.pop %v2932
  %v2934 = vsub.f32 1.0, %v2922
  %2936 = vrot.lane.b32.xlu0 %v2933, 96
  %v2937 = vpop.permute.xlu0 %2936
  %v2939 = vmul.f32 %v2934, %v2937
  %v2940 = vmul.f32 %v2922, %v2791
  %v2941 = vadd.f32 %v2939, %v2940
  %v2942 = vmul.f32 %v75, %v2941
  %v2943 = vsub.f32 %v2941, %v2791
  %v2944 = vmul.f32 %v75, %v2943
  %v2945 = vadd.f32 %v2791, %v2944
  %v2946 = vpack.c.bf16 %v2868, %v2868
  %2948 = vrot.lane.b32.xlu0 %v2946, 96
  %v2949 = vpop.permute.xlu0 %2948
  %v2951 = vsel %vm336, %v2949, 0
  %2953 = vmatprep.subr.bf16.mxu0 0
  %2954 = vmatpush1.bf16.msra.mxu0 0
  %2955 = vmatprep.subr.bf16.mxu0 0
  %2956 = vmatpush1.bf16.msra.mxu0 0
  %2957 = vmatprep.subr.bf16.mxu0 0
  %2958 = vmatpush1.bf16.msra.mxu0 0
  %2959 = vmatprep.subr.bf16.mxu0 0
  %2960 = vmatpush1.bf16.msra.mxu0 0
  %2961 = vmatprep.subr.bf16.mxu0 0
  %2962 = vmatpush1.bf16.msra.mxu0 0
  %2963 = vmatprep.subr.bf16.mxu0 0
  %2964 = vmatpush1.bf16.msra.mxu0 0
  %2965 = vmatprep.subr.bf16.mxu0 0
  %2966 = vmatpush1.bf16.msra.mxu0 %v1871
  %2967 = vmatprep.subr.bf16.mxu0 0
  %2968 = vmatpush1.bf16.msra.mxu0 %v1870
  %2969 = vmatprep.subr.bf16.mxu0 0
  %2970 = vmatpush2.bf16.msra.mxu0 0
  %2971 = vmatprep.subr.bf16.mxu0 0
  %2972 = vmatpush2.bf16.msra.mxu0 0
  %2973 = vmatprep.subr.bf16.mxu0 0
  %2974 = vmatpush2.bf16.msra.mxu0 0
  %2975 = vmatprep.subr.bf16.mxu0 0
  %2976 = vmatpush2.bf16.msra.mxu0 0
  %2977 = vmatprep.subr.bf16.mxu0 0
  %2978 = vmatpush2.bf16.msra.mxu0 0
  %2979 = vmatprep.subr.bf16.mxu0 0
  %2980 = vmatpush2.bf16.msra.mxu0 0
  %2981 = vmatprep.subr.bf16.mxu0 0
  %2982 = vmatpush2.bf16.msra.mxu0 0
  %2983 = vmatprep.subr.bf16.mxu0 0
  %2984 = vmatpush2.bf16.msra.mxu0 0
  %2985 = vmatprep.mubr.bf16.mxu0 0
  %2986 = vmatmul.mubr.bf16.gmra.mxu0 %v2951
  %v2987 = vpop.f32.mrf.mxu0
  %v2988 = vadd.f32 %v1852, %v2987
  %v2989 = vpop.f32.mrf.mxu0
  %v2990 = vpop.f32.mrf.mxu0
  %v2991 = vpop.f32.mrf.mxu0
  %2992 = vdwg.mxu0
  %v2993 = vadd.f32 %v1836, %v2988
  %v2994 = vxor.u32 %v2993, 2147483648
  %v2995 = vmul.f32 %v2994, 1.442695
  %v2996 = vpow.pop %v2995
  %v2997 = vadd.f32 %v2996, 1.0
  %v2998 = vrcp.pop %v2997
  %v2999 = vmul.f32 1.0, %v2998
  %3001 = vrot.lane.b32.xlu0 %v2988, 64
  %v3002 = vpop.permute.xlu0 %3001
  %v3004 = vmul.f32 %v2999, %v3002
  %3006 = vrot.lane.b32.xlu0 %v3004, 64
  %v3007 = vpop.permute.xlu0 %3006
  %v3009 = vadd.f32 %v1836, %v3007
  %v3010 = vtanh.pop %v3009
  %v3011 = vsub.f32 1.0, %v2999
  %3013 = vrot.lane.b32.xlu0 %v3010, 96
  %v3014 = vpop.permute.xlu0 %3013
  %v3016 = vmul.f32 %v3011, %v3014
  %v3017 = vmul.f32 %v2999, %v2868
  %v3018 = vadd.f32 %v3016, %v3017
  %v3019 = vmul.f32 %v123, %v3018
  %v3020 = vpack.c.bf16 %v2945, %v2945
  %3022 = vrot.lane.b32.xlu0 %v3020, 96
  %v3023 = vpop.permute.xlu0 %3022
  %v3025 = vsel %vm336, %v3023, 0
  %3027 = vmatprep.subr.bf16.mxu0 0
  %3028 = vmatpush1.bf16.msra.mxu0 0
  %3029 = vmatprep.subr.bf16.mxu0 0
  %3030 = vmatpush1.bf16.msra.mxu0 0
  %3031 = vmatprep.subr.bf16.mxu0 0
  %3032 = vmatpush1.bf16.msra.mxu0 0
  %3033 = vmatprep.subr.bf16.mxu0 0
  %3034 = vmatpush1.bf16.msra.mxu0 0
  %3035 = vmatprep.subr.bf16.mxu0 0
  %3036 = vmatpush1.bf16.msra.mxu0 0
  %3037 = vmatprep.subr.bf16.mxu0 0
  %3038 = vmatpush1.bf16.msra.mxu0 0
  %3039 = vmatprep.subr.bf16.mxu0 0
  %3040 = vmatpush1.bf16.msra.mxu0 %v1951
  %3041 = vmatprep.subr.bf16.mxu0 0
  %3042 = vmatpush1.bf16.msra.mxu0 %v1950
  %3043 = vmatprep.subr.bf16.mxu0 0
  %3044 = vmatpush2.bf16.msra.mxu0 0
  %3045 = vmatprep.subr.bf16.mxu0 0
  %3046 = vmatpush2.bf16.msra.mxu0 0
  %3047 = vmatprep.subr.bf16.mxu0 0
  %3048 = vmatpush2.bf16.msra.mxu0 0
  %3049 = vmatprep.subr.bf16.mxu0 0
  %3050 = vmatpush2.bf16.msra.mxu0 0
  %3051 = vmatprep.subr.bf16.mxu0 0
  %3052 = vmatpush2.bf16.msra.mxu0 0
  %3053 = vmatprep.subr.bf16.mxu0 0
  %3054 = vmatpush2.bf16.msra.mxu0 0
  %3055 = vmatprep.subr.bf16.mxu0 0
  %3056 = vmatpush2.bf16.msra.mxu0 0
  %3057 = vmatprep.subr.bf16.mxu0 0
  %3058 = vmatpush2.bf16.msra.mxu0 0
  %3059 = vmatprep.mubr.bf16.mxu0 0
  %3060 = vmatmul.mubr.bf16.gmra.mxu0 %v3025
  %v3061 = vpop.f32.mrf.mxu0
  %v3062 = vadd.f32 %v1860, %v3061
  %v3063 = vpop.f32.mrf.mxu0
  %v3064 = vpop.f32.mrf.mxu0
  %v3065 = vpop.f32.mrf.mxu0
  %3066 = vdwg.mxu0
  %v3067 = vadd.f32 %v1823, %v3062
  %v3068 = vxor.u32 %v3067, 2147483648
  %v3069 = vmul.f32 %v3068, 1.442695
  %v3070 = vpow.pop %v3069
  %v3071 = vadd.f32 %v3070, 1.0
  %v3072 = vrcp.pop %v3071
  %v3073 = vmul.f32 1.0, %v3072
  %3075 = vrot.lane.b32.xlu0 %v3062, 64
  %v3076 = vpop.permute.xlu0 %3075
  %v3078 = vmul.f32 %v3073, %v3076
  %3080 = vrot.lane.b32.xlu0 %v3078, 64
  %v3081 = vpop.permute.xlu0 %3080
  %v3083 = vadd.f32 %v1823, %v3081
  %v3084 = vtanh.pop %v3083
  %v3085 = vsub.f32 1.0, %v3073
  %3087 = vrot.lane.b32.xlu0 %v3084, 96
  %v3088 = vpop.permute.xlu0 %3087
  %v3090 = vmul.f32 %v3085, %v3088
  %v3091 = vmul.f32 %v3073, %v2945
  %v3092 = vadd.f32 %v3090, %v3091
  %v3093 = vmul.f32 %v67, %v3092
  %v3094 = vpack.c.bf16 %v2095, %v1940
  %v3095 = vpack.c.bf16 %v2403, %v2249
  %v3096 = vpack.c.bf16 %v2711, %v2557
  %v3097 = vpack.c.bf16 %v3019, %v2865
  %v3098 = vld [vmem:[%s11] sm:$0xf]
  %v3099 = vld [vmem:[%s11 + $0x4] sm:$0xf]
  %v3100 = vld [vmem:[%s11 + $0x8] sm:$0xf]
  %v3101 = vld [vmem:[%s11 + $0xc] sm:$0xf]
  %v3102 = vpack.c.bf16 %v2942, %v3093
  %v3103 = vpack.c.bf16 %v2634, %v2788
  %v3104 = vpack.c.bf16 %v2326, %v2480
  %v3105 = vpack.c.bf16 %v2020, %v2172
  %v3106 = vld [vmem:[%s12] sm:$0xf]
  %v3107 = vld [vmem:[%s12 + $0x4] sm:$0xf]
  %v3108 = vld [vmem:[%s12 + $0x8] sm:$0xf]
  %v3109 = vld [vmem:[%s12 + $0xc] sm:$0xf]
  %3114 = vrot.lane.b32.xlu0 %v3102, 96
  %v3115 = vpop.permute.xlu0 %3114
  %3116 = vrot.lane.b32.xlu0 %v3103, 96
  %v3117 = vpop.permute.xlu0 %3116
  %3118 = vrot.lane.b32.xlu0 %v3104, 96
  %v3119 = vpop.permute.xlu0 %3118
  %3120 = vrot.lane.b32.xlu0 %v3105, 96
  %v3121 = vpop.permute.xlu0 %3120
  %v3126 = vunpack.c.l.b16 %v3106
  %v3127 = vunpack.c.l.b16 %v3107
  %v3128 = vunpack.c.l.b16 %v3108
  %v3129 = vunpack.c.l.b16 %v3109
  %v3130 = vpack.c.b16 %v3127, %v3126
  %v3131 = vpack.c.b16 %v3129, %v3128
  %v3135 = vsel %vm336, %v3115, 0
  %v3138 = vsel %vm336, %v3117, 0
  %v3141 = vsel %vm336, %v3119, 0
  %v3144 = vsel %vm336, %v3121, 0
  %3146 = vmatprep.subr.bf16.mxu0 0
  %3147 = vmatpush1.bf16.msra.mxu0 0
  %3148 = vmatprep.subr.bf16.mxu0 0
  %3149 = vmatpush1.bf16.msra.mxu0 0
  %3150 = vmatprep.subr.bf16.mxu0 0
  %3151 = vmatpush1.bf16.msra.mxu0 0
  %3152 = vmatprep.subr.bf16.mxu0 0
  %3153 = vmatpush1.bf16.msra.mxu0 0
  %3154 = vmatprep.subr.bf16.mxu0 0
  %3155 = vmatpush1.bf16.msra.mxu0 0
  %3156 = vmatprep.subr.bf16.mxu0 0
  %3157 = vmatpush1.bf16.msra.mxu0 0
  %3158 = vmatprep.subr.bf16.mxu0 0
  %3159 = vmatpush1.bf16.msra.mxu0 %v3131
  %3160 = vmatprep.subr.bf16.mxu0 0
  %3161 = vmatpush1.bf16.msra.mxu0 %v3130
  %3162 = vmatprep.subr.bf16.mxu0 0
  %3163 = vmatpush2.bf16.msra.mxu0 0
  %3164 = vmatprep.subr.bf16.mxu0 0
  %3165 = vmatpush2.bf16.msra.mxu0 0
  %3166 = vmatprep.subr.bf16.mxu0 0
  %3167 = vmatpush2.bf16.msra.mxu0 0
  %3168 = vmatprep.subr.bf16.mxu0 0
  %3169 = vmatpush2.bf16.msra.mxu0 0
  %3170 = vmatprep.subr.bf16.mxu0 0
  %3171 = vmatpush2.bf16.msra.mxu0 0
  %3172 = vmatprep.subr.bf16.mxu0 0
  %3173 = vmatpush2.bf16.msra.mxu0 0
  %3174 = vmatprep.subr.bf16.mxu0 0
  %3175 = vmatpush2.bf16.msra.mxu0 0
  %3176 = vmatprep.subr.bf16.mxu0 0
  %3177 = vmatpush2.bf16.msra.mxu0 0
  %3178 = vmatprep.mubr.bf16.mxu0 0
  %3179 = vmatmul.mubr.bf16.gmra.mxu0 %v3135
  %v3180 = vpop.f32.mrf.mxu0
  %v3181 = vadd.f32 0.0, %v3180
  %v3182 = vpop.f32.mrf.mxu0
  %v3183 = vpop.f32.mrf.mxu0
  %v3184 = vadd.f32 0.0, %v3183
  %v3185 = vpop.f32.mrf.mxu0
  %3186 = vmatprep.mubr.bf16.mxu0 0
  %3187 = vmatmul.mubr.bf16.gmra.mxu0 %v3138
  %v3188 = vpop.f32.mrf.mxu0
  %v3189 = vadd.f32 0.0, %v3188
  %v3190 = vpop.f32.mrf.mxu0
  %v3191 = vpop.f32.mrf.mxu0
  %v3192 = vadd.f32 0.0, %v3191
  %v3193 = vpop.f32.mrf.mxu0
  %3194 = vmatprep.mubr.bf16.mxu0 0
  %3195 = vmatmul.mubr.bf16.gmra.mxu0 %v3141
  %v3196 = vpop.f32.mrf.mxu0
  %v3197 = vadd.f32 0.0, %v3196
  %v3198 = vpop.f32.mrf.mxu0
  %v3199 = vpop.f32.mrf.mxu0
  %v3200 = vadd.f32 0.0, %v3199
  %v3201 = vpop.f32.mrf.mxu0
  %3202 = vmatprep.mubr.bf16.mxu0 0
  %3203 = vmatmul.mubr.bf16.gmra.mxu0 %v3144
  %v3204 = vpop.f32.mrf.mxu0
  %v3205 = vadd.f32 0.0, %v3204
  %v3206 = vpop.f32.mrf.mxu0
  %v3207 = vpop.f32.mrf.mxu0
  %v3208 = vadd.f32 0.0, %v3207
  %v3209 = vpop.f32.mrf.mxu0
  %3210 = vdwg.mxu0
  %3215 = vrot.lane.b32.xlu0 %v3094, 96
  %v3216 = vpop.permute.xlu0 %3215
  %3217 = vrot.lane.b32.xlu0 %v3095, 96
  %v3218 = vpop.permute.xlu0 %3217
  %3219 = vrot.lane.b32.xlu0 %v3096, 96
  %v3220 = vpop.permute.xlu0 %3219
  %3221 = vrot.lane.b32.xlu0 %v3097, 96
  %v3222 = vpop.permute.xlu0 %3221
  %v3227 = vunpack.c.l.b16 %v3098
  %v3228 = vunpack.c.l.b16 %v3099
  %v3229 = vunpack.c.l.b16 %v3100
  %v3230 = vunpack.c.l.b16 %v3101
  %v3231 = vpack.c.b16 %v3228, %v3227
  %v3232 = vpack.c.b16 %v3230, %v3229
  %v3236 = vsel %vm336, %v3216, 0
  %v3239 = vsel %vm336, %v3218, 0
  %v3242 = vsel %vm336, %v3220, 0
  %v3245 = vsel %vm336, %v3222, 0
  %3247 = vmatprep.subr.bf16.mxu0 0
  %3248 = vmatpush1.bf16.msra.mxu0 0
  %3249 = vmatprep.subr.bf16.mxu0 0
  %3250 = vmatpush1.bf16.msra.mxu0 0
  %3251 = vmatprep.subr.bf16.mxu0 0
  %3252 = vmatpush1.bf16.msra.mxu0 0
  %3253 = vmatprep.subr.bf16.mxu0 0
  %3254 = vmatpush1.bf16.msra.mxu0 0
  %3255 = vmatprep.subr.bf16.mxu0 0
  %3256 = vmatpush1.bf16.msra.mxu0 0
  %3257 = vmatprep.subr.bf16.mxu0 0
  %3258 = vmatpush1.bf16.msra.mxu0 0
  %3259 = vmatprep.subr.bf16.mxu0 0
  %3260 = vmatpush1.bf16.msra.mxu0 %v3232
  %3261 = vmatprep.subr.bf16.mxu0 0
  %3262 = vmatpush1.bf16.msra.mxu0 %v3231
  %3263 = vmatprep.subr.bf16.mxu0 0
  %3264 = vmatpush2.bf16.msra.mxu0 0
  %3265 = vmatprep.subr.bf16.mxu0 0
  %3266 = vmatpush2.bf16.msra.mxu0 0
  %3267 = vmatprep.subr.bf16.mxu0 0
  %3268 = vmatpush2.bf16.msra.mxu0 0
  %3269 = vmatprep.subr.bf16.mxu0 0
  %3270 = vmatpush2.bf16.msra.mxu0 0
  %3271 = vmatprep.subr.bf16.mxu0 0
  %3272 = vmatpush2.bf16.msra.mxu0 0
  %3273 = vmatprep.subr.bf16.mxu0 0
  %3274 = vmatpush2.bf16.msra.mxu0 0
  %3275 = vmatprep.subr.bf16.mxu0 0
  %3276 = vmatpush2.bf16.msra.mxu0 0
  %3277 = vmatprep.subr.bf16.mxu0 0
  %3278 = vmatpush2.bf16.msra.mxu0 0
  %3279 = vmatprep.mubr.bf16.mxu0 0
  %3280 = vmatmul.mubr.bf16.gmra.mxu0 %v3236
  %v3281 = vpop.f32.mrf.mxu0
  %v3282 = vadd.f32 %v3181, %v3281
  %v3283 = vpop.f32.mrf.mxu0
  %v3284 = vpop.f32.mrf.mxu0
  %v3285 = vadd.f32 %v3184, %v3284
  %v3286 = vpop.f32.mrf.mxu0
  %3287 = vmatprep.mubr.bf16.mxu0 0
  %3288 = vmatmul.mubr.bf16.gmra.mxu0 %v3239
  %v3289 = vpop.f32.mrf.mxu0
  %v3290 = vadd.f32 %v3189, %v3289
  %v3291 = vpop.f32.mrf.mxu0
  %v3292 = vpop.f32.mrf.mxu0
  %v3293 = vadd.f32 %v3192, %v3292
  %v3294 = vpop.f32.mrf.mxu0
  %3295 = vmatprep.mubr.bf16.mxu0 0
  %3296 = vmatmul.mubr.bf16.gmra.mxu0 %v3242
  %v3297 = vpop.f32.mrf.mxu0
  %v3298 = vadd.f32 %v3197, %v3297
  %v3299 = vpop.f32.mrf.mxu0
  %v3300 = vpop.f32.mrf.mxu0
  %v3301 = vadd.f32 %v3200, %v3300
  %v3302 = vpop.f32.mrf.mxu0
  %3303 = vmatprep.mubr.bf16.mxu0 0
  %3304 = vmatmul.mubr.bf16.gmra.mxu0 %v3245
  %v3305 = vpop.f32.mrf.mxu0
  %v3306 = vadd.f32 %v3205, %v3305
  %v3307 = vpop.f32.mrf.mxu0
  %v3308 = vpop.f32.mrf.mxu0
  %v3309 = vadd.f32 %v3208, %v3308
  %v3310 = vpop.f32.mrf.mxu0
  %3311 = vdwg.mxu0
  %v3312 = vld [vmem:[%s13] sm:$0x1]
  %v3314 = vlaneseq
  %v3315 = vshrl.u32 %v3314, 7
  %v3316 = vsub.s32 0, %v3315
  %v3317 = vrot.slane %v3312, %v3316
  %v3319 = vadd.f32 %v3282, %v3317
  %v3320 = vadd.f32 %v3285, %v3317
  %v3321 = vadd.f32 %v3290, %v3317
  %v3322 = vadd.f32 %v3293, %v3317
  %v3323 = vadd.f32 %v3298, %v3317
  %v3324 = vadd.f32 %v3301, %v3317
  %v3325 = vadd.f32 %v3306, %v3317
  %v3326 = vadd.f32 %v3309, %v3317
  %v3327 = vxor.u32 %v3319, 2147483648
  %v3328 = vxor.u32 %v3320, 2147483648
  %v3329 = vxor.u32 %v3321, 2147483648
  %v3330 = vxor.u32 %v3322, 2147483648
  %v3331 = vxor.u32 %v3323, 2147483648
  %v3332 = vxor.u32 %v3324, 2147483648
  %v3333 = vxor.u32 %v3325, 2147483648
  %v3334 = vxor.u32 %v3326, 2147483648
  %v3335 = vmul.f32 %v3327, 1.442695
  %v3336 = vpow.pop %v3335
  %v3337 = vmul.f32 %v3328, 1.442695
  %v3338 = vpow.pop %v3337
  %v3339 = vmul.f32 %v3329, 1.442695
  %v3340 = vpow.pop %v3339
  %v3341 = vmul.f32 %v3330, 1.442695
  %v3342 = vpow.pop %v3341
  %v3343 = vmul.f32 %v3331, 1.442695
  %v3344 = vpow.pop %v3343
  %v3345 = vmul.f32 %v3332, 1.442695
  %v3346 = vpow.pop %v3345
  %v3347 = vmul.f32 %v3333, 1.442695
  %v3348 = vpow.pop %v3347
  %v3349 = vmul.f32 %v3334, 1.442695
  %v3350 = vpow.pop %v3349
  %v3351 = vadd.f32 %v3336, 1.0
  %v3352 = vadd.f32 %v3338, 1.0
  %v3353 = vadd.f32 %v3340, 1.0
  %v3354 = vadd.f32 %v3342, 1.0
  %v3355 = vadd.f32 %v3344, 1.0
  %v3356 = vadd.f32 %v3346, 1.0
  %v3357 = vadd.f32 %v3348, 1.0
  %v3358 = vadd.f32 %v3350, 1.0
  %v3359 = vrcp.pop %v3351
  %v3360 = vmul.f32 1.0, %v3359
  %v3361 = vrcp.pop %v3352
  %v3362 = vmul.f32 1.0, %v3361
  %v3363 = vrcp.pop %v3353
  %v3364 = vmul.f32 1.0, %v3363
  %v3365 = vrcp.pop %v3354
  %v3366 = vmul.f32 1.0, %v3365
  %v3367 = vrcp.pop %v3355
  %v3368 = vmul.f32 1.0, %v3367
  %v3369 = vrcp.pop %v3356
  %v3370 = vmul.f32 1.0, %v3369
  %v3371 = vrcp.pop %v3357
  %v3372 = vmul.f32 1.0, %v3371
  %v3373 = vrcp.pop %v3358
  %v3374 = vmul.f32 1.0, %v3373
  %v3375 = vmul.f32 %v3319, %v3360
  %v3376 = vmul.f32 %v3320, %v3362
  %v3377 = vmul.f32 %v3321, %v3364
  %v3378 = vmul.f32 %v3322, %v3366
  %v3379 = vmul.f32 %v3323, %v3368
  %v3380 = vmul.f32 %v3324, %v3370
  %v3381 = vmul.f32 %v3325, %v3372
  %v3382 = vmul.f32 %v3326, %v3374
  %v3383 = vpack.c.bf16 %v3376, %v3375
  %v3384 = vpack.c.bf16 %v3378, %v3377
  %v3385 = vpack.c.bf16 %v3380, %v3379
  %v3386 = vpack.c.bf16 %v3382, %v3381
  %v3387 = vld [vmem:[%s14] sm:$0xf]
  %v3388 = vld [vmem:[%s14 + $0x4] sm:$0xf]
  %v3389 = vld [vmem:[%s14 + $0x8] sm:$0xf]
  %v3390 = vld [vmem:[%s14 + $0xc] sm:$0xf]
  %v3391 = vld [vmem:[%s15] sm:$0x1]
  %v3393 = vlaneseq
  %v3394 = vshrl.u32 %v3393, 7
  %v3395 = vsub.s32 0, %v3394
  %v3396 = vrot.slane %v3391, %v3395
  %v3402 = vunpack.c.l.b16 %v3387
  %v3403 = vunpack.c.l.b16 %v3388
  %v3404 = vunpack.c.l.b16 %v3389
  %v3405 = vunpack.c.l.b16 %v3390
  %v3406 = vpack.c.b16 %v3403, %v3402
  %v3407 = vpack.c.b16 %v3405, %v3404
  %v3411 = vsel %vm336, %v3383, 0
  %v3414 = vsel %vm336, %v3384, 0
  %v3417 = vsel %vm336, %v3385, 0
  %v3420 = vsel %vm336, %v3386, 0
  %3422 = vmatprep.subr.bf16.mxu0 0
  %3423 = vmatpush1.bf16.msra.mxu0 0
  %3424 = vmatprep.subr.bf16.mxu0 0
  %3425 = vmatpush1.bf16.msra.mxu0 0
  %3426 = vmatprep.subr.bf16.mxu0 0
  %3427 = vmatpush1.bf16.msra.mxu0 0
  %3428 = vmatprep.subr.bf16.mxu0 0
  %3429 = vmatpush1.bf16.msra.mxu0 0
  %3430 = vmatprep.subr.bf16.mxu0 0
  %3431 = vmatpush1.bf16.msra.mxu0 0
  %3432 = vmatprep.subr.bf16.mxu0 0
  %3433 = vmatpush1.bf16.msra.mxu0 0
  %3434 = vmatprep.subr.bf16.mxu0 0
  %3435 = vmatpush1.bf16.msra.mxu0 %v3407
  %3436 = vmatprep.subr.bf16.mxu0 0
  %3437 = vmatpush1.bf16.msra.mxu0 %v3406
  %3438 = vmatprep.subr.bf16.mxu0 0
  %3439 = vmatpush2.bf16.msra.mxu0 0
  %3440 = vmatprep.subr.bf16.mxu0 0
  %3441 = vmatpush2.bf16.msra.mxu0 0
  %3442 = vmatprep.subr.bf16.mxu0 0
  %3443 = vmatpush2.bf16.msra.mxu0 0
  %3444 = vmatprep.subr.bf16.mxu0 0
  %3445 = vmatpush2.bf16.msra.mxu0 0
  %3446 = vmatprep.subr.bf16.mxu0 0
  %3447 = vmatpush2.bf16.msra.mxu0 0
  %3448 = vmatprep.subr.bf16.mxu0 0
  %3449 = vmatpush2.bf16.msra.mxu0 0
  %3450 = vmatprep.subr.bf16.mxu0 0
  %3451 = vmatpush2.bf16.msra.mxu0 0
  %3452 = vmatprep.subr.bf16.mxu0 0
  %3453 = vmatpush2.bf16.msra.mxu0 0
  %3454 = vmatprep.mubr.bf16.mxu0 0
  %3455 = vmatmul.mubr.bf16.gmra.mxu0 %v3411
  %v3456 = vpop.f32.mrf.mxu0
  %v3457 = vadd.f32 %v3396, %v3456
  %v3458 = vpop.f32.mrf.mxu0
  %v3459 = vpop.f32.mrf.mxu0
  %v3460 = vadd.f32 %v3396, %v3459
  %v3461 = vpop.f32.mrf.mxu0
  %3462 = vmatprep.mubr.bf16.mxu0 0
  %3463 = vmatmul.mubr.bf16.gmra.mxu0 %v3414
  %v3464 = vpop.f32.mrf.mxu0
  %v3465 = vadd.f32 %v3396, %v3464
  %v3466 = vpop.f32.mrf.mxu0
  %v3467 = vpop.f32.mrf.mxu0
  %v3468 = vadd.f32 %v3396, %v3467
  %v3469 = vpop.f32.mrf.mxu0
  %3470 = vmatprep.mubr.bf16.mxu0 0
  %3471 = vmatmul.mubr.bf16.gmra.mxu0 %v3417
  %v3472 = vpop.f32.mrf.mxu0
  %v3473 = vadd.f32 %v3396, %v3472
  %v3474 = vpop.f32.mrf.mxu0
  %v3475 = vpop.f32.mrf.mxu0
  %v3476 = vadd.f32 %v3396, %v3475
  %v3477 = vpop.f32.mrf.mxu0
  %3478 = vmatprep.mubr.bf16.mxu0 0
  %3479 = vmatmul.mubr.bf16.gmra.mxu0 %v3420
  %v3480 = vpop.f32.mrf.mxu0
  %v3481 = vadd.f32 %v3396, %v3480
  %v3482 = vpop.f32.mrf.mxu0
  %v3483 = vpop.f32.mrf.mxu0
  %v3484 = vadd.f32 %v3396, %v3483
  %v3485 = vpop.f32.mrf.mxu0
  %3486 = vdwg.mxu0
  %v3487 = vxor.u32 %v3457, 2147483648
  %v3488 = vxor.u32 %v3460, 2147483648
  %v3489 = vxor.u32 %v3465, 2147483648
  %v3490 = vxor.u32 %v3468, 2147483648
  %v3491 = vxor.u32 %v3473, 2147483648
  %v3492 = vxor.u32 %v3476, 2147483648
  %v3493 = vxor.u32 %v3481, 2147483648
  %v3494 = vxor.u32 %v3484, 2147483648
  %v3495 = vmul.f32 %v3487, 1.442695
  %v3496 = vpow.pop %v3495
  %v3497 = vmul.f32 %v3488, 1.442695
  %v3498 = vpow.pop %v3497
  %v3499 = vmul.f32 %v3489, 1.442695
  %v3500 = vpow.pop %v3499
  %v3501 = vmul.f32 %v3490, 1.442695
  %v3502 = vpow.pop %v3501
  %v3503 = vmul.f32 %v3491, 1.442695
  %v3504 = vpow.pop %v3503
  %v3505 = vmul.f32 %v3492, 1.442695
  %v3506 = vpow.pop %v3505
  %v3507 = vmul.f32 %v3493, 1.442695
  %v3508 = vpow.pop %v3507
  %v3509 = vmul.f32 %v3494, 1.442695
  %v3510 = vpow.pop %v3509
  %v3511 = vadd.f32 %v3496, 1.0
  %v3512 = vadd.f32 %v3498, 1.0
  %v3513 = vadd.f32 %v3500, 1.0
  %v3514 = vadd.f32 %v3502, 1.0
  %v3515 = vadd.f32 %v3504, 1.0
  %v3516 = vadd.f32 %v3506, 1.0
  %v3517 = vadd.f32 %v3508, 1.0
  %v3518 = vadd.f32 %v3510, 1.0
  %v3519 = vrcp.pop %v3511
  %v3520 = vmul.f32 1.0, %v3519
  %v3521 = vrcp.pop %v3512
  %v3522 = vmul.f32 1.0, %v3521
  %v3523 = vrcp.pop %v3513
  %v3524 = vmul.f32 1.0, %v3523
  %v3525 = vrcp.pop %v3514
  %v3526 = vmul.f32 1.0, %v3525
  %v3527 = vrcp.pop %v3515
  %v3528 = vmul.f32 1.0, %v3527
  %v3529 = vrcp.pop %v3516
  %v3530 = vmul.f32 1.0, %v3529
  %v3531 = vrcp.pop %v3517
  %v3532 = vmul.f32 1.0, %v3531
  %v3533 = vrcp.pop %v3518
  %v3534 = vmul.f32 1.0, %v3533
  %v3535 = vmul.f32 %v3457, %v3520
  %v3536 = vmul.f32 %v3460, %v3522
  %v3537 = vmul.f32 %v3465, %v3524
  %v3538 = vmul.f32 %v3468, %v3526
  %v3539 = vmul.f32 %v3473, %v3528
  %v3540 = vmul.f32 %v3476, %v3530
  %v3541 = vmul.f32 %v3481, %v3532
  %v3542 = vmul.f32 %v3484, %v3534
  %v3543 = vpack.c.bf16 %v3536, %v3535
  %v3544 = vpack.c.bf16 %v3538, %v3537
  %v3545 = vpack.c.bf16 %v3540, %v3539
  %v3546 = vpack.c.bf16 %v3542, %v3541
  %v3547 = vld [vmem:[%s16] sm:$0xf]
  %v3548 = vld [vmem:[%s16 + $0x4] sm:$0xf]
  %v3549 = vld [vmem:[%s17] sm:$0x1]
  %v3551 = vlaneseq
  %v3552 = vshrl.u32 %v3551, 7
  %v3553 = vsub.s32 0, %v3552
  %v3554 = vrot.slane %v3549, %v3553
  %v3558 = vunpack.c.l.b16 %v3547
  %v3559 = vunpack.c.l.b16 %v3548
  %v3560 = vpack.c.b16 %v3559, %v3558
  %vm3562 = vcmask 130048
  %v3564 = vsel %vm3562, %v3543, 0
  %v3567 = vsel %vm3562, %v3544, 0
  %v3570 = vsel %vm3562, %v3545, 0
  %v3573 = vsel %vm3562, %v3546, 0
  %3575 = vmatprep.subr.bf16.mxu0 0
  %3576 = vmatpush1.bf16.msra.mxu0 0
  %3577 = vmatprep.subr.bf16.mxu0 0
  %3578 = vmatpush1.bf16.msra.mxu0 0
  %3579 = vmatprep.subr.bf16.mxu0 0
  %3580 = vmatpush1.bf16.msra.mxu0 0
  %3581 = vmatprep.subr.bf16.mxu0 0
  %3582 = vmatpush1.bf16.msra.mxu0 0
  %3583 = vmatprep.subr.bf16.mxu0 0
  %3584 = vmatpush1.bf16.msra.mxu0 0
  %3585 = vmatprep.subr.bf16.mxu0 0
  %3586 = vmatpush1.bf16.msra.mxu0 0
  %3587 = vmatprep.subr.bf16.mxu0 0
  %3588 = vmatpush1.bf16.msra.mxu0 0
  %3589 = vmatprep.subr.bf16.mxu0 0
  %3590 = vmatpush1.bf16.msra.mxu0 %v3560
  %3591 = vmatprep.subr.bf16.mxu0 0
  %3592 = vmatpush2.bf16.msra.mxu0 0
  %3593 = vmatprep.subr.bf16.mxu0 0
  %3594 = vmatpush2.bf16.msra.mxu0 0
  %3595 = vmatprep.subr.bf16.mxu0 0
  %3596 = vmatpush2.bf16.msra.mxu0 0
  %3597 = vmatprep.subr.bf16.mxu0 0
  %3598 = vmatpush2.bf16.msra.mxu0 0
  %3599 = vmatprep.subr.bf16.mxu0 0
  %3600 = vmatpush2.bf16.msra.mxu0 0
  %3601 = vmatprep.subr.bf16.mxu0 0
  %3602 = vmatpush2.bf16.msra.mxu0 0
  %3603 = vmatprep.subr.bf16.mxu0 0
  %3604 = vmatpush2.bf16.msra.mxu0 0
  %3605 = vmatprep.subr.bf16.mxu0 0
  %3606 = vmatpush2.bf16.msra.mxu0 0
  %3607 = vmatprep.mubr.bf16.mxu0 0
  %3608 = vmatmul.mubr.bf16.gmra.mxu0 %v3564
  %v3609 = vpop.f32.mrf.mxu0
  %v3610 = vadd.f32 %v3554, %v3609
  %v3611 = vpop.f32.mrf.mxu0
  %v3612 = vpop.f32.mrf.mxu0
  %v3613 = vadd.f32 %v3554, %v3612
  %v3614 = vpop.f32.mrf.mxu0
  %3615 = vmatprep.mubr.bf16.mxu0 0
  %3616 = vmatmul.mubr.bf16.gmra.mxu0 %v3567
  %v3617 = vpop.f32.mrf.mxu0
  %v3618 = vadd.f32 %v3554, %v3617
  %v3619 = vpop.f32.mrf.mxu0
  %v3620 = vpop.f32.mrf.mxu0
  %v3621 = vadd.f32 %v3554, %v3620
  %v3622 = vpop.f32.mrf.mxu0
  %3623 = vmatprep.mubr.bf16.mxu0 0
  %3624 = vmatmul.mubr.bf16.gmra.mxu0 %v3570
  %v3625 = vpop.f32.mrf.mxu0
  %v3626 = vadd.f32 %v3554, %v3625
  %v3627 = vpop.f32.mrf.mxu0
  %v3628 = vpop.f32.mrf.mxu0
  %v3629 = vadd.f32 %v3554, %v3628
  %v3630 = vpop.f32.mrf.mxu0
  %3631 = vmatprep.mubr.bf16.mxu0 0
  %3632 = vmatmul.mubr.bf16.gmra.mxu0 %v3573
  %v3633 = vpop.f32.mrf.mxu0
  %v3634 = vadd.f32 %v3554, %v3633
  %v3635 = vpop.f32.mrf.mxu0
  %v3636 = vpop.f32.mrf.mxu0
  %v3637 = vadd.f32 %v3554, %v3636
  %v3638 = vpop.f32.mrf.mxu0
  %3639 = vdwg.mxu0
  %3640 = vst [vmem:[%s18] sm:$0xff] %v3610
  %3641 = vst [vmem:[%s18 + $0x8] sm:$0xff] %v3613
  %3642 = vst [vmem:[%s18 + $0x10] sm:$0xff] %v3618
  %3643 = vst [vmem:[%s18 + $0x18] sm:$0xff] %v3621
  %3644 = vst [vmem:[%s18 + $0x20] sm:$0xff] %v3626
  %3645 = vst [vmem:[%s18 + $0x28] sm:$0xff] %v3629
  %3646 = vst [vmem:[%s18 + $0x30] sm:$0xff] %v3634
  %3647 = vst [vmem:[%s18 + $0x38] sm:$0xff] %v3637
  // Predicated region
  $region74: #{epitope_forward.1} parent=0 // pred_check
    _
  $region75: #{epitope_forward.1} parent=0 // pred_check_branch
    %3649 = sbr.rel (0) target = $region77
  $region76: #{epitope_forward.1} parent=0 // pred_region
    _
  $region77: #{epitope_forward.1} parent=0 // pred_fallthru
    _
  // Predicated region
  $region78: #{epitope_forward.1} parent=0 // pred_check
    _
  $region79: #{epitope_forward.1} parent=0 // pred_check_branch
    %3651 = sbr.rel (0) target = $region81
  $region80: #{epitope_forward.1} parent=0 // pred_region
    _
  $region81: #{epitope_forward.1} parent=0 // pred_fallthru
    _

</llo_original>
